<compile_context>
chip_gen: v7x
topology: tpu7x:2x2x1
jax: 0.10.0
libtpu: 0.0.40
codegen_flags: <defaults>
</compile_context>

<pallas_src>
import functools

import jax
import jax.numpy as jnp
from jax import lax
from jax.experimental import pallas as pl
from jax.experimental.pallas import tpu as pltpu


def attention_kernel(x_ref, wqkv_ref, *rest, num_heads, has_qkv_bias):
    # Per grid step (one batch element, batch dim squeezed):
    #   x_ref:     (N, C)    activations (caller dtype)
    #   wqkv_ref:  (C, 3C)   bf16 qkv weight, transposed to x @ W layout, q-cols pre-scaled
    #   bqkv_ref:  (1, 3C)   f32 qkv bias (only when has_qkv_bias)
    #   wproj_ref: (C, C)    bf16 output-projection weight (transposed)
    #   bproj_ref: (1, C)    f32 output-projection bias
    #   o_ref:     (N, C)    output
    #   acc_ref:   (N, C)    f32 VMEM scratch holding the per-head attention outputs
    if has_qkv_bias:
        bqkv_ref, wproj_ref, bproj_ref, o_ref, acc_ref = rest
    else:
        bqkv_ref = None
        wproj_ref, bproj_ref, o_ref, acc_ref = rest

    N, C = x_ref.shape
    H = num_heads
    D = C // H

    # --- QKV projection: bf16 MXU operands, f32 accumulate, f32 bias add. ---
    qkv_f32 = jnp.dot(x_ref[...].astype(jnp.bfloat16), wqkv_ref[...],
                      preferred_element_type=jnp.float32)            # (N, 3C) f32
    if has_qkv_bias:
        qkv_f32 = qkv_f32 + bqkv_ref[...]
    # Column layout matches torch: [q(head0..H-1) | k(...) | v(...)].
    qkv = qkv_f32.astype(jnp.bfloat16)      # operands of the attention-stage matmuls

    # --- Per-head attention.  H is static -> unrolled loop of 2-D MXU dots with
    #     static lane slices.  Scale is already folded into the q columns of Wqkv. ---
    for h in range(H):
        qh = qkv[:, h * D:(h + 1) * D]                       # (N, D) bf16 (pre-scaled)
        kh = qkv[:, C + h * D:C + (h + 1) * D]               # (N, D) bf16
        vh = qkv[:, 2 * C + h * D:2 * C + (h + 1) * D]       # (N, D) bf16

        # scores = q @ k^T  (head-dim contraction on the MXU, f32 accumulate)
        s = lax.dot_general(qh, kh, (((1,), (1,)), ((), ())),
                            preferred_element_type=jnp.float32)      # (N, N) f32

        # Numerically stable softmax in f32; reciprocal goes to the EUP slot.
        s = s - jnp.max(s, axis=-1, keepdims=True)
        e = jnp.exp(s)
        p = e * pl.reciprocal(jnp.sum(e, axis=-1, keepdims=True), approx=True)

        # Head output written straight into its column slice of the f32 scratch.
        acc_ref[:, h * D:(h + 1) * D] = jnp.dot(
            p.astype(jnp.bfloat16), vh, preferred_element_type=jnp.float32)

    # --- Output projection (+f32 bias), single lane-dense (N, C) store. ---
    out = jnp.dot(acc_ref[...].astype(jnp.bfloat16), wproj_ref[...],
                  preferred_element_type=jnp.float32) + bproj_ref[...]
    o_ref[...] = out.astype(o_ref.dtype)


def attention(x, qkv_weight, qkv_bias, proj_weight, proj_bias, num_heads):
    """Fused Attention forward (eval path of NoisyViT Attention).

    x:           (B, N, C)
    qkv_weight:  (3C, C)   torch nn.Linear layout
    qkv_bias:    (3C,) or None (module default qkv_bias=False)
    proj_weight: (C, C)    torch nn.Linear layout
    proj_bias:   (C,)
    """
    B, N, C = x.shape
    assert C % num_heads == 0, "dim should be divisible by num_heads"
    D = C // num_heads
    scale = float(D) ** -0.5
    has_qkv_bias = qkv_bias is not None

    # ---- Cheap XLA-fusable weight prep: fold softmax scale into the q columns,
    #      ship bf16 weights (biases stay f32). No extra activation traffic. ----
    col_scale = jnp.concatenate(
        [jnp.full((C,), scale, jnp.float32), jnp.ones((2 * C,), jnp.float32)])
    wqkv_t = (jnp.asarray(qkv_weight, jnp.float32).T * col_scale[None, :]
              ).astype(jnp.bfloat16)                                     # (C, 3C) bf16
    wproj_t = jnp.asarray(proj_weight, jnp.float32).T.astype(jnp.bfloat16)  # (C, C) bf16
    bproj2 = jnp.asarray(proj_bias, jnp.float32).reshape(1, C)              # (1, C) f32

    args = [x, wqkv_t]
    if has_qkv_bias:
        bqkv2 = (jnp.asarray(qkv_bias, jnp.float32) * col_scale).reshape(1, 3 * C)
        args.append(bqkv2)
    args += [wproj_t, bproj2]

    kernel = functools.partial(attention_kernel, num_heads=num_heads,
                               has_qkv_bias=has_qkv_bias)

    # ---- Advisory cost estimate so XLA can overlap neighbours with this call. ----
    itm = jnp.dtype(x.dtype).itemsize
    flops = int(B * (2 * N * C * 3 * C + 4 * N * N * C + 2 * N * C * C))
    transcendentals = int(B * num_heads * N * N)
    w_bytes = (C * 3 * C + C * C) * 2                       # bf16 weights
    b_bytes = ((3 * C if has_qkv_bias else 0) + C) * 4      # f32 biases
    bytes_accessed = int(2 * B * N * C * itm + w_bytes + b_bytes)

    # ---- Explicit VMEM budget from the actual buffer sizes (+ intermediates). ----
    xio_bytes = 2 * 2 * N * C * itm                         # x + out, double-buffered
    scratch_bytes = N * C * 4
    interm_bytes = (N * 3 * C * (4 + 2)                     # qkv f32 + bf16 copy
                    + 3 * N * N * 4                         # s / e / p per head
                    + 2 * N * C * 4)                        # projection headroom
    est = xio_bytes + 2 * (w_bytes + b_bytes) + scratch_bytes + interm_bytes
    vmem_limit = int(min(128 << 20, max(32 << 20, int(est * 1.25))))

    def _call(single_buffer_weights):
        # Weights/biases have a constant index_map across the batch grid, so they
        # never need a second pipeline buffer -> request Buffered(1).
        wkw = ({"pipeline_mode": pl.Buffered(1)} if single_buffer_weights else {})
        in_specs = [
            pl.BlockSpec((pl.Squeezed(), N, C), lambda b: (b, 0, 0)),      # x
            pl.BlockSpec((C, 3 * C), lambda b: (0, 0), **wkw),             # Wqkv^T
        ]
        if has_qkv_bias:
            in_specs.append(pl.BlockSpec((1, 3 * C), lambda b: (0, 0), **wkw))
        in_specs += [
            pl.BlockSpec((C, C), lambda b: (0, 0), **wkw),                 # Wproj^T
            pl.BlockSpec((1, C), lambda b: (0, 0), **wkw),                 # bproj
        ]
        return pl.pallas_call(
            kernel,
            out_shape=jax.ShapeDtypeStruct((B, N, C), x.dtype),
            grid_spec=pltpu.PrefetchScalarGridSpec(
                num_scalar_prefetch=0,
                grid=(B,),
                in_specs=in_specs,
                out_specs=pl.BlockSpec((pl.Squeezed(), N, C), lambda b: (b, 0, 0)),
                scratch_shapes=[pltpu.VMEM((N, C), jnp.float32)],
            ),
            compiler_params=pltpu.CompilerParams(
                dimension_semantics=("parallel",),
                vmem_limit_bytes=vmem_limit),
            cost_estimate=pl.CostEstimate(
                flops=flops,
                transcendentals=transcendentals,
                bytes_accessed=bytes_accessed),
        )(*args)

    try:
        return _call(True)
    except Exception:
        # Fallback: this jax build does not accept pipeline_mode=pl.Buffered(1);
        # identical kernel with default (double-buffered) resident weights.
        return _call(False)


def _reference(x, qkv_weight, qkv_bias, proj_weight, proj_bias, num_heads):
    """Plain-JAX f32 reference matching the PyTorch forward (eval path)."""
    B, N, C = x.shape
    D = C // num_heads
    scale = D ** -0.5
    qkv = x @ qkv_weight.T
    if qkv_bias is not None:
        qkv = qkv + qkv_bias
    qkv = qkv.reshape(B, N, 3, num_heads, D).transpose(2, 0, 3, 1, 4)
    q, k, v = qkv[0], qkv[1], qkv[2]                       # (B, H, N, D)
    attn = (q @ jnp.swapaxes(k, -1, -2)) * scale
    attn = jax.nn.softmax(attn, axis=-1)
    out = jnp.swapaxes(attn @ v, 1, 2).reshape(B, N, C)
    return out @ proj_weight.T + proj_bias


if __name__ == "__main__":
    # Small shapes consistent with the module: B=2, seq N=8, dim C=32, 8 heads (D=4).
    B, N, C = 2, 8, 32
    num_heads = 8

    key = jax.random.PRNGKey(0)
    kx, kw1, kb1, kw2, kb2 = jax.random.split(key, 5)
    x = jax.random.normal(kx, (B, N, C), dtype=jnp.float32)
    qkv_weight = jax.random.normal(kw1, (3 * C, C), dtype=jnp.float32) * 0.05
    qkv_bias_v = jax.random.normal(kb1, (3 * C,), dtype=jnp.float32) * 0.05
    proj_weight = jax.random.normal(kw2, (C, C), dtype=jnp.float32) * 0.05
    proj_bias = jax.random.normal(kb2, (C,), dtype=jnp.float32) * 0.05

    # Case 1: module default (qkv_bias=False).
    out = attention(x, qkv_weight, None, proj_weight, proj_bias, num_heads)
    out = jax.block_until_ready(out)
    ref = _reference(x, qkv_weight, None, proj_weight, proj_bias, num_heads)
    assert out.shape == (B, N, C)
    err = float(jnp.max(jnp.abs(out - ref)))
    # bf16 MXU operands + approx reciprocal -> looser-than-f32 tolerance.
    assert jnp.allclose(out, ref, atol=2e-2, rtol=2e-2), err

    # Case 2: qkv_bias=True path.
    out_b = attention(x, qkv_weight, qkv_bias_v, proj_weight, proj_bias, num_heads)
    out_b = jax.block_until_ready(out_b)
    ref_b = _reference(x, qkv_weight, qkv_bias_v, proj_weight, proj_bias, num_heads)
    err_b = float(jnp.max(jnp.abs(out_b - ref_b)))
    assert jnp.allclose(out_b, ref_b, atol=2e-2, rtol=2e-2), err_b

    print("KERNEL_OK")
</pallas_src>

<mosaic_0001>
module attributes {stable_mosaic.version = 11 : i64} {
  func.func @attention_kernel(%arg0: i32, %arg1: memref<1x8x32xf32, #tpu.memory_space<vmem>>, %arg2: memref<32x96xbf16, #tpu.memory_space<vmem>>, %arg3: memref<32x32xbf16, #tpu.memory_space<vmem>>, %arg4: memref<1x32xf32, #tpu.memory_space<vmem>>, %arg5: memref<1x8x32xf32, #tpu.memory_space<vmem>>, %arg6: memref<8x32xf32, #tpu.memory_space<vmem>>) attributes {dimension_semantics = [#tpu.dimension_semantics<parallel>], iteration_bounds = array<i64: 2>, scalar_prefetch = 0 : i64, scratch_operands = 1 : i64, tpu.core_type = #tpu.core_type<tc>, window_params = [{transform_indices = @transform_0, window_bounds = array<i64: 1, 8, 32>}, {pipeline_mode = #tpu.pipeline_mode<synchronous>, transform_indices = @transform_1, window_bounds = array<i64: 32, 96>}, {pipeline_mode = #tpu.pipeline_mode<synchronous>, transform_indices = @transform_2, window_bounds = array<i64: 32, 32>}, {pipeline_mode = #tpu.pipeline_mode<synchronous>, transform_indices = @transform_3, window_bounds = array<i64: 1, 32>}, {transform_indices = @transform_4, window_bounds = array<i64: 1, 8, 32>}]} {
    %c0 = arith.constant 0 : index
    %c0_0 = arith.constant 0 : index
    %c0_1 = arith.constant 0 : index
    %0 = vector.load %arg1[%c0, %c0_0, %c0_1] : memref<1x8x32xf32, #tpu.memory_space<vmem>>, vector<1x8x32xf32>
    %1 = vector.shape_cast %0 : vector<1x8x32xf32> to vector<8x32xf32>
    %2 = arith.truncf %1 : vector<8x32xf32> to vector<8x32xbf16>
    %c0_2 = arith.constant 0 : index
    %c0_3 = arith.constant 0 : index
    %3 = vector.load %arg2[%c0_2, %c0_3] : memref<32x96xbf16, #tpu.memory_space<vmem>>, vector<32x96xbf16>
    %cst = arith.constant dense<0.000000e+00> : vector<8x96xf32>
    %4 = tpu.matmul %2, %3, %cst {dimension_numbers = #tpu.dot_dimension_numbers<[1], [0], [0], [1], [0, 0, 1, 1], [], []>} : vector<8x32xbf16>, vector<32x96xbf16>, vector<8x96xf32> -> vector<8x96xf32>
    %5 = arith.truncf %4 : vector<8x96xf32> to vector<8x96xbf16>
    %6 = vector.extract_strided_slice %5 {offsets = [0, 0], sizes = [8, 4], strides = [1, 1]} : vector<8x96xbf16> to vector<8x4xbf16>
    %7 = vector.extract_strided_slice %5 {offsets = [0, 32], sizes = [8, 4], strides = [1, 1]} : vector<8x96xbf16> to vector<8x4xbf16>
    %8 = vector.extract_strided_slice %5 {offsets = [0, 64], sizes = [8, 4], strides = [1, 1]} : vector<8x96xbf16> to vector<8x4xbf16>
    %cst_4 = arith.constant dense<0.000000e+00> : vector<8x8xf32>
    %9 = tpu.matmul %6, %7, %cst_4 {dimension_numbers = #tpu.dot_dimension_numbers<[1], [1], [0], [0], [0, 0, 1, 0], [], []>} : vector<8x4xbf16>, vector<8x4xbf16>, vector<8x8xf32> -> vector<8x8xf32>
    %cst_5 = arith.constant dense<0xFF800000> : vector<8xf32>
    %10 = vector.multi_reduction <maximumf>, %9, %cst_5 [1] : vector<8x8xf32> to vector<8xf32>
    %11 = vector.shape_cast %10 : vector<8xf32> to vector<8x1xf32>
    %12 = vector.broadcast %11 : vector<8x1xf32> to vector<8x8xf32>
    %13 = arith.subf %9, %12 : vector<8x8xf32>
    %14 = math.exp %13 : vector<8x8xf32>
    %cst_6 = arith.constant dense<0.000000e+00> : vector<8xf32>
    %15 = vector.multi_reduction <add>, %14, %cst_6 [1] : vector<8x8xf32> to vector<8xf32>
    %16 = vector.shape_cast %15 : vector<8xf32> to vector<8x1xf32>
    %17 = tpu.reciprocal %16 {approx = true} : vector<8x1xf32> -> vector<8x1xf32>
    %18 = vector.broadcast %17 : vector<8x1xf32> to vector<8x8xf32>
    %19 = arith.mulf %14, %18 : vector<8x8xf32>
    %20 = arith.truncf %19 : vector<8x8xf32> to vector<8x8xbf16>
    %cst_7 = arith.constant dense<0.000000e+00> : vector<8x4xf32>
    %21 = tpu.matmul %20, %8, %cst_7 {dimension_numbers = #tpu.dot_dimension_numbers<[1], [0], [0], [1], [0, 0, 1, 1], [], []>} : vector<8x8xbf16>, vector<8x4xbf16>, vector<8x4xf32> -> vector<8x4xf32>
    %c0_8 = arith.constant 0 : index
    %c0_9 = arith.constant 0 : index
    %22 = vector.load %arg6[%c0_8, %c0_9] : memref<8x32xf32, #tpu.memory_space<vmem>>, vector<8x4xf32>
    tpu.vector_store %arg6[%c0_8, %c0_9], %21 {strides = array<i32>} : memref<8x32xf32, #tpu.memory_space<vmem>>, vector<8x4xf32>,
    %23 = vector.extract_strided_slice %5 {offsets = [0, 4], sizes = [8, 4], strides = [1, 1]} : vector<8x96xbf16> to vector<8x4xbf16>
    %24 = vector.extract_strided_slice %5 {offsets = [0, 36], sizes = [8, 4], strides = [1, 1]} : vector<8x96xbf16> to vector<8x4xbf16>
    %25 = vector.extract_strided_slice %5 {offsets = [0, 68], sizes = [8, 4], strides = [1, 1]} : vector<8x96xbf16> to vector<8x4xbf16>
    %cst_10 = arith.constant dense<0.000000e+00> : vector<8x8xf32>
    %26 = tpu.matmul %23, %24, %cst_10 {dimension_numbers = #tpu.dot_dimension_numbers<[1], [1], [0], [0], [0, 0, 1, 0], [], []>} : vector<8x4xbf16>, vector<8x4xbf16>, vector<8x8xf32> -> vector<8x8xf32>
    %cst_11 = arith.constant dense<0xFF800000> : vector<8xf32>
    %27 = vector.multi_reduction <maximumf>, %26, %cst_11 [1] : vector<8x8xf32> to vector<8xf32>
    %28 = vector.shape_cast %27 : vector<8xf32> to vector<8x1xf32>
    %29 = vector.broadcast %28 : vector<8x1xf32> to vector<8x8xf32>
    %30 = arith.subf %26, %29 : vector<8x8xf32>
    %31 = math.exp %30 : vector<8x8xf32>
    %cst_12 = arith.constant dense<0.000000e+00> : vector<8xf32>
    %32 = vector.multi_reduction <add>, %31, %cst_12 [1] : vector<8x8xf32> to vector<8xf32>
    %33 = vector.shape_cast %32 : vector<8xf32> to vector<8x1xf32>
    %34 = tpu.reciprocal %33 {approx = true} : vector<8x1xf32> -> vector<8x1xf32>
    %35 = vector.broadcast %34 : vector<8x1xf32> to vector<8x8xf32>
    %36 = arith.mulf %31, %35 : vector<8x8xf32>
    %37 = arith.truncf %36 : vector<8x8xf32> to vector<8x8xbf16>
    %cst_13 = arith.constant dense<0.000000e+00> : vector<8x4xf32>
    %38 = tpu.matmul %37, %25, %cst_13 {dimension_numbers = #tpu.dot_dimension_numbers<[1], [0], [0], [1], [0, 0, 1, 1], [], []>} : vector<8x8xbf16>, vector<8x4xbf16>, vector<8x4xf32> -> vector<8x4xf32>
    %c0_14 = arith.constant 0 : index
    %c4 = arith.constant 4 : index
    %39 = vector.load %arg6[%c0_14, %c4] : memref<8x32xf32, #tpu.memory_space<vmem>>, vector<8x4xf32>
    tpu.vector_store %arg6[%c0_14, %c4], %38 {strides = array<i32>} : memref<8x32xf32, #tpu.memory_space<vmem>>, vector<8x4xf32>,
    %40 = vector.extract_strided_slice %5 {offsets = [0, 8], sizes = [8, 4], strides = [1, 1]} : vector<8x96xbf16> to vector<8x4xbf16>
    %41 = vector.extract_strided_slice %5 {offsets = [0, 40], sizes = [8, 4], strides = [1, 1]} : vector<8x96xbf16> to vector<8x4xbf16>
    %42 = vector.extract_strided_slice %5 {offsets = [0, 72], sizes = [8, 4], strides = [1, 1]} : vector<8x96xbf16> to vector<8x4xbf16>
    %cst_15 = arith.constant dense<0.000000e+00> : vector<8x8xf32>
    %43 = tpu.matmul %40, %41, %cst_15 {dimension_numbers = #tpu.dot_dimension_numbers<[1], [1], [0], [0], [0, 0, 1, 0], [], []>} : vector<8x4xbf16>, vector<8x4xbf16>, vector<8x8xf32> -> vector<8x8xf32>
    %cst_16 = arith.constant dense<0xFF800000> : vector<8xf32>
    %44 = vector.multi_reduction <maximumf>, %43, %cst_16 [1] : vector<8x8xf32> to vector<8xf32>
    %45 = vector.shape_cast %44 : vector<8xf32> to vector<8x1xf32>
    %46 = vector.broadcast %45 : vector<8x1xf32> to vector<8x8xf32>
    %47 = arith.subf %43, %46 : vector<8x8xf32>
    %48 = math.exp %47 : vector<8x8xf32>
    %cst_17 = arith.constant dense<0.000000e+00> : vector<8xf32>
    %49 = vector.multi_reduction <add>, %48, %cst_17 [1] : vector<8x8xf32> to vector<8xf32>
    %50 = vector.shape_cast %49 : vector<8xf32> to vector<8x1xf32>
    %51 = tpu.reciprocal %50 {approx = true} : vector<8x1xf32> -> vector<8x1xf32>
    %52 = vector.broadcast %51 : vector<8x1xf32> to vector<8x8xf32>
    %53 = arith.mulf %48, %52 : vector<8x8xf32>
    %54 = arith.truncf %53 : vector<8x8xf32> to vector<8x8xbf16>
    %cst_18 = arith.constant dense<0.000000e+00> : vector<8x4xf32>
    %55 = tpu.matmul %54, %42, %cst_18 {dimension_numbers = #tpu.dot_dimension_numbers<[1], [0], [0], [1], [0, 0, 1, 1], [], []>} : vector<8x8xbf16>, vector<8x4xbf16>, vector<8x4xf32> -> vector<8x4xf32>
    %c0_19 = arith.constant 0 : index
    %c8 = arith.constant 8 : index
    %56 = vector.load %arg6[%c0_19, %c8] : memref<8x32xf32, #tpu.memory_space<vmem>>, vector<8x4xf32>
    tpu.vector_store %arg6[%c0_19, %c8], %55 {strides = array<i32>} : memref<8x32xf32, #tpu.memory_space<vmem>>, vector<8x4xf32>,
    %57 = vector.extract_strided_slice %5 {offsets = [0, 12], sizes = [8, 4], strides = [1, 1]} : vector<8x96xbf16> to vector<8x4xbf16>
    %58 = vector.extract_strided_slice %5 {offsets = [0, 44], sizes = [8, 4], strides = [1, 1]} : vector<8x96xbf16> to vector<8x4xbf16>
    %59 = vector.extract_strided_slice %5 {offsets = [0, 76], sizes = [8, 4], strides = [1, 1]} : vector<8x96xbf16> to vector<8x4xbf16>
    %cst_20 = arith.constant dense<0.000000e+00> : vector<8x8xf32>
    %60 = tpu.matmul %57, %58, %cst_20 {dimension_numbers = #tpu.dot_dimension_numbers<[1], [1], [0], [0], [0, 0, 1, 0], [], []>} : vector<8x4xbf16>, vector<8x4xbf16>, vector<8x8xf32> -> vector<8x8xf32>
    %cst_21 = arith.constant dense<0xFF800000> : vector<8xf32>
    %61 = vector.multi_reduction <maximumf>, %60, %cst_21 [1] : vector<8x8xf32> to vector<8xf32>
    %62 = vector.shape_cast %61 : vector<8xf32> to vector<8x1xf32>
    %63 = vector.broadcast %62 : vector<8x1xf32> to vector<8x8xf32>
    %64 = arith.subf %60, %63 : vector<8x8xf32>
    %65 = math.exp %64 : vector<8x8xf32>
    %cst_22 = arith.constant dense<0.000000e+00> : vector<8xf32>
    %66 = vector.multi_reduction <add>, %65, %cst_22 [1] : vector<8x8xf32> to vector<8xf32>
    %67 = vector.shape_cast %66 : vector<8xf32> to vector<8x1xf32>
    %68 = tpu.reciprocal %67 {approx = true} : vector<8x1xf32> -> vector<8x1xf32>
    %69 = vector.broadcast %68 : vector<8x1xf32> to vector<8x8xf32>
    %70 = arith.mulf %65, %69 : vector<8x8xf32>
    %71 = arith.truncf %70 : vector<8x8xf32> to vector<8x8xbf16>
    %cst_23 = arith.constant dense<0.000000e+00> : vector<8x4xf32>
    %72 = tpu.matmul %71, %59, %cst_23 {dimension_numbers = #tpu.dot_dimension_numbers<[1], [0], [0], [1], [0, 0, 1, 1], [], []>} : vector<8x8xbf16>, vector<8x4xbf16>, vector<8x4xf32> -> vector<8x4xf32>
    %c0_24 = arith.constant 0 : index
    %c12 = arith.constant 12 : index
    %73 = vector.load %arg6[%c0_24, %c12] : memref<8x32xf32, #tpu.memory_space<vmem>>, vector<8x4xf32>
    tpu.vector_store %arg6[%c0_24, %c12], %72 {strides = array<i32>} : memref<8x32xf32, #tpu.memory_space<vmem>>, vector<8x4xf32>,
    %74 = vector.extract_strided_slice %5 {offsets = [0, 16], sizes = [8, 4], strides = [1, 1]} : vector<8x96xbf16> to vector<8x4xbf16>
    %75 = vector.extract_strided_slice %5 {offsets = [0, 48], sizes = [8, 4], strides = [1, 1]} : vector<8x96xbf16> to vector<8x4xbf16>
    %76 = vector.extract_strided_slice %5 {offsets = [0, 80], sizes = [8, 4], strides = [1, 1]} : vector<8x96xbf16> to vector<8x4xbf16>
    %cst_25 = arith.constant dense<0.000000e+00> : vector<8x8xf32>
    %77 = tpu.matmul %74, %75, %cst_25 {dimension_numbers = #tpu.dot_dimension_numbers<[1], [1], [0], [0], [0, 0, 1, 0], [], []>} : vector<8x4xbf16>, vector<8x4xbf16>, vector<8x8xf32> -> vector<8x8xf32>
    %cst_26 = arith.constant dense<0xFF800000> : vector<8xf32>
    %78 = vector.multi_reduction <maximumf>, %77, %cst_26 [1] : vector<8x8xf32> to vector<8xf32>
    %79 = vector.shape_cast %78 : vector<8xf32> to vector<8x1xf32>
    %80 = vector.broadcast %79 : vector<8x1xf32> to vector<8x8xf32>
    %81 = arith.subf %77, %80 : vector<8x8xf32>
    %82 = math.exp %81 : vector<8x8xf32>
    %cst_27 = arith.constant dense<0.000000e+00> : vector<8xf32>
    %83 = vector.multi_reduction <add>, %82, %cst_27 [1] : vector<8x8xf32> to vector<8xf32>
    %84 = vector.shape_cast %83 : vector<8xf32> to vector<8x1xf32>
    %85 = tpu.reciprocal %84 {approx = true} : vector<8x1xf32> -> vector<8x1xf32>
    %86 = vector.broadcast %85 : vector<8x1xf32> to vector<8x8xf32>
    %87 = arith.mulf %82, %86 : vector<8x8xf32>
    %88 = arith.truncf %87 : vector<8x8xf32> to vector<8x8xbf16>
    %cst_28 = arith.constant dense<0.000000e+00> : vector<8x4xf32>
    %89 = tpu.matmul %88, %76, %cst_28 {dimension_numbers = #tpu.dot_dimension_numbers<[1], [0], [0], [1], [0, 0, 1, 1], [], []>} : vector<8x8xbf16>, vector<8x4xbf16>, vector<8x4xf32> -> vector<8x4xf32>
    %c0_29 = arith.constant 0 : index
    %c16 = arith.constant 16 : index
    %90 = vector.load %arg6[%c0_29, %c16] : memref<8x32xf32, #tpu.memory_space<vmem>>, vector<8x4xf32>
    tpu.vector_store %arg6[%c0_29, %c16], %89 {strides = array<i32>} : memref<8x32xf32, #tpu.memory_space<vmem>>, vector<8x4xf32>,
    %91 = vector.extract_strided_slice %5 {offsets = [0, 20], sizes = [8, 4], strides = [1, 1]} : vector<8x96xbf16> to vector<8x4xbf16>
    %92 = vector.extract_strided_slice %5 {offsets = [0, 52], sizes = [8, 4], strides = [1, 1]} : vector<8x96xbf16> to vector<8x4xbf16>
    %93 = vector.extract_strided_slice %5 {offsets = [0, 84], sizes = [8, 4], strides = [1, 1]} : vector<8x96xbf16> to vector<8x4xbf16>
    %cst_30 = arith.constant dense<0.000000e+00> : vector<8x8xf32>
    %94 = tpu.matmul %91, %92, %cst_30 {dimension_numbers = #tpu.dot_dimension_numbers<[1], [1], [0], [0], [0, 0, 1, 0], [], []>} : vector<8x4xbf16>, vector<8x4xbf16>, vector<8x8xf32> -> vector<8x8xf32>
    %cst_31 = arith.constant dense<0xFF800000> : vector<8xf32>
    %95 = vector.multi_reduction <maximumf>, %94, %cst_31 [1] : vector<8x8xf32> to vector<8xf32>
    %96 = vector.shape_cast %95 : vector<8xf32> to vector<8x1xf32>
    %97 = vector.broadcast %96 : vector<8x1xf32> to vector<8x8xf32>
    %98 = arith.subf %94, %97 : vector<8x8xf32>
    %99 = math.exp %98 : vector<8x8xf32>
    %cst_32 = arith.constant dense<0.000000e+00> : vector<8xf32>
    %100 = vector.multi_reduction <add>, %99, %cst_32 [1] : vector<8x8xf32> to vector<8xf32>
    %101 = vector.shape_cast %100 : vector<8xf32> to vector<8x1xf32>
    %102 = tpu.reciprocal %101 {approx = true} : vector<8x1xf32> -> vector<8x1xf32>
    %103 = vector.broadcast %102 : vector<8x1xf32> to vector<8x8xf32>
    %104 = arith.mulf %99, %103 : vector<8x8xf32>
    %105 = arith.truncf %104 : vector<8x8xf32> to vector<8x8xbf16>
    %cst_33 = arith.constant dense<0.000000e+00> : vector<8x4xf32>
    %106 = tpu.matmul %105, %93, %cst_33 {dimension_numbers = #tpu.dot_dimension_numbers<[1], [0], [0], [1], [0, 0, 1, 1], [], []>} : vector<8x8xbf16>, vector<8x4xbf16>, vector<8x4xf32> -> vector<8x4xf32>
    %c0_34 = arith.constant 0 : index
    %c20 = arith.constant 20 : index
    %107 = vector.load %arg6[%c0_34, %c20] : memref<8x32xf32, #tpu.memory_space<vmem>>, vector<8x4xf32>
    tpu.vector_store %arg6[%c0_34, %c20], %106 {strides = array<i32>} : memref<8x32xf32, #tpu.memory_space<vmem>>, vector<8x4xf32>,
    %108 = vector.extract_strided_slice %5 {offsets = [0, 24], sizes = [8, 4], strides = [1, 1]} : vector<8x96xbf16> to vector<8x4xbf16>
    %109 = vector.extract_strided_slice %5 {offsets = [0, 56], sizes = [8, 4], strides = [1, 1]} : vector<8x96xbf16> to vector<8x4xbf16>
    %110 = vector.extract_strided_slice %5 {offsets = [0, 88], sizes = [8, 4], strides = [1, 1]} : vector<8x96xbf16> to vector<8x4xbf16>
    %cst_35 = arith.constant dense<0.000000e+00> : vector<8x8xf32>
    %111 = tpu.matmul %108, %109, %cst_35 {dimension_numbers = #tpu.dot_dimension_numbers<[1], [1], [0], [0], [0, 0, 1, 0], [], []>} : vector<8x4xbf16>, vector<8x4xbf16>, vector<8x8xf32> -> vector<8x8xf32>
    %cst_36 = arith.constant dense<0xFF800000> : vector<8xf32>
    %112 = vector.multi_reduction <maximumf>, %111, %cst_36 [1] : vector<8x8xf32> to vector<8xf32>
    %113 = vector.shape_cast %112 : vector<8xf32> to vector<8x1xf32>
    %114 = vector.broadcast %113 : vector<8x1xf32> to vector<8x8xf32>
    %115 = arith.subf %111, %114 : vector<8x8xf32>
    %116 = math.exp %115 : vector<8x8xf32>
    %cst_37 = arith.constant dense<0.000000e+00> : vector<8xf32>
    %117 = vector.multi_reduction <add>, %116, %cst_37 [1] : vector<8x8xf32> to vector<8xf32>
    %118 = vector.shape_cast %117 : vector<8xf32> to vector<8x1xf32>
    %119 = tpu.reciprocal %118 {approx = true} : vector<8x1xf32> -> vector<8x1xf32>
    %120 = vector.broadcast %119 : vector<8x1xf32> to vector<8x8xf32>
    %121 = arith.mulf %116, %120 : vector<8x8xf32>
    %122 = arith.truncf %121 : vector<8x8xf32> to vector<8x8xbf16>
    %cst_38 = arith.constant dense<0.000000e+00> : vector<8x4xf32>
    %123 = tpu.matmul %122, %110, %cst_38 {dimension_numbers = #tpu.dot_dimension_numbers<[1], [0], [0], [1], [0, 0, 1, 1], [], []>} : vector<8x8xbf16>, vector<8x4xbf16>, vector<8x4xf32> -> vector<8x4xf32>
    %c0_39 = arith.constant 0 : index
    %c24 = arith.constant 24 : index
    %124 = vector.load %arg6[%c0_39, %c24] : memref<8x32xf32, #tpu.memory_space<vmem>>, vector<8x4xf32>
    tpu.vector_store %arg6[%c0_39, %c24], %123 {strides = array<i32>} : memref<8x32xf32, #tpu.memory_space<vmem>>, vector<8x4xf32>,
    %125 = vector.extract_strided_slice %5 {offsets = [0, 28], sizes = [8, 4], strides = [1, 1]} : vector<8x96xbf16> to vector<8x4xbf16>
    %126 = vector.extract_strided_slice %5 {offsets = [0, 60], sizes = [8, 4], strides = [1, 1]} : vector<8x96xbf16> to vector<8x4xbf16>
    %127 = vector.extract_strided_slice %5 {offsets = [0, 92], sizes = [8, 4], strides = [1, 1]} : vector<8x96xbf16> to vector<8x4xbf16>
    %cst_40 = arith.constant dense<0.000000e+00> : vector<8x8xf32>
    %128 = tpu.matmul %125, %126, %cst_40 {dimension_numbers = #tpu.dot_dimension_numbers<[1], [1], [0], [0], [0, 0, 1, 0], [], []>} : vector<8x4xbf16>, vector<8x4xbf16>, vector<8x8xf32> -> vector<8x8xf32>
    %cst_41 = arith.constant dense<0xFF800000> : vector<8xf32>
    %129 = vector.multi_reduction <maximumf>, %128, %cst_41 [1] : vector<8x8xf32> to vector<8xf32>
    %130 = vector.shape_cast %129 : vector<8xf32> to vector<8x1xf32>
    %131 = vector.broadcast %130 : vector<8x1xf32> to vector<8x8xf32>
    %132 = arith.subf %128, %131 : vector<8x8xf32>
    %133 = math.exp %132 : vector<8x8xf32>
    %cst_42 = arith.constant dense<0.000000e+00> : vector<8xf32>
    %134 = vector.multi_reduction <add>, %133, %cst_42 [1] : vector<8x8xf32> to vector<8xf32>
    %135 = vector.shape_cast %134 : vector<8xf32> to vector<8x1xf32>
    %136 = tpu.reciprocal %135 {approx = true} : vector<8x1xf32> -> vector<8x1xf32>
    %137 = vector.broadcast %136 : vector<8x1xf32> to vector<8x8xf32>
    %138 = arith.mulf %133, %137 : vector<8x8xf32>
    %139 = arith.truncf %138 : vector<8x8xf32> to vector<8x8xbf16>
    %cst_43 = arith.constant dense<0.000000e+00> : vector<8x4xf32>
    %140 = tpu.matmul %139, %127, %cst_43 {dimension_numbers = #tpu.dot_dimension_numbers<[1], [0], [0], [1], [0, 0, 1, 1], [], []>} : vector<8x8xbf16>, vector<8x4xbf16>, vector<8x4xf32> -> vector<8x4xf32>
    %c0_44 = arith.constant 0 : index
    %c28 = arith.constant 28 : index
    %141 = vector.load %arg6[%c0_44, %c28] : memref<8x32xf32, #tpu.memory_space<vmem>>, vector<8x4xf32>
    tpu.vector_store %arg6[%c0_44, %c28], %140 {strides = array<i32>} : memref<8x32xf32, #tpu.memory_space<vmem>>, vector<8x4xf32>,
    %c0_45 = arith.constant 0 : index
    %c0_46 = arith.constant 0 : index
    %142 = vector.load %arg6[%c0_45, %c0_46] : memref<8x32xf32, #tpu.memory_space<vmem>>, vector<8x32xf32>
    %143 = arith.truncf %142 : vector<8x32xf32> to vector<8x32xbf16>
    %c0_47 = arith.constant 0 : index
    %c0_48 = arith.constant 0 : index
    %144 = vector.load %arg3[%c0_47, %c0_48] : memref<32x32xbf16, #tpu.memory_space<vmem>>, vector<32x32xbf16>
    %cst_49 = arith.constant dense<0.000000e+00> : vector<8x32xf32>
    %145 = tpu.matmul %143, %144, %cst_49 {dimension_numbers = #tpu.dot_dimension_numbers<[1], [0], [0], [1], [0, 0, 1, 1], [], []>} : vector<8x32xbf16>, vector<32x32xbf16>, vector<8x32xf32> -> vector<8x32xf32>
    %c0_50 = arith.constant 0 : index
    %c0_51 = arith.constant 0 : index
    %146 = vector.load %arg4[%c0_50, %c0_51] : memref<1x32xf32, #tpu.memory_space<vmem>>, vector<1x32xf32>
    %147 = vector.broadcast %146 : vector<1x32xf32> to vector<8x32xf32>
    %148 = arith.addf %145, %147 : vector<8x32xf32>
    %c0_52 = arith.constant 0 : index
    %c0_53 = arith.constant 0 : index
    %c0_54 = arith.constant 0 : index
    %149 = vector.load %arg5[%c0_52, %c0_53, %c0_54] : memref<1x8x32xf32, #tpu.memory_space<vmem>>, vector<1x8x32xf32>
    %150 = vector.shape_cast %149 : vector<1x8x32xf32> to vector<8x32xf32>
    %151 = vector.shape_cast %148 : vector<8x32xf32> to vector<1x8x32xf32>
    tpu.vector_store %arg5[%c0_52, %c0_53, %c0_54], %151 {strides = array<i32>} : memref<1x8x32xf32, #tpu.memory_space<vmem>>, vector<1x8x32xf32>,
    return
  }
  func.func @transform_0(%arg0: i32) -> (i32, i32, i32) {
    %c0_i32 = arith.constant 0 : i32
    %c0_i32_0 = arith.constant 0 : i32
    %c0_i32_1 = arith.constant 0 : i32
    return %arg0, %c0_i32, %c0_i32_0 : i32, i32, i32
  }
  func.func @transform_1(%arg0: i32) -> (i32, i32) {
    %c0_i32 = arith.constant 0 : i32
    %c0_i32_0 = arith.constant 0 : i32
    %c0_i32_1 = arith.constant 0 : i32
    return %c0_i32, %c0_i32_0 : i32, i32
  }
  func.func @transform_2(%arg0: i32) -> (i32, i32) {
    %c0_i32 = arith.constant 0 : i32
    %c0_i32_0 = arith.constant 0 : i32
    %c0_i32_1 = arith.constant 0 : i32
    return %c0_i32, %c0_i32_0 : i32, i32
  }
  func.func @transform_3(%arg0: i32) -> (i32, i32) {
    %c0_i32 = arith.constant 0 : i32
    %c0_i32_0 = arith.constant 0 : i32
    %c0_i32_1 = arith.constant 0 : i32
    return %c0_i32, %c0_i32_0 : i32, i32
  }
  func.func @transform_4(%arg0: i32) -> (i32, i32, i32) {
    %c0_i32 = arith.constant 0 : i32
    %c0_i32_0 = arith.constant 0 : i32
    %c0_i32_1 = arith.constant 0 : i32
    return %arg0, %c0_i32, %c0_i32_0 : i32, i32, i32
  }
}

module attributes {stable_mosaic.version = 11 : i64} {
  func.func @attention_kernel(%arg0: i32, %arg1: memref<1x8x32xf32, #tpu.memory_space<vmem>>, %arg2: memref<32x96xbf16, #tpu.memory_space<vmem>>, %arg3: memref<32x32xbf16, #tpu.memory_space<vmem>>, %arg4: memref<1x32xf32, #tpu.memory_space<vmem>>, %arg5: memref<1x8x32xf32, #tpu.memory_space<vmem>>, %arg6: memref<8x32xf32, #tpu.memory_space<vmem>>) attributes {dimension_semantics = [#tpu.dimension_semantics<parallel>], iteration_bounds = array<i64: 2>, scalar_prefetch = 0 : i64, scratch_operands = 1 : i64, tpu.core_type = #tpu.core_type<tc>, window_params = [{transform_indices = @transform_0, window_bounds = array<i64: 1, 8, 32>}, {pipeline_mode = #tpu.pipeline_mode<synchronous>, transform_indices = @transform_1, window_bounds = array<i64: 32, 96>}, {pipeline_mode = #tpu.pipeline_mode<synchronous>, transform_indices = @transform_2, window_bounds = array<i64: 32, 32>}, {pipeline_mode = #tpu.pipeline_mode<synchronous>, transform_indices = @transform_3, window_bounds = array<i64: 1, 32>}, {transform_indices = @transform_4, window_bounds = array<i64: 1, 8, 32>}]} {
    %c0 = arith.constant 0 : index
    %c0_0 = arith.constant 0 : index
    %c0_1 = arith.constant 0 : index
    %0 = vector.load %arg1[%c0, %c0_0, %c0_1] : memref<1x8x32xf32, #tpu.memory_space<vmem>>, vector<1x8x32xf32>
    %1 = vector.shape_cast %0 : vector<1x8x32xf32> to vector<8x32xf32>
    %2 = arith.truncf %1 : vector<8x32xf32> to vector<8x32xbf16>
    %c0_2 = arith.constant 0 : index
    %c0_3 = arith.constant 0 : index
    %3 = vector.load %arg2[%c0_2, %c0_3] : memref<32x96xbf16, #tpu.memory_space<vmem>>, vector<32x96xbf16>
    %cst = arith.constant dense<0.000000e+00> : vector<8x96xf32>
    %4 = tpu.matmul %2, %3, %cst {dimension_numbers = #tpu.dot_dimension_numbers<[1], [0], [0], [1], [0, 0, 1, 1], [], []>} : vector<8x32xbf16>, vector<32x96xbf16>, vector<8x96xf32> -> vector<8x96xf32>
    %5 = arith.truncf %4 : vector<8x96xf32> to vector<8x96xbf16>
    %6 = vector.extract_strided_slice %5 {offsets = [0, 0], sizes = [8, 4], strides = [1, 1]} : vector<8x96xbf16> to vector<8x4xbf16>
    %7 = vector.extract_strided_slice %5 {offsets = [0, 32], sizes = [8, 4], strides = [1, 1]} : vector<8x96xbf16> to vector<8x4xbf16>
    %8 = vector.extract_strided_slice %5 {offsets = [0, 64], sizes = [8, 4], strides = [1, 1]} : vector<8x96xbf16> to vector<8x4xbf16>
    %cst_4 = arith.constant dense<0.000000e+00> : vector<8x8xf32>
    %9 = tpu.matmul %6, %7, %cst_4 {dimension_numbers = #tpu.dot_dimension_numbers<[1], [1], [0], [0], [0, 0, 1, 0], [], []>} : vector<8x4xbf16>, vector<8x4xbf16>, vector<8x8xf32> -> vector<8x8xf32>
    %cst_5 = arith.constant dense<0xFF800000> : vector<8xf32>
    %10 = vector.multi_reduction <maximumf>, %9, %cst_5 [1] : vector<8x8xf32> to vector<8xf32>
    %11 = vector.shape_cast %10 : vector<8xf32> to vector<8x1xf32>
    %12 = vector.broadcast %11 : vector<8x1xf32> to vector<8x8xf32>
    %13 = arith.subf %9, %12 : vector<8x8xf32>
    %14 = math.exp %13 : vector<8x8xf32>
    %cst_6 = arith.constant dense<0.000000e+00> : vector<8xf32>
    %15 = vector.multi_reduction <add>, %14, %cst_6 [1] : vector<8x8xf32> to vector<8xf32>
    %16 = vector.shape_cast %15 : vector<8xf32> to vector<8x1xf32>
    %17 = tpu.reciprocal %16 {approx = true} : vector<8x1xf32> -> vector<8x1xf32>
    %18 = vector.broadcast %17 : vector<8x1xf32> to vector<8x8xf32>
    %19 = arith.mulf %14, %18 : vector<8x8xf32>
    %20 = arith.truncf %19 : vector<8x8xf32> to vector<8x8xbf16>
    %cst_7 = arith.constant dense<0.000000e+00> : vector<8x4xf32>
    %21 = tpu.matmul %20, %8, %cst_7 {dimension_numbers = #tpu.dot_dimension_numbers<[1], [0], [0], [1], [0, 0, 1, 1], [], []>} : vector<8x8xbf16>, vector<8x4xbf16>, vector<8x4xf32> -> vector<8x4xf32>
    %c0_8 = arith.constant 0 : index
    %c0_9 = arith.constant 0 : index
    %22 = vector.load %arg6[%c0_8, %c0_9] : memref<8x32xf32, #tpu.memory_space<vmem>>, vector<8x4xf32>
    tpu.vector_store %arg6[%c0_8, %c0_9], %21 {strides = array<i32>} : memref<8x32xf32, #tpu.memory_space<vmem>>, vector<8x4xf32>,
    %23 = vector.extract_strided_slice %5 {offsets = [0, 4], sizes = [8, 4], strides = [1, 1]} : vector<8x96xbf16> to vector<8x4xbf16>
    %24 = vector.extract_strided_slice %5 {offsets = [0, 36], sizes = [8, 4], strides = [1, 1]} : vector<8x96xbf16> to vector<8x4xbf16>
    %25 = vector.extract_strided_slice %5 {offsets = [0, 68], sizes = [8, 4], strides = [1, 1]} : vector<8x96xbf16> to vector<8x4xbf16>
    %cst_10 = arith.constant dense<0.000000e+00> : vector<8x8xf32>
    %26 = tpu.matmul %23, %24, %cst_10 {dimension_numbers = #tpu.dot_dimension_numbers<[1], [1], [0], [0], [0, 0, 1, 0], [], []>} : vector<8x4xbf16>, vector<8x4xbf16>, vector<8x8xf32> -> vector<8x8xf32>
    %cst_11 = arith.constant dense<0xFF800000> : vector<8xf32>
    %27 = vector.multi_reduction <maximumf>, %26, %cst_11 [1] : vector<8x8xf32> to vector<8xf32>
    %28 = vector.shape_cast %27 : vector<8xf32> to vector<8x1xf32>
    %29 = vector.broadcast %28 : vector<8x1xf32> to vector<8x8xf32>
    %30 = arith.subf %26, %29 : vector<8x8xf32>
    %31 = math.exp %30 : vector<8x8xf32>
    %cst_12 = arith.constant dense<0.000000e+00> : vector<8xf32>
    %32 = vector.multi_reduction <add>, %31, %cst_12 [1] : vector<8x8xf32> to vector<8xf32>
    %33 = vector.shape_cast %32 : vector<8xf32> to vector<8x1xf32>
    %34 = tpu.reciprocal %33 {approx = true} : vector<8x1xf32> -> vector<8x1xf32>
    %35 = vector.broadcast %34 : vector<8x1xf32> to vector<8x8xf32>
    %36 = arith.mulf %31, %35 : vector<8x8xf32>
    %37 = arith.truncf %36 : vector<8x8xf32> to vector<8x8xbf16>
    %cst_13 = arith.constant dense<0.000000e+00> : vector<8x4xf32>
    %38 = tpu.matmul %37, %25, %cst_13 {dimension_numbers = #tpu.dot_dimension_numbers<[1], [0], [0], [1], [0, 0, 1, 1], [], []>} : vector<8x8xbf16>, vector<8x4xbf16>, vector<8x4xf32> -> vector<8x4xf32>
    %c0_14 = arith.constant 0 : index
    %c4 = arith.constant 4 : index
    %39 = vector.load %arg6[%c0_14, %c4] : memref<8x32xf32, #tpu.memory_space<vmem>>, vector<8x4xf32>
    tpu.vector_store %arg6[%c0_14, %c4], %38 {strides = array<i32>} : memref<8x32xf32, #tpu.memory_space<vmem>>, vector<8x4xf32>,
    %40 = vector.extract_strided_slice %5 {offsets = [0, 8], sizes = [8, 4], strides = [1, 1]} : vector<8x96xbf16> to vector<8x4xbf16>
    %41 = vector.extract_strided_slice %5 {offsets = [0, 40], sizes = [8, 4], strides = [1, 1]} : vector<8x96xbf16> to vector<8x4xbf16>
    %42 = vector.extract_strided_slice %5 {offsets = [0, 72], sizes = [8, 4], strides = [1, 1]} : vector<8x96xbf16> to vector<8x4xbf16>
    %cst_15 = arith.constant dense<0.000000e+00> : vector<8x8xf32>
    %43 = tpu.matmul %40, %41, %cst_15 {dimension_numbers = #tpu.dot_dimension_numbers<[1], [1], [0], [0], [0, 0, 1, 0], [], []>} : vector<8x4xbf16>, vector<8x4xbf16>, vector<8x8xf32> -> vector<8x8xf32>
    %cst_16 = arith.constant dense<0xFF800000> : vector<8xf32>
    %44 = vector.multi_reduction <maximumf>, %43, %cst_16 [1] : vector<8x8xf32> to vector<8xf32>
    %45 = vector.shape_cast %44 : vector<8xf32> to vector<8x1xf32>
    %46 = vector.broadcast %45 : vector<8x1xf32> to vector<8x8xf32>
    %47 = arith.subf %43, %46 : vector<8x8xf32>
    %48 = math.exp %47 : vector<8x8xf32>
    %cst_17 = arith.constant dense<0.000000e+00> : vector<8xf32>
    %49 = vector.multi_reduction <add>, %48, %cst_17 [1] : vector<8x8xf32> to vector<8xf32>
    %50 = vector.shape_cast %49 : vector<8xf32> to vector<8x1xf32>
    %51 = tpu.reciprocal %50 {approx = true} : vector<8x1xf32> -> vector<8x1xf32>
    %52 = vector.broadcast %51 : vector<8x1xf32> to vector<8x8xf32>
    %53 = arith.mulf %48, %52 : vector<8x8xf32>
    %54 = arith.truncf %53 : vector<8x8xf32> to vector<8x8xbf16>
    %cst_18 = arith.constant dense<0.000000e+00> : vector<8x4xf32>
    %55 = tpu.matmul %54, %42, %cst_18 {dimension_numbers = #tpu.dot_dimension_numbers<[1], [0], [0], [1], [0, 0, 1, 1], [], []>} : vector<8x8xbf16>, vector<8x4xbf16>, vector<8x4xf32> -> vector<8x4xf32>
    %c0_19 = arith.constant 0 : index
    %c8 = arith.constant 8 : index
    %56 = vector.load %arg6[%c0_19, %c8] : memref<8x32xf32, #tpu.memory_space<vmem>>, vector<8x4xf32>
    tpu.vector_store %arg6[%c0_19, %c8], %55 {strides = array<i32>} : memref<8x32xf32, #tpu.memory_space<vmem>>, vector<8x4xf32>,
    %57 = vector.extract_strided_slice %5 {offsets = [0, 12], sizes = [8, 4], strides = [1, 1]} : vector<8x96xbf16> to vector<8x4xbf16>
    %58 = vector.extract_strided_slice %5 {offsets = [0, 44], sizes = [8, 4], strides = [1, 1]} : vector<8x96xbf16> to vector<8x4xbf16>
    %59 = vector.extract_strided_slice %5 {offsets = [0, 76], sizes = [8, 4], strides = [1, 1]} : vector<8x96xbf16> to vector<8x4xbf16>
    %cst_20 = arith.constant dense<0.000000e+00> : vector<8x8xf32>
    %60 = tpu.matmul %57, %58, %cst_20 {dimension_numbers = #tpu.dot_dimension_numbers<[1], [1], [0], [0], [0, 0, 1, 0], [], []>} : vector<8x4xbf16>, vector<8x4xbf16>, vector<8x8xf32> -> vector<8x8xf32>
    %cst_21 = arith.constant dense<0xFF800000> : vector<8xf32>
    %61 = vector.multi_reduction <maximumf>, %60, %cst_21 [1] : vector<8x8xf32> to vector<8xf32>
    %62 = vector.shape_cast %61 : vector<8xf32> to vector<8x1xf32>
    %63 = vector.broadcast %62 : vector<8x1xf32> to vector<8x8xf32>
    %64 = arith.subf %60, %63 : vector<8x8xf32>
    %65 = math.exp %64 : vector<8x8xf32>
    %cst_22 = arith.constant dense<0.000000e+00> : vector<8xf32>
    %66 = vector.multi_reduction <add>, %65, %cst_22 [1] : vector<8x8xf32> to vector<8xf32>
    %67 = vector.shape_cast %66 : vector<8xf32> to vector<8x1xf32>
    %68 = tpu.reciprocal %67 {approx = true} : vector<8x1xf32> -> vector<8x1xf32>
    %69 = vector.broadcast %68 : vector<8x1xf32> to vector<8x8xf32>
    %70 = arith.mulf %65, %69 : vector<8x8xf32>
    %71 = arith.truncf %70 : vector<8x8xf32> to vector<8x8xbf16>
    %cst_23 = arith.constant dense<0.000000e+00> : vector<8x4xf32>
    %72 = tpu.matmul %71, %59, %cst_23 {dimension_numbers = #tpu.dot_dimension_numbers<[1], [0], [0], [1], [0, 0, 1, 1], [], []>} : vector<8x8xbf16>, vector<8x4xbf16>, vector<8x4xf32> -> vector<8x4xf32>
    %c0_24 = arith.constant 0 : index
    %c12 = arith.constant 12 : index
    %73 = vector.load %arg6[%c0_24, %c12] : memref<8x32xf32, #tpu.memory_space<vmem>>, vector<8x4xf32>
    tpu.vector_store %arg6[%c0_24, %c12], %72 {strides = array<i32>} : memref<8x32xf32, #tpu.memory_space<vmem>>, vector<8x4xf32>,
    %74 = vector.extract_strided_slice %5 {offsets = [0, 16], sizes = [8, 4], strides = [1, 1]} : vector<8x96xbf16> to vector<8x4xbf16>
    %75 = vector.extract_strided_slice %5 {offsets = [0, 48], sizes = [8, 4], strides = [1, 1]} : vector<8x96xbf16> to vector<8x4xbf16>
    %76 = vector.extract_strided_slice %5 {offsets = [0, 80], sizes = [8, 4], strides = [1, 1]} : vector<8x96xbf16> to vector<8x4xbf16>
    %cst_25 = arith.constant dense<0.000000e+00> : vector<8x8xf32>
    %77 = tpu.matmul %74, %75, %cst_25 {dimension_numbers = #tpu.dot_dimension_numbers<[1], [1], [0], [0], [0, 0, 1, 0], [], []>} : vector<8x4xbf16>, vector<8x4xbf16>, vector<8x8xf32> -> vector<8x8xf32>
    %cst_26 = arith.constant dense<0xFF800000> : vector<8xf32>
    %78 = vector.multi_reduction <maximumf>, %77, %cst_26 [1] : vector<8x8xf32> to vector<8xf32>
    %79 = vector.shape_cast %78 : vector<8xf32> to vector<8x1xf32>
    %80 = vector.broadcast %79 : vector<8x1xf32> to vector<8x8xf32>
    %81 = arith.subf %77, %80 : vector<8x8xf32>
    %82 = math.exp %81 : vector<8x8xf32>
    %cst_27 = arith.constant dense<0.000000e+00> : vector<8xf32>
    %83 = vector.multi_reduction <add>, %82, %cst_27 [1] : vector<8x8xf32> to vector<8xf32>
    %84 = vector.shape_cast %83 : vector<8xf32> to vector<8x1xf32>
    %85 = tpu.reciprocal %84 {approx = true} : vector<8x1xf32> -> vector<8x1xf32>
    %86 = vector.broadcast %85 : vector<8x1xf32> to vector<8x8xf32>
    %87 = arith.mulf %82, %86 : vector<8x8xf32>
    %88 = arith.truncf %87 : vector<8x8xf32> to vector<8x8xbf16>
    %cst_28 = arith.constant dense<0.000000e+00> : vector<8x4xf32>
    %89 = tpu.matmul %88, %76, %cst_28 {dimension_numbers = #tpu.dot_dimension_numbers<[1], [0], [0], [1], [0, 0, 1, 1], [], []>} : vector<8x8xbf16>, vector<8x4xbf16>, vector<8x4xf32> -> vector<8x4xf32>
    %c0_29 = arith.constant 0 : index
    %c16 = arith.constant 16 : index
    %90 = vector.load %arg6[%c0_29, %c16] : memref<8x32xf32, #tpu.memory_space<vmem>>, vector<8x4xf32>
    tpu.vector_store %arg6[%c0_29, %c16], %89 {strides = array<i32>} : memref<8x32xf32, #tpu.memory_space<vmem>>, vector<8x4xf32>,
    %91 = vector.extract_strided_slice %5 {offsets = [0, 20], sizes = [8, 4], strides = [1, 1]} : vector<8x96xbf16> to vector<8x4xbf16>
    %92 = vector.extract_strided_slice %5 {offsets = [0, 52], sizes = [8, 4], strides = [1, 1]} : vector<8x96xbf16> to vector<8x4xbf16>
    %93 = vector.extract_strided_slice %5 {offsets = [0, 84], sizes = [8, 4], strides = [1, 1]} : vector<8x96xbf16> to vector<8x4xbf16>
    %cst_30 = arith.constant dense<0.000000e+00> : vector<8x8xf32>
    %94 = tpu.matmul %91, %92, %cst_30 {dimension_numbers = #tpu.dot_dimension_numbers<[1], [1], [0], [0], [0, 0, 1, 0], [], []>} : vector<8x4xbf16>, vector<8x4xbf16>, vector<8x8xf32> -> vector<8x8xf32>
    %cst_31 = arith.constant dense<0xFF800000> : vector<8xf32>
    %95 = vector.multi_reduction <maximumf>, %94, %cst_31 [1] : vector<8x8xf32> to vector<8xf32>
    %96 = vector.shape_cast %95 : vector<8xf32> to vector<8x1xf32>
    %97 = vector.broadcast %96 : vector<8x1xf32> to vector<8x8xf32>
    %98 = arith.subf %94, %97 : vector<8x8xf32>
    %99 = math.exp %98 : vector<8x8xf32>
    %cst_32 = arith.constant dense<0.000000e+00> : vector<8xf32>
    %100 = vector.multi_reduction <add>, %99, %cst_32 [1] : vector<8x8xf32> to vector<8xf32>
    %101 = vector.shape_cast %100 : vector<8xf32> to vector<8x1xf32>
    %102 = tpu.reciprocal %101 {approx = true} : vector<8x1xf32> -> vector<8x1xf32>
    %103 = vector.broadcast %102 : vector<8x1xf32> to vector<8x8xf32>
    %104 = arith.mulf %99, %103 : vector<8x8xf32>
    %105 = arith.truncf %104 : vector<8x8xf32> to vector<8x8xbf16>
    %cst_33 = arith.constant dense<0.000000e+00> : vector<8x4xf32>
    %106 = tpu.matmul %105, %93, %cst_33 {dimension_numbers = #tpu.dot_dimension_numbers<[1], [0], [0], [1], [0, 0, 1, 1], [], []>} : vector<8x8xbf16>, vector<8x4xbf16>, vector<8x4xf32> -> vector<8x4xf32>
    %c0_34 = arith.constant 0 : index
    %c20 = arith.constant 20 : index
    %107 = vector.load %arg6[%c0_34, %c20] : memref<8x32xf32, #tpu.memory_space<vmem>>, vector<8x4xf32>
    tpu.vector_store %arg6[%c0_34, %c20], %106 {strides = array<i32>} : memref<8x32xf32, #tpu.memory_space<vmem>>, vector<8x4xf32>,
    %108 = vector.extract_strided_slice %5 {offsets = [0, 24], sizes = [8, 4], strides = [1, 1]} : vector<8x96xbf16> to vector<8x4xbf16>
    %109 = vector.extract_strided_slice %5 {offsets = [0, 56], sizes = [8, 4], strides = [1, 1]} : vector<8x96xbf16> to vector<8x4xbf16>
    %110 = vector.extract_strided_slice %5 {offsets = [0, 88], sizes = [8, 4], strides = [1, 1]} : vector<8x96xbf16> to vector<8x4xbf16>
    %cst_35 = arith.constant dense<0.000000e+00> : vector<8x8xf32>
    %111 = tpu.matmul %108, %109, %cst_35 {dimension_numbers = #tpu.dot_dimension_numbers<[1], [1], [0], [0], [0, 0, 1, 0], [], []>} : vector<8x4xbf16>, vector<8x4xbf16>, vector<8x8xf32> -> vector<8x8xf32>
    %cst_36 = arith.constant dense<0xFF800000> : vector<8xf32>
    %112 = vector.multi_reduction <maximumf>, %111, %cst_36 [1] : vector<8x8xf32> to vector<8xf32>
    %113 = vector.shape_cast %112 : vector<8xf32> to vector<8x1xf32>
    %114 = vector.broadcast %113 : vector<8x1xf32> to vector<8x8xf32>
    %115 = arith.subf %111, %114 : vector<8x8xf32>
    %116 = math.exp %115 : vector<8x8xf32>
    %cst_37 = arith.constant dense<0.000000e+00> : vector<8xf32>
    %117 = vector.multi_reduction <add>, %116, %cst_37 [1] : vector<8x8xf32> to vector<8xf32>
    %118 = vector.shape_cast %117 : vector<8xf32> to vector<8x1xf32>
    %119 = tpu.reciprocal %118 {approx = true} : vector<8x1xf32> -> vector<8x1xf32>
    %120 = vector.broadcast %119 : vector<8x1xf32> to vector<8x8xf32>
    %121 = arith.mulf %116, %120 : vector<8x8xf32>
    %122 = arith.truncf %121 : vector<8x8xf32> to vector<8x8xbf16>
    %cst_38 = arith.constant dense<0.000000e+00> : vector<8x4xf32>
    %123 = tpu.matmul %122, %110, %cst_38 {dimension_numbers = #tpu.dot_dimension_numbers<[1], [0], [0], [1], [0, 0, 1, 1], [], []>} : vector<8x8xbf16>, vector<8x4xbf16>, vector<8x4xf32> -> vector<8x4xf32>
    %c0_39 = arith.constant 0 : index
    %c24 = arith.constant 24 : index
    %124 = vector.load %arg6[%c0_39, %c24] : memref<8x32xf32, #tpu.memory_space<vmem>>, vector<8x4xf32>
    tpu.vector_store %arg6[%c0_39, %c24], %123 {strides = array<i32>} : memref<8x32xf32, #tpu.memory_space<vmem>>, vector<8x4xf32>,
    %125 = vector.extract_strided_slice %5 {offsets = [0, 28], sizes = [8, 4], strides = [1, 1]} : vector<8x96xbf16> to vector<8x4xbf16>
    %126 = vector.extract_strided_slice %5 {offsets = [0, 60], sizes = [8, 4], strides = [1, 1]} : vector<8x96xbf16> to vector<8x4xbf16>
    %127 = vector.extract_strided_slice %5 {offsets = [0, 92], sizes = [8, 4], strides = [1, 1]} : vector<8x96xbf16> to vector<8x4xbf16>
    %cst_40 = arith.constant dense<0.000000e+00> : vector<8x8xf32>
    %128 = tpu.matmul %125, %126, %cst_40 {dimension_numbers = #tpu.dot_dimension_numbers<[1], [1], [0], [0], [0, 0, 1, 0], [], []>} : vector<8x4xbf16>, vector<8x4xbf16>, vector<8x8xf32> -> vector<8x8xf32>
    %cst_41 = arith.constant dense<0xFF800000> : vector<8xf32>
    %129 = vector.multi_reduction <maximumf>, %128, %cst_41 [1] : vector<8x8xf32> to vector<8xf32>
    %130 = vector.shape_cast %129 : vector<8xf32> to vector<8x1xf32>
    %131 = vector.broadcast %130 : vector<8x1xf32> to vector<8x8xf32>
    %132 = arith.subf %128, %131 : vector<8x8xf32>
    %133 = math.exp %132 : vector<8x8xf32>
    %cst_42 = arith.constant dense<0.000000e+00> : vector<8xf32>
    %134 = vector.multi_reduction <add>, %133, %cst_42 [1] : vector<8x8xf32> to vector<8xf32>
    %135 = vector.shape_cast %134 : vector<8xf32> to vector<8x1xf32>
    %136 = tpu.reciprocal %135 {approx = true} : vector<8x1xf32> -> vector<8x1xf32>
    %137 = vector.broadcast %136 : vector<8x1xf32> to vector<8x8xf32>
    %138 = arith.mulf %133, %137 : vector<8x8xf32>
    %139 = arith.truncf %138 : vector<8x8xf32> to vector<8x8xbf16>
    %cst_43 = arith.constant dense<0.000000e+00> : vector<8x4xf32>
    %140 = tpu.matmul %139, %127, %cst_43 {dimension_numbers = #tpu.dot_dimension_numbers<[1], [0], [0], [1], [0, 0, 1, 1], [], []>} : vector<8x8xbf16>, vector<8x4xbf16>, vector<8x4xf32> -> vector<8x4xf32>
    %c0_44 = arith.constant 0 : index
    %c28 = arith.constant 28 : index
    %141 = vector.load %arg6[%c0_44, %c28] : memref<8x32xf32, #tpu.memory_space<vmem>>, vector<8x4xf32>
    tpu.vector_store %arg6[%c0_44, %c28], %140 {strides = array<i32>} : memref<8x32xf32, #tpu.memory_space<vmem>>, vector<8x4xf32>,
    %c0_45 = arith.constant 0 : index
    %c0_46 = arith.constant 0 : index
    %142 = vector.load %arg6[%c0_45, %c0_46] : memref<8x32xf32, #tpu.memory_space<vmem>>, vector<8x32xf32>
    %143 = arith.truncf %142 : vector<8x32xf32> to vector<8x32xbf16>
    %c0_47 = arith.constant 0 : index
    %c0_48 = arith.constant 0 : index
    %144 = vector.load %arg3[%c0_47, %c0_48] : memref<32x32xbf16, #tpu.memory_space<vmem>>, vector<32x32xbf16>
    %cst_49 = arith.constant dense<0.000000e+00> : vector<8x32xf32>
    %145 = tpu.matmul %143, %144, %cst_49 {dimension_numbers = #tpu.dot_dimension_numbers<[1], [0], [0], [1], [0, 0, 1, 1], [], []>} : vector<8x32xbf16>, vector<32x32xbf16>, vector<8x32xf32> -> vector<8x32xf32>
    %c0_50 = arith.constant 0 : index
    %c0_51 = arith.constant 0 : index
    %146 = vector.load %arg4[%c0_50, %c0_51] : memref<1x32xf32, #tpu.memory_space<vmem>>, vector<1x32xf32>
    %147 = vector.broadcast %146 : vector<1x32xf32> to vector<8x32xf32>
    %148 = arith.addf %145, %147 : vector<8x32xf32>
    %c0_52 = arith.constant 0 : index
    %c0_53 = arith.constant 0 : index
    %c0_54 = arith.constant 0 : index
    %149 = vector.load %arg5[%c0_52, %c0_53, %c0_54] : memref<1x8x32xf32, #tpu.memory_space<vmem>>, vector<1x8x32xf32>
    %150 = vector.shape_cast %149 : vector<1x8x32xf32> to vector<8x32xf32>
    %151 = vector.shape_cast %148 : vector<8x32xf32> to vector<1x8x32xf32>
    tpu.vector_store %arg5[%c0_52, %c0_53, %c0_54], %151 {strides = array<i32>} : memref<1x8x32xf32, #tpu.memory_space<vmem>>, vector<1x8x32xf32>,
    return
  }
  func.func @transform_0(%arg0: i32) -> (i32, i32, i32) {
    %c0_i32 = arith.constant 0 : i32
    %c0_i32_0 = arith.constant 0 : i32
    %c0_i32_1 = arith.constant 0 : i32
    return %arg0, %c0_i32, %c0_i32_0 : i32, i32, i32
  }
  func.func @transform_1(%arg0: i32) -> (i32, i32) {
    %c0_i32 = arith.constant 0 : i32
    %c0_i32_0 = arith.constant 0 : i32
    %c0_i32_1 = arith.constant 0 : i32
    return %c0_i32, %c0_i32_0 : i32, i32
  }
  func.func @transform_2(%arg0: i32) -> (i32, i32) {
    %c0_i32 = arith.constant 0 : i32
    %c0_i32_0 = arith.constant 0 : i32
    %c0_i32_1 = arith.constant 0 : i32
    return %c0_i32, %c0_i32_0 : i32, i32
  }
  func.func @transform_3(%arg0: i32) -> (i32, i32) {
    %c0_i32 = arith.constant 0 : i32
    %c0_i32_0 = arith.constant 0 : i32
    %c0_i32_1 = arith.constant 0 : i32
    return %c0_i32, %c0_i32_0 : i32, i32
  }
  func.func @transform_4(%arg0: i32) -> (i32, i32, i32) {
    %c0_i32 = arith.constant 0 : i32
    %c0_i32_0 = arith.constant 0 : i32
    %c0_i32_1 = arith.constant 0 : i32
    return %arg0, %c0_i32, %c0_i32_0 : i32, i32, i32
  }
}

</mosaic_0001>

<llo_original>
// kernel: tpu_custom_call.1
$region0: #{tpu_custom_call.1}
  #allocation0 [shape = 'u32[]', space=smem, size = 0x4, offset = 0x4, fixed_abs, tag = 'smem constant byte address 0x4 - core index']
  #allocation1 [shape = 'u32[144,128]{1,0:T(1,128)}', space=vmem, size = 0x12000, scoped, tag = 'internal scratch']
  #allocation2 [shape = 'f32[8,32]{1,0:T(8,128)}', space=vmem, size = 0x1000, scoped, tag = 'scratch operand']
  %s0 = inlined_call_operand.hbm [shape: f32[2,8,32], index: 0, kind: input, shape index: {}]
  %s1 = inlined_call_operand.hbm [shape: bf16[32,96], index: 1, kind: input, shape index: {}]
  %s2 = inlined_call_operand.hbm [shape: bf16[32,32], index: 2, kind: input, shape index: {}]
  %s3 = inlined_call_operand.vmem [shape: f32[1,32], index: 3, kind: input, shape index: {}]
  %s4 = inlined_call_operand.hbm [shape: f32[2,8,32], index: 4, kind: output, shape index: {}]
  %s5 = sld [smem:[#allocation0]]
  $region61: #{tpu_custom_call.1} parent=0
    _
  %s7 = ssub.s32 1, %s5
  %s8 = scalar_select 0, %s7, %s5
  $region1: #{tpu_custom_call.1} parent=0
    #allocation3 [shape = 'u8[8192]{0}', space=vmem, size = 0x2000, scoped, tag = 'input window, operand 0']
    #allocation4 [shape = 's32[2]{0}', space=sflag, size = 0x8, scoped, tag = 'scoped memory for tpu_custom_call.1']
    #allocation5 [shape = 's32[2]{0}', space=sflag, size = 0x8, scoped, tag = 'scoped memory for tpu_custom_call.1']
    #allocation6 [shape = 'u8[8192]{0}', space=vmem, size = 0x2000, scoped, tag = 'input window, operand 1, single buffered']
    #allocation7 [shape = 's32[1]{0}', space=sflag, size = 0x4, scoped, tag = 'scoped memory for tpu_custom_call.1']
    #allocation8 [shape = 'u8[8192]{0}', space=vmem, size = 0x2000, scoped, tag = 'input window, operand 2, single buffered']
    #allocation9 [shape = 'u8[8192]{0}', space=vmem, size = 0x2000, scoped, tag = 'output window, operand 0']
    %9 = vsyncpa [#allocation4], 0
    %s10 = scalar_lea.sflag [#allocation4], 1
    %11 = vsyncpa %s10, 0
    %12 = vsyncpa [#allocation7], 0
    %13 = vsyncpa [#allocation5], 0
    %s14 = scalar_lea.sflag [#allocation5], 1
    %15 = vsyncpa %s14, 0
    loop: start=0, step=1, limit=4
    $region2: #{tpu_custom_call.1} parent=1 // loop_pre_header
      _
    $region3: #{tpu_custom_call.1} parent=1 // loop_header
      %s17 = sphi 0, %s21
      %p18 = scmp.ge.s32.totalorder %s17, 4
      %s27 = sphi 0, %s29
      %s30 = sphi 0, %s27
      %s31 = sphi 0, %s30
      %s47 = sphi 0, %s31
      %s51 = sphi 0, %s51
      %s53 = sphi 0, %s51
      %s54 = sphi 0, %s53
      %s68 = sphi 0, %s54
      %s72 = sphi 0, %s72
      %s74 = sphi 0, %s72
      %s75 = sphi 0, %s74
      %s89 = sphi 0, %s75
      %s93 = sphi 0, %s93
      %s95 = sphi 0, %s93
      %s96 = sphi 0, %s95
      %s110 = sphi 0, %s96
      %s116 = sphi 0, %s118
      %s119 = sphi 0, %s116
      %s120 = sphi 0, %s119
      %s136 = sphi 0, %s120
    $region4: #{tpu_custom_call.1} parent=1 // loop_header_branch
      %20 = sbr.rel (%p18) target = $region8
    $region5: #{tpu_custom_call.1} parent=1 // loop_body
      %s22 = ssub.s32 %s17, 1
      %s23 = ssub.s32 %s17, 2
      %s24 = sadd.s32 %s17, 1
      %s25 = ssub.s32 %s17, %s24
      %p26 = scmp.eq.s32.totalorder %s25, 0
      %s28 = sadd.s32 %s27, 1
      %s29 = scalar_select %p26, %s27, %s28
      %p32 = pneg %p26
      %p33 = scmp.eq.s32.totalorder %s17, 1
      %p34 = por %p32, %p33
      %p35 = scmp.ne.s32.totalorder %s27, %s30
      %p36 = scmp.eq.s32.totalorder %s17, 0
      %p37 = por %p35, %p36
      %p38 = scmp.ne.s32.totalorder %s27, %s30
      %p39 = scmp.eq.s32.totalorder %s22, 1
      %p40 = por %p38, %p39
      %p41 = scmp.ne.s32.totalorder %s30, %s31
      %p42 = scmp.eq.s32.totalorder %s22, 0
      %p43 = por %p41, %p42
      %p44 = scmp.ne.s32.totalorder %s30, %s31
      %p45 = scmp.eq.s32.totalorder %s23, 1
      %p46 = por %p44, %p45
      %p48 = scmp.ne.s32.totalorder %s31, %s47
      %p49 = scmp.eq.s32.totalorder %s23, 0
      %p50 = por %p48, %p49
      %s52 = sadd.s32 %s51, 1
      %p55 = scmp.eq.s32.totalorder %s17, 1
      %p56 = scmp.ne.s32.totalorder %s51, %s53
      %p57 = scmp.eq.s32.totalorder %s17, 0
      %p58 = por %p56, %p57
      %p59 = scmp.ne.s32.totalorder %s51, %s53
      %p60 = scmp.eq.s32.totalorder %s22, 1
      %p61 = por %p59, %p60
      %p62 = scmp.ne.s32.totalorder %s53, %s54
      %p63 = scmp.eq.s32.totalorder %s22, 0
      %p64 = por %p62, %p63
      %p65 = scmp.ne.s32.totalorder %s53, %s54
      %p66 = scmp.eq.s32.totalorder %s23, 1
      %p67 = por %p65, %p66
      %p69 = scmp.ne.s32.totalorder %s54, %s68
      %p70 = scmp.eq.s32.totalorder %s23, 0
      %p71 = por %p69, %p70
      %s73 = sadd.s32 %s72, 1
      %p76 = scmp.eq.s32.totalorder %s17, 1
      %p77 = scmp.ne.s32.totalorder %s72, %s74
      %p78 = scmp.eq.s32.totalorder %s17, 0
      %p79 = por %p77, %p78
      %p80 = scmp.ne.s32.totalorder %s72, %s74
      %p81 = scmp.eq.s32.totalorder %s22, 1
      %p82 = por %p80, %p81
      %p83 = scmp.ne.s32.totalorder %s74, %s75
      %p84 = scmp.eq.s32.totalorder %s22, 0
      %p85 = por %p83, %p84
      %p86 = scmp.ne.s32.totalorder %s74, %s75
      %p87 = scmp.eq.s32.totalorder %s23, 1
      %p88 = por %p86, %p87
      %p90 = scmp.ne.s32.totalorder %s75, %s89
      %p91 = scmp.eq.s32.totalorder %s23, 0
      %p92 = por %p90, %p91
      %s94 = sadd.s32 %s93, 1
      %p97 = scmp.eq.s32.totalorder %s17, 1
      %p98 = scmp.ne.s32.totalorder %s93, %s95
      %p99 = scmp.eq.s32.totalorder %s17, 0
      %p100 = por %p98, %p99
      %p101 = scmp.ne.s32.totalorder %s93, %s95
      %p102 = scmp.eq.s32.totalorder %s22, 1
      %p103 = por %p101, %p102
      %p104 = scmp.ne.s32.totalorder %s95, %s96
      %p105 = scmp.eq.s32.totalorder %s22, 0
      %p106 = por %p104, %p105
      %p107 = scmp.ne.s32.totalorder %s95, %s96
      %p108 = scmp.eq.s32.totalorder %s23, 1
      %p109 = por %p107, %p108
      %p111 = scmp.ne.s32.totalorder %s96, %s110
      %p112 = scmp.eq.s32.totalorder %s23, 0
      %p113 = por %p111, %p112
      %s114 = ssub.s32 %s17, %s24
      %p115 = scmp.eq.s32.totalorder %s114, 0
      %s117 = sadd.s32 %s116, 1
      %s118 = scalar_select %p115, %s116, %s117
      %p121 = pneg %p115
      %p122 = scmp.eq.s32.totalorder %s17, 1
      %p123 = por %p121, %p122
      %p124 = scmp.ne.s32.totalorder %s116, %s119
      %p125 = scmp.eq.s32.totalorder %s17, 0
      %p126 = por %p124, %p125
      %p127 = scmp.ne.s32.totalorder %s116, %s119
      %p128 = scmp.eq.s32.totalorder %s22, 1
      %p129 = por %p127, %p128
      %p130 = scmp.ne.s32.totalorder %s119, %s120
      %p131 = scmp.eq.s32.totalorder %s22, 0
      %p132 = por %p130, %p131
      %p133 = scmp.ne.s32.totalorder %s119, %s120
      %p134 = scmp.eq.s32.totalorder %s23, 1
      %p135 = por %p133, %p134
      %p137 = scmp.ne.s32.totalorder %s120, %s136
      %p138 = scmp.eq.s32.totalorder %s23, 0
      %p139 = por %p137, %p138
      %p140 = scmp.le.s32.totalorder 1, %s17
      %p141 = scmp.lt.s32.totalorder %s17, 3
      %p142 = pnand %p140, %p141
      %p143 = pneg %p142
      // Predicated region
      $region9: #{tpu_custom_call.1} parent=5 // pred_check
        _
      $region10: #{tpu_custom_call.1} parent=5 // pred_check_branch
        %145 = sbr.rel (%p142) target = $region12
      $region11: #{tpu_custom_call.1} parent=5 // pred_region
        %s146 = ssub.s32 %s17, 1
        // Predicated region
        $region13: #{tpu_custom_call.1} parent=11 // pred_check
          %p147 = pneg %p64
        $region14: #{tpu_custom_call.1} parent=11 // pred_check_branch
          %149 = sbr.rel (%p147) target = $region16
        $region15: #{tpu_custom_call.1} parent=11 // pred_region
          %s151 = ssub.s32 256, 256
          %152 = vsyncadd [#allocation7], %s151
          %s153 = sshll.u32 [#allocation6], 4
          %s154 = int_to_ptr.vmem [resolvable:$true] %s153
          %159 = dma.hbm_to_vmem [thread:$0]  %s1, 256, %s154, [#allocation7], 64, 64, 4
        $region16: #{tpu_custom_call.1} parent=11 // pred_fallthru
          _
        // Predicated region
        $region17: #{tpu_custom_call.1} parent=11 // pred_check
          %p160 = pneg %p85
        $region18: #{tpu_custom_call.1} parent=11 // pred_check_branch
          %162 = sbr.rel (%p160) target = $region20
        $region19: #{tpu_custom_call.1} parent=11 // pred_region
          %s164 = ssub.s32 256, 256
          %165 = vsyncadd [#allocation7], %s164
          %s166 = sshll.u32 [#allocation8], 4
          %s167 = int_to_ptr.vmem [resolvable:$true] %s166
          %172 = dma.hbm_to_vmem [thread:$0]  %s2, 256, %s167, [#allocation7], 64, 64, 4
        $region20: #{tpu_custom_call.1} parent=11 // pred_fallthru
          _
        // Predicated region
        $region21: #{tpu_custom_call.1} parent=11 // pred_check
          %p173 = pneg %p106
        $region22: #{tpu_custom_call.1} parent=11 // pred_check_branch
          %175 = sbr.rel (%p173) target = $region24
        $region23: #{tpu_custom_call.1} parent=11 // pred_region
          _
        $region24: #{tpu_custom_call.1} parent=11 // pred_fallthru
          _
      $region12: #{tpu_custom_call.1} parent=5 // pred_fallthru
        _
      %p176 = scmp.lt.s32.totalorder %s17, 2
      // Predicated region
      $region25: #{tpu_custom_call.1} parent=5 // pred_check
        %p177 = pneg %p176
      $region26: #{tpu_custom_call.1} parent=5 // pred_check_branch
        %179 = sbr.rel (%p177) target = $region28
      $region27: #{tpu_custom_call.1} parent=5 // pred_region
        // Predicated region
        $region29: #{tpu_custom_call.1} parent=27 // pred_check
          %p180 = pneg %p37
        $region30: #{tpu_custom_call.1} parent=27 // pred_check_branch
          %182 = sbr.rel (%p180) target = $region32
        $region31: #{tpu_custom_call.1} parent=27 // pred_region
          %s183 = sand.u32 %s27, 1
          %s184 = scalar_lea.sflag [#allocation4], %s183
          %s185 = sand.u32 %s27, 1
          %s186 = smul.addr %s185, 8
          %s187 = scalar_lea.vmem [#allocation3], %s186
          %s189 = ssub.s32 128, 128
          %190 = vsyncadd %s184, %s189
          %s191 = smul.addr %s17, 128
          %s192 = scalar_lea.hbm %s0, %s191
          %s194 = sshll.u32 %s187, 4
          %s195 = int_to_ptr.vmem [resolvable:$true] %s194
          %197 = dma.hbm_to_vmem [thread:$0]  %s192, 128, %s195, %s184
        $region32: #{tpu_custom_call.1} parent=27 // pred_fallthru
          _
      $region28: #{tpu_custom_call.1} parent=5 // pred_fallthru
        _
      %p198 = scmp.le.s32.totalorder 1, %s17
      %p199 = scmp.lt.s32.totalorder %s17, 3
      %p200 = pnand %p198, %p199
      %p201 = pneg %p200
      // Predicated region
      $region33: #{tpu_custom_call.1} parent=5 // pred_check
        _
      $region34: #{tpu_custom_call.1} parent=5 // pred_check_branch
        %203 = sbr.rel (%p200) target = $region36
      $region35: #{tpu_custom_call.1} parent=5 // pred_region
        %s204 = ssub.s32 %s17, 1
        %s205 = sand.u32 %s30, 1
        %s206 = scalar_lea.sflag [#allocation4], %s205
        %s207 = sand.u32 %s30, 1
        %s208 = smul.addr %s207, 8
        %s209 = scalar_lea.vmem [#allocation3], %s208
        // Predicated region
        $region37: #{tpu_custom_call.1} parent=35 // pred_check
          %p210 = pneg %p43
        $region38: #{tpu_custom_call.1} parent=35 // pred_check_branch
          %212 = sbr.rel (%p210) target = $region40
        $region39: #{tpu_custom_call.1} parent=35 // pred_region
          %213 = dma.done %s206, 128
        $region40: #{tpu_custom_call.1} parent=35 // pred_fallthru
          _
        // Predicated region
        $region41: #{tpu_custom_call.1} parent=35 // pred_check
          %p214 = pneg %p64
        $region42: #{tpu_custom_call.1} parent=35 // pred_check_branch
          %216 = sbr.rel (%p214) target = $region44
        $region43: #{tpu_custom_call.1} parent=35 // pred_region
          %217 = dma.done [#allocation7], 256
        $region44: #{tpu_custom_call.1} parent=35 // pred_fallthru
          _
        // Predicated region
        $region45: #{tpu_custom_call.1} parent=35 // pred_check
          %p218 = pneg %p85
        $region46: #{tpu_custom_call.1} parent=35 // pred_check_branch
          %220 = sbr.rel (%p218) target = $region48
        $region47: #{tpu_custom_call.1} parent=35 // pred_region
          %221 = dma.done [#allocation7], 256
        $region48: #{tpu_custom_call.1} parent=35 // pred_fallthru
          _
        %s222 = sand.u32 %s30, 1
        %s223 = scalar_lea.sflag [#allocation4], %s222
        %s224 = sand.u32 %s30, 1
        %s225 = smul.addr %s224, 8
        %s226 = scalar_lea.vmem [#allocation3], %s225
        %p227 = pneg %p43
        %p228 = pneg %p40
        %p229 = pneg %p64
        %p230 = pneg %p61
        %p231 = pneg %p85
        %p232 = pneg %p82
        %p233 = pneg %p106
        %p234 = pneg %p103
        %p235 = pneg %p132
        %p236 = pneg %p129
        %s237 = sand.u32 %s119, 1
        %s238 = scalar_lea.sflag [#allocation5], %s237
        %s239 = sand.u32 %s119, 1
        %s240 = smul.addr %s239, 8
        %s241 = scalar_lea.vmem [#allocation9], %s240
        %v243 = vld [vmem:[%s209] sm:$0xff]
        %v244 = vpack.c.bf16 %v243, %v243
        %v245 = vld [vmem:[#allocation6] sm:$0xf]
        %v246 = vld [vmem:[#allocation6 + $0x4] sm:$0xf]
        %v247 = vld [vmem:[#allocation6 + $0x8] sm:$0xf]
        %v248 = vld [vmem:[#allocation6 + $0xc] sm:$0xf]
        %v253 = vunpack.c.l.b16 %v245
        %v254 = vunpack.c.l.b16 %v246
        %v255 = vunpack.c.l.b16 %v247
        %v256 = vunpack.c.l.b16 %v248
        %v257 = vpack.c.b16 %v254, %v253
        %v258 = vpack.c.b16 %v256, %v255
        %vm261 = vcmask 261120
        %v263 = vsel %vm261, %v244, 0
        %265 = vmatprep.subr.bf16.mxu0 0
        %266 = vmatpush1.bf16.msra.mxu0 %v257
        %267 = vmatprep.subr.bf16.mxu0 0
        %268 = vmatpush1.bf16.msra.mxu0 %v258
        %269 = vmatprep.subr.bf16.mxu0 0
        %270 = vmatpush1.bf16.msra.mxu0 0
        %271 = vmatprep.subr.bf16.mxu0 0
        %272 = vmatpush1.bf16.msra.mxu0 0
        %273 = vmatprep.subr.bf16.mxu0 0
        %274 = vmatpush1.bf16.msra.mxu0 0
        %275 = vmatprep.subr.bf16.mxu0 0
        %276 = vmatpush1.bf16.msra.mxu0 0
        %277 = vmatprep.subr.bf16.mxu0 0
        %278 = vmatpush1.bf16.msra.mxu0 0
        %279 = vmatprep.subr.bf16.mxu0 0
        %280 = vmatpush1.bf16.msra.mxu0 0
        %281 = vmatprep.subr.bf16.mxu0 0
        %282 = vmatpush1.bf16.msra.mxu0 0
        %283 = vmatprep.subr.bf16.mxu0 0
        %284 = vmatpush1.bf16.msra.mxu0 0
        %285 = vmatprep.subr.bf16.mxu0 0
        %286 = vmatpush1.bf16.msra.mxu0 0
        %287 = vmatprep.subr.bf16.mxu0 0
        %288 = vmatpush1.bf16.msra.mxu0 0
        %289 = vmatprep.subr.bf16.mxu0 0
        %290 = vmatpush1.bf16.msra.mxu0 0
        %291 = vmatprep.subr.bf16.mxu0 0
        %292 = vmatpush1.bf16.msra.mxu0 0
        %293 = vmatprep.subr.bf16.mxu0 0
        %294 = vmatpush1.bf16.msra.mxu0 0
        %295 = vmatprep.subr.bf16.mxu0 0
        %296 = vmatpush1.bf16.msra.mxu0 0
        %297 = vmatprep.mubr.bf16.mxu0 0
        %298 = vmatmul.mubr.bf16.gmra.mrb[0].mxu0 %v263
        %v299 = vpop.f32.mrb[0].mxu0
        %v300 = vadd.f32 0.0, %v299
        %v301 = vpop.f32.mrb[0].mxu0
        %v302 = vpop.f32.mrb[0].mxu0
        %v303 = vpop.f32.mrb[0].mxu0
        %304 = vdwg.mxu0
        %v305 = vpack.c.bf16 %v300, %v300
        %307 = vrot.lane.b32.xlu0 %v305, 96
        %v308 = vpop.permute.xlu0 %307
        %vm309 = vcmask 31744
        %v311 = vsel %vm309, %v305, 0
        %v314 = vsel %vm309, %v308, 0
        %316 = vmatprep.subr.bf16.mxu0 0
        %317 = vmatpush1.bf16.xpose.msra.mxu0 %v314
        %318 = vmatprep.subr.bf16.mxu0 0
        %319 = vmatpush1.bf16.xpose.msra.mxu0 0
        %320 = vmatprep.subr.bf16.mxu0 0
        %321 = vmatpush1.bf16.xpose.msra.mxu0 0
        %322 = vmatprep.subr.bf16.mxu0 0
        %323 = vmatpush1.bf16.xpose.msra.mxu0 0
        %324 = vmatprep.subr.bf16.mxu0 0
        %325 = vmatpush1.bf16.xpose.msra.mxu0 0
        %326 = vmatprep.subr.bf16.mxu0 0
        %327 = vmatpush1.bf16.xpose.msra.mxu0 0
        %328 = vmatprep.subr.bf16.mxu0 0
        %329 = vmatpush1.bf16.xpose.msra.mxu0 0
        %330 = vmatprep.subr.bf16.mxu0 0
        %331 = vmatpush1.bf16.xpose.msra.mxu0 0
        %332 = vmatprep.subr.bf16.mxu0 0
        %333 = vmatpush1.bf16.xpose.msra.mxu0 0
        %334 = vmatprep.subr.bf16.mxu0 0
        %335 = vmatpush1.bf16.xpose.msra.mxu0 0
        %336 = vmatprep.subr.bf16.mxu0 0
        %337 = vmatpush1.bf16.xpose.msra.mxu0 0
        %338 = vmatprep.subr.bf16.mxu0 0
        %339 = vmatpush1.bf16.xpose.msra.mxu0 0
        %340 = vmatprep.subr.bf16.mxu0 0
        %341 = vmatpush1.bf16.xpose.msra.mxu0 0
        %342 = vmatprep.subr.bf16.mxu0 0
        %343 = vmatpush1.bf16.xpose.msra.mxu0 0
        %344 = vmatprep.subr.bf16.mxu0 0
        %345 = vmatpush1.bf16.xpose.msra.mxu0 0
        %346 = vmatprep.subr.bf16.mxu0 0
        %347 = vmatpush1.bf16.xpose.msra.mxu0 0
        %348 = vmatprep.mubr.bf16.mxu0 0
        %349 = vmatmul.mubr.bf16.gmra.mrb[0].mxu0 %v311
        %v350 = vpop.f32.mrb[0].mxu0
        %v351 = vadd.f32 0.0, %v350
        %v352 = vpop.f32.mrb[0].mxu0
        %v353 = vpop.f32.mrb[0].mxu0
        %v354 = vpop.f32.mrb[0].mxu0
        %355 = vdwg.mxu0
        %vm356 = vcmask 64512
        %v357 = vsel %vm356, %v351, -inf
        %358 = vmax.xlane.f32.xlu0 %v357
        %v359 = vpop.xlane.xlu0 %358
        %v360 = vsub.f32 %v351, %v359
        %v361 = vmul.f32 %v360, 1.442695
        %v362 = vpow.pop %v361
        %v363 = vsel %vm356, %v362, 0.0
        %364 = vadd.xlane.f32.xlu0 %v363
        %v365 = vpop.xlane.xlu0 %364
        %v366 = vrcp.pop %v365
        %v367 = vmul.f32 %v362, %v366
        %v368 = vpack.c.bf16 %v367, %v367
        %369 = vrot.lane.b32.xlu0 %v305, 64
        %v370 = vpop.permute.xlu0 %369
        %v372 = vsel %vm356, %v368, 0
        %vm374 = vcmask 1043456
        %v376 = vsel %vm374, %v370, 0
        %378 = vmatprep.subr.bf16.mxu0 0
        %379 = vmatpush1.bf16.msra.mxu0 %v376
        %380 = vmatprep.subr.bf16.mxu0 0
        %381 = vmatpush1.bf16.msra.mxu0 0
        %382 = vmatprep.subr.bf16.mxu0 0
        %383 = vmatpush1.bf16.msra.mxu0 0
        %384 = vmatprep.subr.bf16.mxu0 0
        %385 = vmatpush1.bf16.msra.mxu0 0
        %386 = vmatprep.subr.bf16.mxu0 0
        %387 = vmatpush1.bf16.msra.mxu0 0
        %388 = vmatprep.subr.bf16.mxu0 0
        %389 = vmatpush1.bf16.msra.mxu0 0
        %390 = vmatprep.subr.bf16.mxu0 0
        %391 = vmatpush1.bf16.msra.mxu0 0
        %392 = vmatprep.subr.bf16.mxu0 0
        %393 = vmatpush1.bf16.msra.mxu0 0
        %394 = vmatprep.subr.bf16.mxu0 0
        %395 = vmatpush1.bf16.msra.mxu0 0
        %396 = vmatprep.subr.bf16.mxu0 0
        %397 = vmatpush1.bf16.msra.mxu0 0
        %398 = vmatprep.subr.bf16.mxu0 0
        %399 = vmatpush1.bf16.msra.mxu0 0
        %400 = vmatprep.subr.bf16.mxu0 0
        %401 = vmatpush1.bf16.msra.mxu0 0
        %402 = vmatprep.subr.bf16.mxu0 0
        %403 = vmatpush1.bf16.msra.mxu0 0
        %404 = vmatprep.subr.bf16.mxu0 0
        %405 = vmatpush1.bf16.msra.mxu0 0
        %406 = vmatprep.subr.bf16.mxu0 0
        %407 = vmatpush1.bf16.msra.mxu0 0
        %408 = vmatprep.subr.bf16.mxu0 0
        %409 = vmatpush1.bf16.msra.mxu0 0
        %410 = vmatprep.mubr.bf16.mxu0 0
        %411 = vmatmul.mubr.bf16.gmra.mrb[0].mxu0 %v372
        %v412 = vpop.f32.mrb[0].mxu0
        %v413 = vadd.f32 0.0, %v412
        %v414 = vpop.f32.mrb[0].mxu0
        %v415 = vpop.f32.mrb[0].mxu0
        %v416 = vpop.f32.mrb[0].mxu0
        %417 = vdwg.mxu0
        %418 = vst.msk [vmem:[#allocation2] sm:$0xff] %vm309, %v413
        %419 = vrot.lane.b32.xlu0 %v305, 124
        %v420 = vpop.permute.xlu0 %419
        %421 = vrot.lane.b32.xlu0 %v305, 92
        %v422 = vpop.permute.xlu0 %421
        %v424 = vsel %vm309, %v420, 0
        %v427 = vsel %vm309, %v422, 0
        %429 = vmatprep.subr.bf16.mxu0 0
        %430 = vmatpush1.bf16.xpose.msra.mxu0 %v427
        %431 = vmatprep.subr.bf16.mxu0 0
        %432 = vmatpush1.bf16.xpose.msra.mxu0 0
        %433 = vmatprep.subr.bf16.mxu0 0
        %434 = vmatpush1.bf16.xpose.msra.mxu0 0
        %435 = vmatprep.subr.bf16.mxu0 0
        %436 = vmatpush1.bf16.xpose.msra.mxu0 0
        %437 = vmatprep.subr.bf16.mxu0 0
        %438 = vmatpush1.bf16.xpose.msra.mxu0 0
        %439 = vmatprep.subr.bf16.mxu0 0
        %440 = vmatpush1.bf16.xpose.msra.mxu0 0
        %441 = vmatprep.subr.bf16.mxu0 0
        %442 = vmatpush1.bf16.xpose.msra.mxu0 0
        %443 = vmatprep.subr.bf16.mxu0 0
        %444 = vmatpush1.bf16.xpose.msra.mxu0 0
        %445 = vmatprep.subr.bf16.mxu0 0
        %446 = vmatpush1.bf16.xpose.msra.mxu0 0
        %447 = vmatprep.subr.bf16.mxu0 0
        %448 = vmatpush1.bf16.xpose.msra.mxu0 0
        %449 = vmatprep.subr.bf16.mxu0 0
        %450 = vmatpush1.bf16.xpose.msra.mxu0 0
        %451 = vmatprep.subr.bf16.mxu0 0
        %452 = vmatpush1.bf16.xpose.msra.mxu0 0
        %453 = vmatprep.subr.bf16.mxu0 0
        %454 = vmatpush1.bf16.xpose.msra.mxu0 0
        %455 = vmatprep.subr.bf16.mxu0 0
        %456 = vmatpush1.bf16.xpose.msra.mxu0 0
        %457 = vmatprep.subr.bf16.mxu0 0
        %458 = vmatpush1.bf16.xpose.msra.mxu0 0
        %459 = vmatprep.subr.bf16.mxu0 0
        %460 = vmatpush1.bf16.xpose.msra.mxu0 0
        %461 = vmatprep.mubr.bf16.mxu0 0
        %462 = vmatmul.mubr.bf16.gmra.mrb[0].mxu0 %v424
        %v463 = vpop.f32.mrb[0].mxu0
        %v464 = vadd.f32 0.0, %v463
        %v465 = vpop.f32.mrb[0].mxu0
        %v466 = vpop.f32.mrb[0].mxu0
        %v467 = vpop.f32.mrb[0].mxu0
        %468 = vdwg.mxu0
        %v469 = vsel %vm356, %v464, -inf
        %470 = vmax.xlane.f32.xlu0 %v469
        %v471 = vpop.xlane.xlu0 %470
        %v472 = vsub.f32 %v464, %v471
        %v473 = vmul.f32 %v472, 1.442695
        %v474 = vpow.pop %v473
        %v475 = vsel %vm356, %v474, 0.0
        %476 = vadd.xlane.f32.xlu0 %v475
        %v477 = vpop.xlane.xlu0 %476
        %v478 = vrcp.pop %v477
        %v479 = vmul.f32 %v474, %v478
        %v480 = vpack.c.bf16 %v479, %v479
        %481 = vrot.lane.b32.xlu0 %v305, 60
        %v482 = vpop.permute.xlu0 %481
        %v484 = vsel %vm356, %v480, 0
        %v487 = vsel %vm374, %v482, 0
        %489 = vmatprep.subr.bf16.mxu0 0
        %490 = vmatpush1.bf16.msra.mxu0 %v487
        %491 = vmatprep.subr.bf16.mxu0 0
        %492 = vmatpush1.bf16.msra.mxu0 0
        %493 = vmatprep.subr.bf16.mxu0 0
        %494 = vmatpush1.bf16.msra.mxu0 0
        %495 = vmatprep.subr.bf16.mxu0 0
        %496 = vmatpush1.bf16.msra.mxu0 0
        %497 = vmatprep.subr.bf16.mxu0 0
        %498 = vmatpush1.bf16.msra.mxu0 0
        %499 = vmatprep.subr.bf16.mxu0 0
        %500 = vmatpush1.bf16.msra.mxu0 0
        %501 = vmatprep.subr.bf16.mxu0 0
        %502 = vmatpush1.bf16.msra.mxu0 0
        %503 = vmatprep.subr.bf16.mxu0 0
        %504 = vmatpush1.bf16.msra.mxu0 0
        %505 = vmatprep.subr.bf16.mxu0 0
        %506 = vmatpush1.bf16.msra.mxu0 0
        %507 = vmatprep.subr.bf16.mxu0 0
        %508 = vmatpush1.bf16.msra.mxu0 0
        %509 = vmatprep.subr.bf16.mxu0 0
        %510 = vmatpush1.bf16.msra.mxu0 0
        %511 = vmatprep.subr.bf16.mxu0 0
        %512 = vmatpush1.bf16.msra.mxu0 0
        %513 = vmatprep.subr.bf16.mxu0 0
        %514 = vmatpush1.bf16.msra.mxu0 0
        %515 = vmatprep.subr.bf16.mxu0 0
        %516 = vmatpush1.bf16.msra.mxu0 0
        %517 = vmatprep.subr.bf16.mxu0 0
        %518 = vmatpush1.bf16.msra.mxu0 0
        %519 = vmatprep.subr.bf16.mxu0 0
        %520 = vmatpush1.bf16.msra.mxu0 0
        %521 = vmatprep.mubr.bf16.mxu0 0
        %522 = vmatmul.mubr.bf16.gmra.mrb[0].mxu0 %v484
        %v523 = vpop.f32.mrb[0].mxu0
        %v524 = vadd.f32 0.0, %v523
        %v525 = vpop.f32.mrb[0].mxu0
        %v526 = vpop.f32.mrb[0].mxu0
        %v527 = vpop.f32.mrb[0].mxu0
        %528 = vdwg.mxu0
        %530 = vrot.lane.b32.xlu0 %v524, 4
        %v531 = vpop.permute.xlu0 %530
        %vm533 = vcmask 64544
        %534 = vst.msk [vmem:[#allocation2] sm:$0xff] %vm533, %v531
        %535 = vrot.lane.b32.xlu0 %v305, 120
        %v536 = vpop.permute.xlu0 %535
        %537 = vrot.lane.b32.xlu0 %v305, 88
        %v538 = vpop.permute.xlu0 %537
        %v540 = vsel %vm309, %v536, 0
        %v543 = vsel %vm309, %v538, 0
        %545 = vmatprep.subr.bf16.mxu0 0
        %546 = vmatpush1.bf16.xpose.msra.mxu0 %v543
        %547 = vmatprep.subr.bf16.mxu0 0
        %548 = vmatpush1.bf16.xpose.msra.mxu0 0
        %549 = vmatprep.subr.bf16.mxu0 0
        %550 = vmatpush1.bf16.xpose.msra.mxu0 0
        %551 = vmatprep.subr.bf16.mxu0 0
        %552 = vmatpush1.bf16.xpose.msra.mxu0 0
        %553 = vmatprep.subr.bf16.mxu0 0
        %554 = vmatpush1.bf16.xpose.msra.mxu0 0
        %555 = vmatprep.subr.bf16.mxu0 0
        %556 = vmatpush1.bf16.xpose.msra.mxu0 0
        %557 = vmatprep.subr.bf16.mxu0 0
        %558 = vmatpush1.bf16.xpose.msra.mxu0 0
        %559 = vmatprep.subr.bf16.mxu0 0
        %560 = vmatpush1.bf16.xpose.msra.mxu0 0
        %561 = vmatprep.subr.bf16.mxu0 0
        %562 = vmatpush1.bf16.xpose.msra.mxu0 0
        %563 = vmatprep.subr.bf16.mxu0 0
        %564 = vmatpush1.bf16.xpose.msra.mxu0 0
        %565 = vmatprep.subr.bf16.mxu0 0
        %566 = vmatpush1.bf16.xpose.msra.mxu0 0
        %567 = vmatprep.subr.bf16.mxu0 0
        %568 = vmatpush1.bf16.xpose.msra.mxu0 0
        %569 = vmatprep.subr.bf16.mxu0 0
        %570 = vmatpush1.bf16.xpose.msra.mxu0 0
        %571 = vmatprep.subr.bf16.mxu0 0
        %572 = vmatpush1.bf16.xpose.msra.mxu0 0
        %573 = vmatprep.subr.bf16.mxu0 0
        %574 = vmatpush1.bf16.xpose.msra.mxu0 0
        %575 = vmatprep.subr.bf16.mxu0 0
        %576 = vmatpush1.bf16.xpose.msra.mxu0 0
        %577 = vmatprep.mubr.bf16.mxu0 0
        %578 = vmatmul.mubr.bf16.gmra.mrb[0].mxu0 %v540
        %v579 = vpop.f32.mrb[0].mxu0
        %v580 = vadd.f32 0.0, %v579
        %v581 = vpop.f32.mrb[0].mxu0
        %v582 = vpop.f32.mrb[0].mxu0
        %v583 = vpop.f32.mrb[0].mxu0
        %584 = vdwg.mxu0
        %v585 = vsel %vm356, %v580, -inf
        %586 = vmax.xlane.f32.xlu0 %v585
        %v587 = vpop.xlane.xlu0 %586
        %v588 = vsub.f32 %v580, %v587
        %v589 = vmul.f32 %v588, 1.442695
        %v590 = vpow.pop %v589
        %v591 = vsel %vm356, %v590, 0.0
        %592 = vadd.xlane.f32.xlu0 %v591
        %v593 = vpop.xlane.xlu0 %592
        %v594 = vrcp.pop %v593
        %v595 = vmul.f32 %v590, %v594
        %v596 = vpack.c.bf16 %v595, %v595
        %597 = vrot.lane.b32.xlu0 %v305, 56
        %v598 = vpop.permute.xlu0 %597
        %v600 = vsel %vm356, %v596, 0
        %v603 = vsel %vm374, %v598, 0
        %605 = vmatprep.subr.bf16.mxu0 0
        %606 = vmatpush1.bf16.msra.mxu0 %v603
        %607 = vmatprep.subr.bf16.mxu0 0
        %608 = vmatpush1.bf16.msra.mxu0 0
        %609 = vmatprep.subr.bf16.mxu0 0
        %610 = vmatpush1.bf16.msra.mxu0 0
        %611 = vmatprep.subr.bf16.mxu0 0
        %612 = vmatpush1.bf16.msra.mxu0 0
        %613 = vmatprep.subr.bf16.mxu0 0
        %614 = vmatpush1.bf16.msra.mxu0 0
        %615 = vmatprep.subr.bf16.mxu0 0
        %616 = vmatpush1.bf16.msra.mxu0 0
        %617 = vmatprep.subr.bf16.mxu0 0
        %618 = vmatpush1.bf16.msra.mxu0 0
        %619 = vmatprep.subr.bf16.mxu0 0
        %620 = vmatpush1.bf16.msra.mxu0 0
        %621 = vmatprep.subr.bf16.mxu0 0
        %622 = vmatpush1.bf16.msra.mxu0 0
        %623 = vmatprep.subr.bf16.mxu0 0
        %624 = vmatpush1.bf16.msra.mxu0 0
        %625 = vmatprep.subr.bf16.mxu0 0
        %626 = vmatpush1.bf16.msra.mxu0 0
        %627 = vmatprep.subr.bf16.mxu0 0
        %628 = vmatpush1.bf16.msra.mxu0 0
        %629 = vmatprep.subr.bf16.mxu0 0
        %630 = vmatpush1.bf16.msra.mxu0 0
        %631 = vmatprep.subr.bf16.mxu0 0
        %632 = vmatpush1.bf16.msra.mxu0 0
        %633 = vmatprep.subr.bf16.mxu0 0
        %634 = vmatpush1.bf16.msra.mxu0 0
        %635 = vmatprep.subr.bf16.mxu0 0
        %636 = vmatpush1.bf16.msra.mxu0 0
        %637 = vmatprep.mubr.bf16.mxu0 0
        %638 = vmatmul.mubr.bf16.gmra.mrb[0].mxu0 %v600
        %v639 = vpop.f32.mrb[0].mxu0
        %v640 = vadd.f32 0.0, %v639
        %v641 = vpop.f32.mrb[0].mxu0
        %v642 = vpop.f32.mrb[0].mxu0
        %v643 = vpop.f32.mrb[0].mxu0
        %644 = vdwg.mxu0
        %646 = vrot.lane.b32.xlu0 %v640, 8
        %v647 = vpop.permute.xlu0 %646
        %vm649 = vcmask 97344
        %650 = vst.msk [vmem:[#allocation2] sm:$0xff] %vm649, %v647
        %651 = vrot.lane.b32.xlu0 %v305, 116
        %v652 = vpop.permute.xlu0 %651
        %653 = vrot.lane.b32.xlu0 %v305, 84
        %v654 = vpop.permute.xlu0 %653
        %v656 = vsel %vm309, %v652, 0
        %v659 = vsel %vm309, %v654, 0
        %661 = vmatprep.subr.bf16.mxu0 0
        %662 = vmatpush1.bf16.xpose.msra.mxu0 %v659
        %663 = vmatprep.subr.bf16.mxu0 0
        %664 = vmatpush1.bf16.xpose.msra.mxu0 0
        %665 = vmatprep.subr.bf16.mxu0 0
        %666 = vmatpush1.bf16.xpose.msra.mxu0 0
        %667 = vmatprep.subr.bf16.mxu0 0
        %668 = vmatpush1.bf16.xpose.msra.mxu0 0
        %669 = vmatprep.subr.bf16.mxu0 0
        %670 = vmatpush1.bf16.xpose.msra.mxu0 0
        %671 = vmatprep.subr.bf16.mxu0 0
        %672 = vmatpush1.bf16.xpose.msra.mxu0 0
        %673 = vmatprep.subr.bf16.mxu0 0
        %674 = vmatpush1.bf16.xpose.msra.mxu0 0
        %675 = vmatprep.subr.bf16.mxu0 0
        %676 = vmatpush1.bf16.xpose.msra.mxu0 0
        %677 = vmatprep.subr.bf16.mxu0 0
        %678 = vmatpush1.bf16.xpose.msra.mxu0 0
        %679 = vmatprep.subr.bf16.mxu0 0
        %680 = vmatpush1.bf16.xpose.msra.mxu0 0
        %681 = vmatprep.subr.bf16.mxu0 0
        %682 = vmatpush1.bf16.xpose.msra.mxu0 0
        %683 = vmatprep.subr.bf16.mxu0 0
        %684 = vmatpush1.bf16.xpose.msra.mxu0 0
        %685 = vmatprep.subr.bf16.mxu0 0
        %686 = vmatpush1.bf16.xpose.msra.mxu0 0
        %687 = vmatprep.subr.bf16.mxu0 0
        %688 = vmatpush1.bf16.xpose.msra.mxu0 0
        %689 = vmatprep.subr.bf16.mxu0 0
        %690 = vmatpush1.bf16.xpose.msra.mxu0 0
        %691 = vmatprep.subr.bf16.mxu0 0
        %692 = vmatpush1.bf16.xpose.msra.mxu0 0
        %693 = vmatprep.mubr.bf16.mxu0 0
        %694 = vmatmul.mubr.bf16.gmra.mrb[0].mxu0 %v656
        %v695 = vpop.f32.mrb[0].mxu0
        %v696 = vadd.f32 0.0, %v695
        %v697 = vpop.f32.mrb[0].mxu0
        %v698 = vpop.f32.mrb[0].mxu0
        %v699 = vpop.f32.mrb[0].mxu0
        %700 = vdwg.mxu0
        %v701 = vsel %vm356, %v696, -inf
        %702 = vmax.xlane.f32.xlu0 %v701
        %v703 = vpop.xlane.xlu0 %702
        %v704 = vsub.f32 %v696, %v703
        %v705 = vmul.f32 %v704, 1.442695
        %v706 = vpow.pop %v705
        %v707 = vsel %vm356, %v706, 0.0
        %708 = vadd.xlane.f32.xlu0 %v707
        %v709 = vpop.xlane.xlu0 %708
        %v710 = vrcp.pop %v709
        %v711 = vmul.f32 %v706, %v710
        %v712 = vpack.c.bf16 %v711, %v711
        %713 = vrot.lane.b32.xlu0 %v305, 52
        %v714 = vpop.permute.xlu0 %713
        %v716 = vsel %vm356, %v712, 0
        %v719 = vsel %vm374, %v714, 0
        %721 = vmatprep.subr.bf16.mxu0 0
        %722 = vmatpush1.bf16.msra.mxu0 %v719
        %723 = vmatprep.subr.bf16.mxu0 0
        %724 = vmatpush1.bf16.msra.mxu0 0
        %725 = vmatprep.subr.bf16.mxu0 0
        %726 = vmatpush1.bf16.msra.mxu0 0
        %727 = vmatprep.subr.bf16.mxu0 0
        %728 = vmatpush1.bf16.msra.mxu0 0
        %729 = vmatprep.subr.bf16.mxu0 0
        %730 = vmatpush1.bf16.msra.mxu0 0
        %731 = vmatprep.subr.bf16.mxu0 0
        %732 = vmatpush1.bf16.msra.mxu0 0
        %733 = vmatprep.subr.bf16.mxu0 0
        %734 = vmatpush1.bf16.msra.mxu0 0
        %735 = vmatprep.subr.bf16.mxu0 0
        %736 = vmatpush1.bf16.msra.mxu0 0
        %737 = vmatprep.subr.bf16.mxu0 0
        %738 = vmatpush1.bf16.msra.mxu0 0
        %739 = vmatprep.subr.bf16.mxu0 0
        %740 = vmatpush1.bf16.msra.mxu0 0
        %741 = vmatprep.subr.bf16.mxu0 0
        %742 = vmatpush1.bf16.msra.mxu0 0
        %743 = vmatprep.subr.bf16.mxu0 0
        %744 = vmatpush1.bf16.msra.mxu0 0
        %745 = vmatprep.subr.bf16.mxu0 0
        %746 = vmatpush1.bf16.msra.mxu0 0
        %747 = vmatprep.subr.bf16.mxu0 0
        %748 = vmatpush1.bf16.msra.mxu0 0
        %749 = vmatprep.subr.bf16.mxu0 0
        %750 = vmatpush1.bf16.msra.mxu0 0
        %751 = vmatprep.subr.bf16.mxu0 0
        %752 = vmatpush1.bf16.msra.mxu0 0
        %753 = vmatprep.mubr.bf16.mxu0 0
        %754 = vmatmul.mubr.bf16.gmra.mrb[0].mxu0 %v716
        %v755 = vpop.f32.mrb[0].mxu0
        %v756 = vadd.f32 0.0, %v755
        %v757 = vpop.f32.mrb[0].mxu0
        %v758 = vpop.f32.mrb[0].mxu0
        %v759 = vpop.f32.mrb[0].mxu0
        %760 = vdwg.mxu0
        %762 = vrot.lane.b32.xlu0 %v756, 12
        %v763 = vpop.permute.xlu0 %762
        %vm765 = vcmask 130144
        %766 = vst.msk [vmem:[#allocation2] sm:$0xff] %vm765, %v763
        %767 = vrot.lane.b32.xlu0 %v305, 112
        %v768 = vpop.permute.xlu0 %767
        %769 = vrot.lane.b32.xlu0 %v305, 80
        %v770 = vpop.permute.xlu0 %769
        %v772 = vsel %vm309, %v768, 0
        %v775 = vsel %vm309, %v770, 0
        %777 = vmatprep.subr.bf16.mxu0 0
        %778 = vmatpush1.bf16.xpose.msra.mxu0 %v775
        %779 = vmatprep.subr.bf16.mxu0 0
        %780 = vmatpush1.bf16.xpose.msra.mxu0 0
        %781 = vmatprep.subr.bf16.mxu0 0
        %782 = vmatpush1.bf16.xpose.msra.mxu0 0
        %783 = vmatprep.subr.bf16.mxu0 0
        %784 = vmatpush1.bf16.xpose.msra.mxu0 0
        %785 = vmatprep.subr.bf16.mxu0 0
        %786 = vmatpush1.bf16.xpose.msra.mxu0 0
        %787 = vmatprep.subr.bf16.mxu0 0
        %788 = vmatpush1.bf16.xpose.msra.mxu0 0
        %789 = vmatprep.subr.bf16.mxu0 0
        %790 = vmatpush1.bf16.xpose.msra.mxu0 0
        %791 = vmatprep.subr.bf16.mxu0 0
        %792 = vmatpush1.bf16.xpose.msra.mxu0 0
        %793 = vmatprep.subr.bf16.mxu0 0
        %794 = vmatpush1.bf16.xpose.msra.mxu0 0
        %795 = vmatprep.subr.bf16.mxu0 0
        %796 = vmatpush1.bf16.xpose.msra.mxu0 0
        %797 = vmatprep.subr.bf16.mxu0 0
        %798 = vmatpush1.bf16.xpose.msra.mxu0 0
        %799 = vmatprep.subr.bf16.mxu0 0
        %800 = vmatpush1.bf16.xpose.msra.mxu0 0
        %801 = vmatprep.subr.bf16.mxu0 0
        %802 = vmatpush1.bf16.xpose.msra.mxu0 0
        %803 = vmatprep.subr.bf16.mxu0 0
        %804 = vmatpush1.bf16.xpose.msra.mxu0 0
        %805 = vmatprep.subr.bf16.mxu0 0
        %806 = vmatpush1.bf16.xpose.msra.mxu0 0
        %807 = vmatprep.subr.bf16.mxu0 0
        %808 = vmatpush1.bf16.xpose.msra.mxu0 0
        %809 = vmatprep.mubr.bf16.mxu0 0
        %810 = vmatmul.mubr.bf16.gmra.mrb[0].mxu0 %v772
        %v811 = vpop.f32.mrb[0].mxu0
        %v812 = vadd.f32 0.0, %v811
        %v813 = vpop.f32.mrb[0].mxu0
        %v814 = vpop.f32.mrb[0].mxu0
        %v815 = vpop.f32.mrb[0].mxu0
        %816 = vdwg.mxu0
        %v817 = vsel %vm356, %v812, -inf
        %818 = vmax.xlane.f32.xlu0 %v817
        %v819 = vpop.xlane.xlu0 %818
        %v820 = vsub.f32 %v812, %v819
        %v821 = vmul.f32 %v820, 1.442695
        %v822 = vpow.pop %v821
        %v823 = vsel %vm356, %v822, 0.0
        %824 = vadd.xlane.f32.xlu0 %v823
        %v825 = vpop.xlane.xlu0 %824
        %v826 = vrcp.pop %v825
        %v827 = vmul.f32 %v822, %v826
        %v828 = vpack.c.bf16 %v827, %v827
        %829 = vrot.lane.b32.xlu0 %v305, 48
        %v830 = vpop.permute.xlu0 %829
        %v832 = vsel %vm356, %v828, 0
        %v835 = vsel %vm374, %v830, 0
        %837 = vmatprep.subr.bf16.mxu0 0
        %838 = vmatpush1.bf16.msra.mxu0 %v835
        %839 = vmatprep.subr.bf16.mxu0 0
        %840 = vmatpush1.bf16.msra.mxu0 0
        %841 = vmatprep.subr.bf16.mxu0 0
        %842 = vmatpush1.bf16.msra.mxu0 0
        %843 = vmatprep.subr.bf16.mxu0 0
        %844 = vmatpush1.bf16.msra.mxu0 0
        %845 = vmatprep.subr.bf16.mxu0 0
        %846 = vmatpush1.bf16.msra.mxu0 0
        %847 = vmatprep.subr.bf16.mxu0 0
        %848 = vmatpush1.bf16.msra.mxu0 0
        %849 = vmatprep.subr.bf16.mxu0 0
        %850 = vmatpush1.bf16.msra.mxu0 0
        %851 = vmatprep.subr.bf16.mxu0 0
        %852 = vmatpush1.bf16.msra.mxu0 0
        %853 = vmatprep.subr.bf16.mxu0 0
        %854 = vmatpush1.bf16.msra.mxu0 0
        %855 = vmatprep.subr.bf16.mxu0 0
        %856 = vmatpush1.bf16.msra.mxu0 0
        %857 = vmatprep.subr.bf16.mxu0 0
        %858 = vmatpush1.bf16.msra.mxu0 0
        %859 = vmatprep.subr.bf16.mxu0 0
        %860 = vmatpush1.bf16.msra.mxu0 0
        %861 = vmatprep.subr.bf16.mxu0 0
        %862 = vmatpush1.bf16.msra.mxu0 0
        %863 = vmatprep.subr.bf16.mxu0 0
        %864 = vmatpush1.bf16.msra.mxu0 0
        %865 = vmatprep.subr.bf16.mxu0 0
        %866 = vmatpush1.bf16.msra.mxu0 0
        %867 = vmatprep.subr.bf16.mxu0 0
        %868 = vmatpush1.bf16.msra.mxu0 0
        %869 = vmatprep.mubr.bf16.mxu0 0
        %870 = vmatmul.mubr.bf16.gmra.mrb[0].mxu0 %v832
        %v871 = vpop.f32.mrb[0].mxu0
        %v872 = vadd.f32 0.0, %v871
        %v873 = vpop.f32.mrb[0].mxu0
        %v874 = vpop.f32.mrb[0].mxu0
        %v875 = vpop.f32.mrb[0].mxu0
        %876 = vdwg.mxu0
        %878 = vrot.lane.b32.xlu0 %v872, 16
        %v879 = vpop.permute.xlu0 %878
        %vm881 = vcmask 162944
        %882 = vst.msk [vmem:[#allocation2] sm:$0xff] %vm881, %v879
        %883 = vrot.lane.b32.xlu0 %v305, 108
        %v884 = vpop.permute.xlu0 %883
        %885 = vrot.lane.b32.xlu0 %v305, 76
        %v886 = vpop.permute.xlu0 %885
        %v888 = vsel %vm309, %v884, 0
        %v891 = vsel %vm309, %v886, 0
        %893 = vmatprep.subr.bf16.mxu0 0
        %894 = vmatpush1.bf16.xpose.msra.mxu0 %v891
        %895 = vmatprep.subr.bf16.mxu0 0
        %896 = vmatpush1.bf16.xpose.msra.mxu0 0
        %897 = vmatprep.subr.bf16.mxu0 0
        %898 = vmatpush1.bf16.xpose.msra.mxu0 0
        %899 = vmatprep.subr.bf16.mxu0 0
        %900 = vmatpush1.bf16.xpose.msra.mxu0 0
        %901 = vmatprep.subr.bf16.mxu0 0
        %902 = vmatpush1.bf16.xpose.msra.mxu0 0
        %903 = vmatprep.subr.bf16.mxu0 0
        %904 = vmatpush1.bf16.xpose.msra.mxu0 0
        %905 = vmatprep.subr.bf16.mxu0 0
        %906 = vmatpush1.bf16.xpose.msra.mxu0 0
        %907 = vmatprep.subr.bf16.mxu0 0
        %908 = vmatpush1.bf16.xpose.msra.mxu0 0
        %909 = vmatprep.subr.bf16.mxu0 0
        %910 = vmatpush1.bf16.xpose.msra.mxu0 0
        %911 = vmatprep.subr.bf16.mxu0 0
        %912 = vmatpush1.bf16.xpose.msra.mxu0 0
        %913 = vmatprep.subr.bf16.mxu0 0
        %914 = vmatpush1.bf16.xpose.msra.mxu0 0
        %915 = vmatprep.subr.bf16.mxu0 0
        %916 = vmatpush1.bf16.xpose.msra.mxu0 0
        %917 = vmatprep.subr.bf16.mxu0 0
        %918 = vmatpush1.bf16.xpose.msra.mxu0 0
        %919 = vmatprep.subr.bf16.mxu0 0
        %920 = vmatpush1.bf16.xpose.msra.mxu0 0
        %921 = vmatprep.subr.bf16.mxu0 0
        %922 = vmatpush1.bf16.xpose.msra.mxu0 0
        %923 = vmatprep.subr.bf16.mxu0 0
        %924 = vmatpush1.bf16.xpose.msra.mxu0 0
        %925 = vmatprep.mubr.bf16.mxu0 0
        %926 = vmatmul.mubr.bf16.gmra.mrb[0].mxu0 %v888
        %v927 = vpop.f32.mrb[0].mxu0
        %v928 = vadd.f32 0.0, %v927
        %v929 = vpop.f32.mrb[0].mxu0
        %v930 = vpop.f32.mrb[0].mxu0
        %v931 = vpop.f32.mrb[0].mxu0
        %932 = vdwg.mxu0
        %v933 = vsel %vm356, %v928, -inf
        %934 = vmax.xlane.f32.xlu0 %v933
        %v935 = vpop.xlane.xlu0 %934
        %v936 = vsub.f32 %v928, %v935
        %v937 = vmul.f32 %v936, 1.442695
        %v938 = vpow.pop %v937
        %v939 = vsel %vm356, %v938, 0.0
        %940 = vadd.xlane.f32.xlu0 %v939
        %v941 = vpop.xlane.xlu0 %940
        %v942 = vrcp.pop %v941
        %v943 = vmul.f32 %v938, %v942
        %v944 = vpack.c.bf16 %v943, %v943
        %945 = vrot.lane.b32.xlu0 %v305, 44
        %v946 = vpop.permute.xlu0 %945
        %v948 = vsel %vm356, %v944, 0
        %v951 = vsel %vm374, %v946, 0
        %953 = vmatprep.subr.bf16.mxu0 0
        %954 = vmatpush1.bf16.msra.mxu0 %v951
        %955 = vmatprep.subr.bf16.mxu0 0
        %956 = vmatpush1.bf16.msra.mxu0 0
        %957 = vmatprep.subr.bf16.mxu0 0
        %958 = vmatpush1.bf16.msra.mxu0 0
        %959 = vmatprep.subr.bf16.mxu0 0
        %960 = vmatpush1.bf16.msra.mxu0 0
        %961 = vmatprep.subr.bf16.mxu0 0
        %962 = vmatpush1.bf16.msra.mxu0 0
        %963 = vmatprep.subr.bf16.mxu0 0
        %964 = vmatpush1.bf16.msra.mxu0 0
        %965 = vmatprep.subr.bf16.mxu0 0
        %966 = vmatpush1.bf16.msra.mxu0 0
        %967 = vmatprep.subr.bf16.mxu0 0
        %968 = vmatpush1.bf16.msra.mxu0 0
        %969 = vmatprep.subr.bf16.mxu0 0
        %970 = vmatpush1.bf16.msra.mxu0 0
        %971 = vmatprep.subr.bf16.mxu0 0
        %972 = vmatpush1.bf16.msra.mxu0 0
        %973 = vmatprep.subr.bf16.mxu0 0
        %974 = vmatpush1.bf16.msra.mxu0 0
        %975 = vmatprep.subr.bf16.mxu0 0
        %976 = vmatpush1.bf16.msra.mxu0 0
        %977 = vmatprep.subr.bf16.mxu0 0
        %978 = vmatpush1.bf16.msra.mxu0 0
        %979 = vmatprep.subr.bf16.mxu0 0
        %980 = vmatpush1.bf16.msra.mxu0 0
        %981 = vmatprep.subr.bf16.mxu0 0
        %982 = vmatpush1.bf16.msra.mxu0 0
        %983 = vmatprep.subr.bf16.mxu0 0
        %984 = vmatpush1.bf16.msra.mxu0 0
        %985 = vmatprep.mubr.bf16.mxu0 0
        %986 = vmatmul.mubr.bf16.gmra.mrb[0].mxu0 %v948
        %v987 = vpop.f32.mrb[0].mxu0
        %v988 = vadd.f32 0.0, %v987
        %v989 = vpop.f32.mrb[0].mxu0
        %v990 = vpop.f32.mrb[0].mxu0
        %v991 = vpop.f32.mrb[0].mxu0
        %992 = vdwg.mxu0
        %994 = vrot.lane.b32.xlu0 %v988, 20
        %v995 = vpop.permute.xlu0 %994
        %vm997 = vcmask 195744
        %998 = vst.msk [vmem:[#allocation2] sm:$0xff] %vm997, %v995
        %999 = vrot.lane.b32.xlu0 %v305, 104
        %v1000 = vpop.permute.xlu0 %999
        %1001 = vrot.lane.b32.xlu0 %v305, 72
        %v1002 = vpop.permute.xlu0 %1001
        %v1004 = vsel %vm309, %v1000, 0
        %v1007 = vsel %vm309, %v1002, 0
        %1009 = vmatprep.subr.bf16.mxu0 0
        %1010 = vmatpush1.bf16.xpose.msra.mxu0 %v1007
        %1011 = vmatprep.subr.bf16.mxu0 0
        %1012 = vmatpush1.bf16.xpose.msra.mxu0 0
        %1013 = vmatprep.subr.bf16.mxu0 0
        %1014 = vmatpush1.bf16.xpose.msra.mxu0 0
        %1015 = vmatprep.subr.bf16.mxu0 0
        %1016 = vmatpush1.bf16.xpose.msra.mxu0 0
        %1017 = vmatprep.subr.bf16.mxu0 0
        %1018 = vmatpush1.bf16.xpose.msra.mxu0 0
        %1019 = vmatprep.subr.bf16.mxu0 0
        %1020 = vmatpush1.bf16.xpose.msra.mxu0 0
        %1021 = vmatprep.subr.bf16.mxu0 0
        %1022 = vmatpush1.bf16.xpose.msra.mxu0 0
        %1023 = vmatprep.subr.bf16.mxu0 0
        %1024 = vmatpush1.bf16.xpose.msra.mxu0 0
        %1025 = vmatprep.subr.bf16.mxu0 0
        %1026 = vmatpush1.bf16.xpose.msra.mxu0 0
        %1027 = vmatprep.subr.bf16.mxu0 0
        %1028 = vmatpush1.bf16.xpose.msra.mxu0 0
        %1029 = vmatprep.subr.bf16.mxu0 0
        %1030 = vmatpush1.bf16.xpose.msra.mxu0 0
        %1031 = vmatprep.subr.bf16.mxu0 0
        %1032 = vmatpush1.bf16.xpose.msra.mxu0 0
        %1033 = vmatprep.subr.bf16.mxu0 0
        %1034 = vmatpush1.bf16.xpose.msra.mxu0 0
        %1035 = vmatprep.subr.bf16.mxu0 0
        %1036 = vmatpush1.bf16.xpose.msra.mxu0 0
        %1037 = vmatprep.subr.bf16.mxu0 0
        %1038 = vmatpush1.bf16.xpose.msra.mxu0 0
        %1039 = vmatprep.subr.bf16.mxu0 0
        %1040 = vmatpush1.bf16.xpose.msra.mxu0 0
        %1041 = vmatprep.mubr.bf16.mxu0 0
        %1042 = vmatmul.mubr.bf16.gmra.mrb[0].mxu0 %v1004
        %v1043 = vpop.f32.mrb[0].mxu0
        %v1044 = vadd.f32 0.0, %v1043
        %v1045 = vpop.f32.mrb[0].mxu0
        %v1046 = vpop.f32.mrb[0].mxu0
        %v1047 = vpop.f32.mrb[0].mxu0
        %1048 = vdwg.mxu0
        %v1049 = vsel %vm356, %v1044, -inf
        %1050 = vmax.xlane.f32.xlu0 %v1049
        %v1051 = vpop.xlane.xlu0 %1050
        %v1052 = vsub.f32 %v1044, %v1051
        %v1053 = vmul.f32 %v1052, 1.442695
        %v1054 = vpow.pop %v1053
        %v1055 = vsel %vm356, %v1054, 0.0
        %1056 = vadd.xlane.f32.xlu0 %v1055
        %v1057 = vpop.xlane.xlu0 %1056
        %v1058 = vrcp.pop %v1057
        %v1059 = vmul.f32 %v1054, %v1058
        %v1060 = vpack.c.bf16 %v1059, %v1059
        %1061 = vrot.lane.b32.xlu0 %v305, 40
        %v1062 = vpop.permute.xlu0 %1061
        %v1064 = vsel %vm356, %v1060, 0
        %v1067 = vsel %vm374, %v1062, 0
        %1069 = vmatprep.subr.bf16.mxu0 0
        %1070 = vmatpush1.bf16.msra.mxu0 %v1067
        %1071 = vmatprep.subr.bf16.mxu0 0
        %1072 = vmatpush1.bf16.msra.mxu0 0
        %1073 = vmatprep.subr.bf16.mxu0 0
        %1074 = vmatpush1.bf16.msra.mxu0 0
        %1075 = vmatprep.subr.bf16.mxu0 0
        %1076 = vmatpush1.bf16.msra.mxu0 0
        %1077 = vmatprep.subr.bf16.mxu0 0
        %1078 = vmatpush1.bf16.msra.mxu0 0
        %1079 = vmatprep.subr.bf16.mxu0 0
        %1080 = vmatpush1.bf16.msra.mxu0 0
        %1081 = vmatprep.subr.bf16.mxu0 0
        %1082 = vmatpush1.bf16.msra.mxu0 0
        %1083 = vmatprep.subr.bf16.mxu0 0
        %1084 = vmatpush1.bf16.msra.mxu0 0
        %1085 = vmatprep.subr.bf16.mxu0 0
        %1086 = vmatpush1.bf16.msra.mxu0 0
        %1087 = vmatprep.subr.bf16.mxu0 0
        %1088 = vmatpush1.bf16.msra.mxu0 0
        %1089 = vmatprep.subr.bf16.mxu0 0
        %1090 = vmatpush1.bf16.msra.mxu0 0
        %1091 = vmatprep.subr.bf16.mxu0 0
        %1092 = vmatpush1.bf16.msra.mxu0 0
        %1093 = vmatprep.subr.bf16.mxu0 0
        %1094 = vmatpush1.bf16.msra.mxu0 0
        %1095 = vmatprep.subr.bf16.mxu0 0
        %1096 = vmatpush1.bf16.msra.mxu0 0
        %1097 = vmatprep.subr.bf16.mxu0 0
        %1098 = vmatpush1.bf16.msra.mxu0 0
        %1099 = vmatprep.subr.bf16.mxu0 0
        %1100 = vmatpush1.bf16.msra.mxu0 0
        %1101 = vmatprep.mubr.bf16.mxu0 0
        %1102 = vmatmul.mubr.bf16.gmra.mrb[0].mxu0 %v1064
        %v1103 = vpop.f32.mrb[0].mxu0
        %v1104 = vadd.f32 0.0, %v1103
        %v1105 = vpop.f32.mrb[0].mxu0
        %v1106 = vpop.f32.mrb[0].mxu0
        %v1107 = vpop.f32.mrb[0].mxu0
        %1108 = vdwg.mxu0
        %1110 = vrot.lane.b32.xlu0 %v1104, 24
        %v1111 = vpop.permute.xlu0 %1110
        %vm1113 = vcmask 228544
        %1114 = vst.msk [vmem:[#allocation2] sm:$0xff] %vm1113, %v1111
        %1115 = vrot.lane.b32.xlu0 %v305, 100
        %v1116 = vpop.permute.xlu0 %1115
        %1117 = vrot.lane.b32.xlu0 %v305, 68
        %v1118 = vpop.permute.xlu0 %1117
        %v1120 = vsel %vm309, %v1116, 0
        %v1123 = vsel %vm309, %v1118, 0
        %1125 = vmatprep.subr.bf16.mxu0 0
        %1126 = vmatpush1.bf16.xpose.msra.mxu0 %v1123
        %1127 = vmatprep.subr.bf16.mxu0 0
        %1128 = vmatpush1.bf16.xpose.msra.mxu0 0
        %1129 = vmatprep.subr.bf16.mxu0 0
        %1130 = vmatpush1.bf16.xpose.msra.mxu0 0
        %1131 = vmatprep.subr.bf16.mxu0 0
        %1132 = vmatpush1.bf16.xpose.msra.mxu0 0
        %1133 = vmatprep.subr.bf16.mxu0 0
        %1134 = vmatpush1.bf16.xpose.msra.mxu0 0
        %1135 = vmatprep.subr.bf16.mxu0 0
        %1136 = vmatpush1.bf16.xpose.msra.mxu0 0
        %1137 = vmatprep.subr.bf16.mxu0 0
        %1138 = vmatpush1.bf16.xpose.msra.mxu0 0
        %1139 = vmatprep.subr.bf16.mxu0 0
        %1140 = vmatpush1.bf16.xpose.msra.mxu0 0
        %1141 = vmatprep.subr.bf16.mxu0 0
        %1142 = vmatpush1.bf16.xpose.msra.mxu0 0
        %1143 = vmatprep.subr.bf16.mxu0 0
        %1144 = vmatpush1.bf16.xpose.msra.mxu0 0
        %1145 = vmatprep.subr.bf16.mxu0 0
        %1146 = vmatpush1.bf16.xpose.msra.mxu0 0
        %1147 = vmatprep.subr.bf16.mxu0 0
        %1148 = vmatpush1.bf16.xpose.msra.mxu0 0
        %1149 = vmatprep.subr.bf16.mxu0 0
        %1150 = vmatpush1.bf16.xpose.msra.mxu0 0
        %1151 = vmatprep.subr.bf16.mxu0 0
        %1152 = vmatpush1.bf16.xpose.msra.mxu0 0
        %1153 = vmatprep.subr.bf16.mxu0 0
        %1154 = vmatpush1.bf16.xpose.msra.mxu0 0
        %1155 = vmatprep.subr.bf16.mxu0 0
        %1156 = vmatpush1.bf16.xpose.msra.mxu0 0
        %1157 = vmatprep.mubr.bf16.mxu0 0
        %1158 = vmatmul.mubr.bf16.gmra.mrb[0].mxu0 %v1120
        %v1159 = vpop.f32.mrb[0].mxu0
        %v1160 = vadd.f32 0.0, %v1159
        %v1161 = vpop.f32.mrb[0].mxu0
        %v1162 = vpop.f32.mrb[0].mxu0
        %v1163 = vpop.f32.mrb[0].mxu0
        %1164 = vdwg.mxu0
        %v1165 = vsel %vm356, %v1160, -inf
        %1166 = vmax.xlane.f32.xlu0 %v1165
        %v1167 = vpop.xlane.xlu0 %1166
        %v1168 = vsub.f32 %v1160, %v1167
        %v1169 = vmul.f32 %v1168, 1.442695
        %v1170 = vpow.pop %v1169
        %v1171 = vsel %vm356, %v1170, 0.0
        %1172 = vadd.xlane.f32.xlu0 %v1171
        %v1173 = vpop.xlane.xlu0 %1172
        %v1174 = vrcp.pop %v1173
        %v1175 = vmul.f32 %v1170, %v1174
        %v1176 = vpack.c.bf16 %v1175, %v1175
        %1177 = vrot.lane.b32.xlu0 %v305, 36
        %v1178 = vpop.permute.xlu0 %1177
        %v1180 = vsel %vm356, %v1176, 0
        %v1183 = vsel %vm374, %v1178, 0
        %1185 = vmatprep.subr.bf16.mxu0 0
        %1186 = vmatpush1.bf16.msra.mxu0 %v1183
        %1187 = vmatprep.subr.bf16.mxu0 0
        %1188 = vmatpush1.bf16.msra.mxu0 0
        %1189 = vmatprep.subr.bf16.mxu0 0
        %1190 = vmatpush1.bf16.msra.mxu0 0
        %1191 = vmatprep.subr.bf16.mxu0 0
        %1192 = vmatpush1.bf16.msra.mxu0 0
        %1193 = vmatprep.subr.bf16.mxu0 0
        %1194 = vmatpush1.bf16.msra.mxu0 0
        %1195 = vmatprep.subr.bf16.mxu0 0
        %1196 = vmatpush1.bf16.msra.mxu0 0
        %1197 = vmatprep.subr.bf16.mxu0 0
        %1198 = vmatpush1.bf16.msra.mxu0 0
        %1199 = vmatprep.subr.bf16.mxu0 0
        %1200 = vmatpush1.bf16.msra.mxu0 0
        %1201 = vmatprep.subr.bf16.mxu0 0
        %1202 = vmatpush1.bf16.msra.mxu0 0
        %1203 = vmatprep.subr.bf16.mxu0 0
        %1204 = vmatpush1.bf16.msra.mxu0 0
        %1205 = vmatprep.subr.bf16.mxu0 0
        %1206 = vmatpush1.bf16.msra.mxu0 0
        %1207 = vmatprep.subr.bf16.mxu0 0
        %1208 = vmatpush1.bf16.msra.mxu0 0
        %1209 = vmatprep.subr.bf16.mxu0 0
        %1210 = vmatpush1.bf16.msra.mxu0 0
        %1211 = vmatprep.subr.bf16.mxu0 0
        %1212 = vmatpush1.bf16.msra.mxu0 0
        %1213 = vmatprep.subr.bf16.mxu0 0
        %1214 = vmatpush1.bf16.msra.mxu0 0
        %1215 = vmatprep.subr.bf16.mxu0 0
        %1216 = vmatpush1.bf16.msra.mxu0 0
        %1217 = vmatprep.mubr.bf16.mxu0 0
        %1218 = vmatmul.mubr.bf16.gmra.mrb[0].mxu0 %v1180
        %v1219 = vpop.f32.mrb[0].mxu0
        %v1220 = vadd.f32 0.0, %v1219
        %v1221 = vpop.f32.mrb[0].mxu0
        %v1222 = vpop.f32.mrb[0].mxu0
        %v1223 = vpop.f32.mrb[0].mxu0
        %1224 = vdwg.mxu0
        %1226 = vrot.lane.b32.xlu0 %v1220, 28
        %v1227 = vpop.permute.xlu0 %1226
        %vm1229 = vcmask 261344
        %1230 = vst.msk [vmem:[#allocation2] sm:$0xff] %vm1229, %v1227
        %v1231 = vld [vmem:[#allocation2] sm:$0xff]
        %v1232 = vpack.c.bf16 %v1231, %v1231
        %v1233 = vld [vmem:[#allocation8] sm:$0xf]
        %v1234 = vld [vmem:[#allocation8 + $0x4] sm:$0xf]
        %v1235 = vld [vmem:[#allocation8 + $0x8] sm:$0xf]
        %v1236 = vld [vmem:[#allocation8 + $0xc] sm:$0xf]
        %v1237 = vld [vmem:[%s3] sm:$0x1]
        %v1239 = vlaneseq
        %v1240 = vshrl.u32 %v1239, 7
        %v1241 = vsub.s32 0, %v1240
        %v1242 = vrot.slane %v1237, %v1241
        %v1248 = vunpack.c.l.b16 %v1233
        %v1249 = vunpack.c.l.b16 %v1234
        %v1250 = vunpack.c.l.b16 %v1235
        %v1251 = vunpack.c.l.b16 %v1236
        %v1252 = vpack.c.b16 %v1249, %v1248
        %v1253 = vpack.c.b16 %v1251, %v1250
        %v1257 = vsel %vm261, %v1232, 0
        %1259 = vmatprep.subr.bf16.mxu0 0
        %1260 = vmatpush1.bf16.msra.mxu0 %v1252
        %1261 = vmatprep.subr.bf16.mxu0 0
        %1262 = vmatpush1.bf16.msra.mxu0 %v1253
        %1263 = vmatprep.subr.bf16.mxu0 0
        %1264 = vmatpush1.bf16.msra.mxu0 0
        %1265 = vmatprep.subr.bf16.mxu0 0
        %1266 = vmatpush1.bf16.msra.mxu0 0
        %1267 = vmatprep.subr.bf16.mxu0 0
        %1268 = vmatpush1.bf16.msra.mxu0 0
        %1269 = vmatprep.subr.bf16.mxu0 0
        %1270 = vmatpush1.bf16.msra.mxu0 0
        %1271 = vmatprep.subr.bf16.mxu0 0
        %1272 = vmatpush1.bf16.msra.mxu0 0
        %1273 = vmatprep.subr.bf16.mxu0 0
        %1274 = vmatpush1.bf16.msra.mxu0 0
        %1275 = vmatprep.subr.bf16.mxu0 0
        %1276 = vmatpush1.bf16.msra.mxu0 0
        %1277 = vmatprep.subr.bf16.mxu0 0
        %1278 = vmatpush1.bf16.msra.mxu0 0
        %1279 = vmatprep.subr.bf16.mxu0 0
        %1280 = vmatpush1.bf16.msra.mxu0 0
        %1281 = vmatprep.subr.bf16.mxu0 0
        %1282 = vmatpush1.bf16.msra.mxu0 0
        %1283 = vmatprep.subr.bf16.mxu0 0
        %1284 = vmatpush1.bf16.msra.mxu0 0
        %1285 = vmatprep.subr.bf16.mxu0 0
        %1286 = vmatpush1.bf16.msra.mxu0 0
        %1287 = vmatprep.subr.bf16.mxu0 0
        %1288 = vmatpush1.bf16.msra.mxu0 0
        %1289 = vmatprep.subr.bf16.mxu0 0
        %1290 = vmatpush1.bf16.msra.mxu0 0
        %1291 = vmatprep.mubr.bf16.mxu0 0
        %1292 = vmatmul.mubr.bf16.gmra.mrb[0].mxu0 %v1257
        %v1293 = vpop.f32.mrb[0].mxu0
        %v1294 = vadd.f32 %v1242, %v1293
        %v1295 = vpop.f32.mrb[0].mxu0
        %v1296 = vpop.f32.mrb[0].mxu0
        %v1297 = vpop.f32.mrb[0].mxu0
        %1298 = vdwg.mxu0
        %1299 = vst.msk [vmem:[%s241] sm:$0xff] %vm261, %v1294
        %s1300 = sand.u32 %s119, 1
        %s1301 = scalar_lea.sflag [#allocation5], %s1300
        %s1302 = sand.u32 %s119, 1
        %s1303 = smul.addr %s1302, 8
        %s1304 = scalar_lea.vmem [#allocation9], %s1303
        // Predicated region
        $region49: #{tpu_custom_call.1} parent=35 // pred_check
          %p1305 = pneg %p129
        $region50: #{tpu_custom_call.1} parent=35 // pred_check_branch
          %1307 = sbr.rel (%p1305) target = $region52
        $region51: #{tpu_custom_call.1} parent=35 // pred_region
          %s1309 = ssub.s32 128, 128
          %1310 = vsyncadd %s1301, %s1309
          %s1311 = smul.addr %s22, 128
          %s1312 = scalar_lea.hbm %s4, %s1311
          %s1314 = sshll.u32 %s1304, 4
          %s1315 = int_to_ptr.vmem [resolvable:$true] %s1314
          %1317 = dma.vmem_to_hbm [thread:$0]  %s1315, 128, %s1312, %s1301
        $region52: #{tpu_custom_call.1} parent=35 // pred_fallthru
          _
      $region36: #{tpu_custom_call.1} parent=5 // pred_fallthru
        _
      %p1318 = scmp.le.s32.totalorder 2, %s17
      // Predicated region
      $region53: #{tpu_custom_call.1} parent=5 // pred_check
        %p1319 = pneg %p1318
      $region54: #{tpu_custom_call.1} parent=5 // pred_check_branch
        %1321 = sbr.rel (%p1319) target = $region56
      $region55: #{tpu_custom_call.1} parent=5 // pred_region
        %s1322 = ssub.s32 %s17, 2
        // Predicated region
        $region57: #{tpu_custom_call.1} parent=55 // pred_check
          %p1323 = pneg %p135
        $region58: #{tpu_custom_call.1} parent=55 // pred_check_branch
          %1325 = sbr.rel (%p1323) target = $region60
        $region59: #{tpu_custom_call.1} parent=55 // pred_region
          %s1326 = sand.u32 %s120, 1
          %s1327 = scalar_lea.sflag [#allocation5], %s1326
          %s1328 = sand.u32 %s120, 1
          %s1329 = smul.addr %s1328, 8
          %s1330 = scalar_lea.vmem [#allocation9], %s1329
          %1331 = dma.done %s1327, 128
        $region60: #{tpu_custom_call.1} parent=55 // pred_fallthru
          _
      $region56: #{tpu_custom_call.1} parent=5 // pred_fallthru
        _
    $region6: #{tpu_custom_call.1} parent=1 // loop_footer
      %s21 = sadd.s32 1, %s17
    $region7: #{tpu_custom_call.1} parent=1 // loop_footer_branch
      %16 = sbr.rel target = $region3
    $region8: #{tpu_custom_call.1} parent=1 // loop_exit
      _
    %1332 = vsyncpa [#allocation4], 1
    %s1333 = scalar_lea.sflag [#allocation4], 1
    %1334 = vsyncpa %s1333, 1
    %1335 = vsyncpa [#allocation7], 1
    %1336 = vsyncpa [#allocation5], 1
    %s1337 = scalar_lea.sflag [#allocation5], 1
    %1338 = vsyncpa %s1337, 1

// kernel: tpu_custom_call.1
$region0: #{tpu_custom_call.1}
  #allocation0 [shape = 'u32[]', space=smem, size = 0x4, offset = 0x4, fixed_abs, tag = 'smem constant byte address 0x4 - core index']
  #allocation1 [shape = 'u32[144,128]{1,0:T(1,128)}', space=vmem, size = 0x12000, scoped, tag = 'internal scratch']
  #allocation2 [shape = 'f32[8,32]{1,0:T(8,128)}', space=vmem, size = 0x1000, scoped, tag = 'scratch operand']
  %s0 = inlined_call_operand.hbm [shape: f32[2,8,32], index: 0, kind: input, shape index: {}]
  %s1 = inlined_call_operand.hbm [shape: bf16[32,96], index: 1, kind: input, shape index: {}]
  %s2 = inlined_call_operand.hbm [shape: bf16[32,32], index: 2, kind: input, shape index: {}]
  %s3 = inlined_call_operand.vmem [shape: f32[1,32], index: 3, kind: input, shape index: {}]
  %s4 = inlined_call_operand.hbm [shape: f32[2,8,32], index: 4, kind: output, shape index: {}]
  %s5 = sld [smem:[#allocation0]]
  $region61: #{tpu_custom_call.1} parent=0
    _
  %s7 = ssub.s32 1, %s5
  %s8 = scalar_select 0, %s7, %s5
  $region1: #{tpu_custom_call.1} parent=0
    #allocation3 [shape = 'u8[8192]{0}', space=vmem, size = 0x2000, scoped, tag = 'input window, operand 0']
    #allocation4 [shape = 's32[2]{0}', space=sflag, size = 0x8, scoped, tag = 'scoped memory for tpu_custom_call.1']
    #allocation5 [shape = 's32[2]{0}', space=sflag, size = 0x8, scoped, tag = 'scoped memory for tpu_custom_call.1']
    #allocation6 [shape = 'u8[8192]{0}', space=vmem, size = 0x2000, scoped, tag = 'input window, operand 1, single buffered']
    #allocation7 [shape = 's32[1]{0}', space=sflag, size = 0x4, scoped, tag = 'scoped memory for tpu_custom_call.1']
    #allocation8 [shape = 'u8[8192]{0}', space=vmem, size = 0x2000, scoped, tag = 'input window, operand 2, single buffered']
    #allocation9 [shape = 'u8[8192]{0}', space=vmem, size = 0x2000, scoped, tag = 'output window, operand 0']
    %9 = vsyncpa [#allocation4], 0
    %s10 = scalar_lea.sflag [#allocation4], 1
    %11 = vsyncpa %s10, 0
    %12 = vsyncpa [#allocation7], 0
    %13 = vsyncpa [#allocation5], 0
    %s14 = scalar_lea.sflag [#allocation5], 1
    %15 = vsyncpa %s14, 0
    loop: start=0, step=1, limit=4
    $region2: #{tpu_custom_call.1} parent=1 // loop_pre_header
      _
    $region3: #{tpu_custom_call.1} parent=1 // loop_header
      %s17 = sphi 0, %s21
      %p18 = scmp.ge.s32.totalorder %s17, 4
      %s27 = sphi 0, %s29
      %s30 = sphi 0, %s27
      %s31 = sphi 0, %s30
      %s47 = sphi 0, %s31
      %s51 = sphi 0, %s51
      %s53 = sphi 0, %s51
      %s54 = sphi 0, %s53
      %s68 = sphi 0, %s54
      %s72 = sphi 0, %s72
      %s74 = sphi 0, %s72
      %s75 = sphi 0, %s74
      %s89 = sphi 0, %s75
      %s93 = sphi 0, %s93
      %s95 = sphi 0, %s93
      %s96 = sphi 0, %s95
      %s110 = sphi 0, %s96
      %s116 = sphi 0, %s118
      %s119 = sphi 0, %s116
      %s120 = sphi 0, %s119
      %s136 = sphi 0, %s120
    $region4: #{tpu_custom_call.1} parent=1 // loop_header_branch
      %20 = sbr.rel (%p18) target = $region8
    $region5: #{tpu_custom_call.1} parent=1 // loop_body
      %s22 = ssub.s32 %s17, 1
      %s23 = ssub.s32 %s17, 2
      %s24 = sadd.s32 %s17, 1
      %s25 = ssub.s32 %s17, %s24
      %p26 = scmp.eq.s32.totalorder %s25, 0
      %s28 = sadd.s32 %s27, 1
      %s29 = scalar_select %p26, %s27, %s28
      %p32 = pneg %p26
      %p33 = scmp.eq.s32.totalorder %s17, 1
      %p34 = por %p32, %p33
      %p35 = scmp.ne.s32.totalorder %s27, %s30
      %p36 = scmp.eq.s32.totalorder %s17, 0
      %p37 = por %p35, %p36
      %p38 = scmp.ne.s32.totalorder %s27, %s30
      %p39 = scmp.eq.s32.totalorder %s22, 1
      %p40 = por %p38, %p39
      %p41 = scmp.ne.s32.totalorder %s30, %s31
      %p42 = scmp.eq.s32.totalorder %s22, 0
      %p43 = por %p41, %p42
      %p44 = scmp.ne.s32.totalorder %s30, %s31
      %p45 = scmp.eq.s32.totalorder %s23, 1
      %p46 = por %p44, %p45
      %p48 = scmp.ne.s32.totalorder %s31, %s47
      %p49 = scmp.eq.s32.totalorder %s23, 0
      %p50 = por %p48, %p49
      %s52 = sadd.s32 %s51, 1
      %p55 = scmp.eq.s32.totalorder %s17, 1
      %p56 = scmp.ne.s32.totalorder %s51, %s53
      %p57 = scmp.eq.s32.totalorder %s17, 0
      %p58 = por %p56, %p57
      %p59 = scmp.ne.s32.totalorder %s51, %s53
      %p60 = scmp.eq.s32.totalorder %s22, 1
      %p61 = por %p59, %p60
      %p62 = scmp.ne.s32.totalorder %s53, %s54
      %p63 = scmp.eq.s32.totalorder %s22, 0
      %p64 = por %p62, %p63
      %p65 = scmp.ne.s32.totalorder %s53, %s54
      %p66 = scmp.eq.s32.totalorder %s23, 1
      %p67 = por %p65, %p66
      %p69 = scmp.ne.s32.totalorder %s54, %s68
      %p70 = scmp.eq.s32.totalorder %s23, 0
      %p71 = por %p69, %p70
      %s73 = sadd.s32 %s72, 1
      %p76 = scmp.eq.s32.totalorder %s17, 1
      %p77 = scmp.ne.s32.totalorder %s72, %s74
      %p78 = scmp.eq.s32.totalorder %s17, 0
      %p79 = por %p77, %p78
      %p80 = scmp.ne.s32.totalorder %s72, %s74
      %p81 = scmp.eq.s32.totalorder %s22, 1
      %p82 = por %p80, %p81
      %p83 = scmp.ne.s32.totalorder %s74, %s75
      %p84 = scmp.eq.s32.totalorder %s22, 0
      %p85 = por %p83, %p84
      %p86 = scmp.ne.s32.totalorder %s74, %s75
      %p87 = scmp.eq.s32.totalorder %s23, 1
      %p88 = por %p86, %p87
      %p90 = scmp.ne.s32.totalorder %s75, %s89
      %p91 = scmp.eq.s32.totalorder %s23, 0
      %p92 = por %p90, %p91
      %s94 = sadd.s32 %s93, 1
      %p97 = scmp.eq.s32.totalorder %s17, 1
      %p98 = scmp.ne.s32.totalorder %s93, %s95
      %p99 = scmp.eq.s32.totalorder %s17, 0
      %p100 = por %p98, %p99
      %p101 = scmp.ne.s32.totalorder %s93, %s95
      %p102 = scmp.eq.s32.totalorder %s22, 1
      %p103 = por %p101, %p102
      %p104 = scmp.ne.s32.totalorder %s95, %s96
      %p105 = scmp.eq.s32.totalorder %s22, 0
      %p106 = por %p104, %p105
      %p107 = scmp.ne.s32.totalorder %s95, %s96
      %p108 = scmp.eq.s32.totalorder %s23, 1
      %p109 = por %p107, %p108
      %p111 = scmp.ne.s32.totalorder %s96, %s110
      %p112 = scmp.eq.s32.totalorder %s23, 0
      %p113 = por %p111, %p112
      %s114 = ssub.s32 %s17, %s24
      %p115 = scmp.eq.s32.totalorder %s114, 0
      %s117 = sadd.s32 %s116, 1
      %s118 = scalar_select %p115, %s116, %s117
      %p121 = pneg %p115
      %p122 = scmp.eq.s32.totalorder %s17, 1
      %p123 = por %p121, %p122
      %p124 = scmp.ne.s32.totalorder %s116, %s119
      %p125 = scmp.eq.s32.totalorder %s17, 0
      %p126 = por %p124, %p125
      %p127 = scmp.ne.s32.totalorder %s116, %s119
      %p128 = scmp.eq.s32.totalorder %s22, 1
      %p129 = por %p127, %p128
      %p130 = scmp.ne.s32.totalorder %s119, %s120
      %p131 = scmp.eq.s32.totalorder %s22, 0
      %p132 = por %p130, %p131
      %p133 = scmp.ne.s32.totalorder %s119, %s120
      %p134 = scmp.eq.s32.totalorder %s23, 1
      %p135 = por %p133, %p134
      %p137 = scmp.ne.s32.totalorder %s120, %s136
      %p138 = scmp.eq.s32.totalorder %s23, 0
      %p139 = por %p137, %p138
      %p140 = scmp.le.s32.totalorder 1, %s17
      %p141 = scmp.lt.s32.totalorder %s17, 3
      %p142 = pnand %p140, %p141
      %p143 = pneg %p142
      // Predicated region
      $region9: #{tpu_custom_call.1} parent=5 // pred_check
        _
      $region10: #{tpu_custom_call.1} parent=5 // pred_check_branch
        %145 = sbr.rel (%p142) target = $region12
      $region11: #{tpu_custom_call.1} parent=5 // pred_region
        %s146 = ssub.s32 %s17, 1
        // Predicated region
        $region13: #{tpu_custom_call.1} parent=11 // pred_check
          %p147 = pneg %p64
        $region14: #{tpu_custom_call.1} parent=11 // pred_check_branch
          %149 = sbr.rel (%p147) target = $region16
        $region15: #{tpu_custom_call.1} parent=11 // pred_region
          %s151 = ssub.s32 256, 256
          %152 = vsyncadd [#allocation7], %s151
          %s153 = sshll.u32 [#allocation6], 4
          %s154 = int_to_ptr.vmem [resolvable:$true] %s153
          %159 = dma.hbm_to_vmem [thread:$0]  %s1, 256, %s154, [#allocation7], 64, 64, 4
        $region16: #{tpu_custom_call.1} parent=11 // pred_fallthru
          _
        // Predicated region
        $region17: #{tpu_custom_call.1} parent=11 // pred_check
          %p160 = pneg %p85
        $region18: #{tpu_custom_call.1} parent=11 // pred_check_branch
          %162 = sbr.rel (%p160) target = $region20
        $region19: #{tpu_custom_call.1} parent=11 // pred_region
          %s164 = ssub.s32 256, 256
          %165 = vsyncadd [#allocation7], %s164
          %s166 = sshll.u32 [#allocation8], 4
          %s167 = int_to_ptr.vmem [resolvable:$true] %s166
          %172 = dma.hbm_to_vmem [thread:$0]  %s2, 256, %s167, [#allocation7], 64, 64, 4
        $region20: #{tpu_custom_call.1} parent=11 // pred_fallthru
          _
        // Predicated region
        $region21: #{tpu_custom_call.1} parent=11 // pred_check
          %p173 = pneg %p106
        $region22: #{tpu_custom_call.1} parent=11 // pred_check_branch
          %175 = sbr.rel (%p173) target = $region24
        $region23: #{tpu_custom_call.1} parent=11 // pred_region
          _
        $region24: #{tpu_custom_call.1} parent=11 // pred_fallthru
          _
      $region12: #{tpu_custom_call.1} parent=5 // pred_fallthru
        _
      %p176 = scmp.lt.s32.totalorder %s17, 2
      // Predicated region
      $region25: #{tpu_custom_call.1} parent=5 // pred_check
        %p177 = pneg %p176
      $region26: #{tpu_custom_call.1} parent=5 // pred_check_branch
        %179 = sbr.rel (%p177) target = $region28
      $region27: #{tpu_custom_call.1} parent=5 // pred_region
        // Predicated region
        $region29: #{tpu_custom_call.1} parent=27 // pred_check
          %p180 = pneg %p37
        $region30: #{tpu_custom_call.1} parent=27 // pred_check_branch
          %182 = sbr.rel (%p180) target = $region32
        $region31: #{tpu_custom_call.1} parent=27 // pred_region
          %s183 = sand.u32 %s27, 1
          %s184 = scalar_lea.sflag [#allocation4], %s183
          %s185 = sand.u32 %s27, 1
          %s186 = smul.addr %s185, 8
          %s187 = scalar_lea.vmem [#allocation3], %s186
          %s189 = ssub.s32 128, 128
          %190 = vsyncadd %s184, %s189
          %s191 = smul.addr %s17, 128
          %s192 = scalar_lea.hbm %s0, %s191
          %s194 = sshll.u32 %s187, 4
          %s195 = int_to_ptr.vmem [resolvable:$true] %s194
          %197 = dma.hbm_to_vmem [thread:$0]  %s192, 128, %s195, %s184
        $region32: #{tpu_custom_call.1} parent=27 // pred_fallthru
          _
      $region28: #{tpu_custom_call.1} parent=5 // pred_fallthru
        _
      %p198 = scmp.le.s32.totalorder 1, %s17
      %p199 = scmp.lt.s32.totalorder %s17, 3
      %p200 = pnand %p198, %p199
      %p201 = pneg %p200
      // Predicated region
      $region33: #{tpu_custom_call.1} parent=5 // pred_check
        _
      $region34: #{tpu_custom_call.1} parent=5 // pred_check_branch
        %203 = sbr.rel (%p200) target = $region36
      $region35: #{tpu_custom_call.1} parent=5 // pred_region
        %s204 = ssub.s32 %s17, 1
        %s205 = sand.u32 %s30, 1
        %s206 = scalar_lea.sflag [#allocation4], %s205
        %s207 = sand.u32 %s30, 1
        %s208 = smul.addr %s207, 8
        %s209 = scalar_lea.vmem [#allocation3], %s208
        // Predicated region
        $region37: #{tpu_custom_call.1} parent=35 // pred_check
          %p210 = pneg %p43
        $region38: #{tpu_custom_call.1} parent=35 // pred_check_branch
          %212 = sbr.rel (%p210) target = $region40
        $region39: #{tpu_custom_call.1} parent=35 // pred_region
          %213 = dma.done %s206, 128
        $region40: #{tpu_custom_call.1} parent=35 // pred_fallthru
          _
        // Predicated region
        $region41: #{tpu_custom_call.1} parent=35 // pred_check
          %p214 = pneg %p64
        $region42: #{tpu_custom_call.1} parent=35 // pred_check_branch
          %216 = sbr.rel (%p214) target = $region44
        $region43: #{tpu_custom_call.1} parent=35 // pred_region
          %217 = dma.done [#allocation7], 256
        $region44: #{tpu_custom_call.1} parent=35 // pred_fallthru
          _
        // Predicated region
        $region45: #{tpu_custom_call.1} parent=35 // pred_check
          %p218 = pneg %p85
        $region46: #{tpu_custom_call.1} parent=35 // pred_check_branch
          %220 = sbr.rel (%p218) target = $region48
        $region47: #{tpu_custom_call.1} parent=35 // pred_region
          %221 = dma.done [#allocation7], 256
        $region48: #{tpu_custom_call.1} parent=35 // pred_fallthru
          _
        %s222 = sand.u32 %s30, 1
        %s223 = scalar_lea.sflag [#allocation4], %s222
        %s224 = sand.u32 %s30, 1
        %s225 = smul.addr %s224, 8
        %s226 = scalar_lea.vmem [#allocation3], %s225
        %p227 = pneg %p43
        %p228 = pneg %p40
        %p229 = pneg %p64
        %p230 = pneg %p61
        %p231 = pneg %p85
        %p232 = pneg %p82
        %p233 = pneg %p106
        %p234 = pneg %p103
        %p235 = pneg %p132
        %p236 = pneg %p129
        %s237 = sand.u32 %s119, 1
        %s238 = scalar_lea.sflag [#allocation5], %s237
        %s239 = sand.u32 %s119, 1
        %s240 = smul.addr %s239, 8
        %s241 = scalar_lea.vmem [#allocation9], %s240
        %v243 = vld [vmem:[%s209] sm:$0xff]
        %v244 = vpack.c.bf16 %v243, %v243
        %v245 = vld [vmem:[#allocation6] sm:$0xf]
        %v246 = vld [vmem:[#allocation6 + $0x4] sm:$0xf]
        %v247 = vld [vmem:[#allocation6 + $0x8] sm:$0xf]
        %v248 = vld [vmem:[#allocation6 + $0xc] sm:$0xf]
        %v253 = vunpack.c.l.b16 %v245
        %v254 = vunpack.c.l.b16 %v246
        %v255 = vunpack.c.l.b16 %v247
        %v256 = vunpack.c.l.b16 %v248
        %v257 = vpack.c.b16 %v254, %v253
        %v258 = vpack.c.b16 %v256, %v255
        %vm261 = vcmask 261120
        %v263 = vsel %vm261, %v244, 0
        %265 = vmatprep.subr.bf16.mxu0 0
        %266 = vmatpush1.bf16.msra.mxu0 %v257
        %267 = vmatprep.subr.bf16.mxu0 0
        %268 = vmatpush1.bf16.msra.mxu0 %v258
        %269 = vmatprep.subr.bf16.mxu0 0
        %270 = vmatpush1.bf16.msra.mxu0 0
        %271 = vmatprep.subr.bf16.mxu0 0
        %272 = vmatpush1.bf16.msra.mxu0 0
        %273 = vmatprep.subr.bf16.mxu0 0
        %274 = vmatpush1.bf16.msra.mxu0 0
        %275 = vmatprep.subr.bf16.mxu0 0
        %276 = vmatpush1.bf16.msra.mxu0 0
        %277 = vmatprep.subr.bf16.mxu0 0
        %278 = vmatpush1.bf16.msra.mxu0 0
        %279 = vmatprep.subr.bf16.mxu0 0
        %280 = vmatpush1.bf16.msra.mxu0 0
        %281 = vmatprep.subr.bf16.mxu0 0
        %282 = vmatpush1.bf16.msra.mxu0 0
        %283 = vmatprep.subr.bf16.mxu0 0
        %284 = vmatpush1.bf16.msra.mxu0 0
        %285 = vmatprep.subr.bf16.mxu0 0
        %286 = vmatpush1.bf16.msra.mxu0 0
        %287 = vmatprep.subr.bf16.mxu0 0
        %288 = vmatpush1.bf16.msra.mxu0 0
        %289 = vmatprep.subr.bf16.mxu0 0
        %290 = vmatpush1.bf16.msra.mxu0 0
        %291 = vmatprep.subr.bf16.mxu0 0
        %292 = vmatpush1.bf16.msra.mxu0 0
        %293 = vmatprep.subr.bf16.mxu0 0
        %294 = vmatpush1.bf16.msra.mxu0 0
        %295 = vmatprep.subr.bf16.mxu0 0
        %296 = vmatpush1.bf16.msra.mxu0 0
        %297 = vmatprep.mubr.bf16.mxu0 0
        %298 = vmatmul.mubr.bf16.gmra.mrb[0].mxu0 %v263
        %v299 = vpop.f32.mrb[0].mxu0
        %v300 = vadd.f32 0.0, %v299
        %v301 = vpop.f32.mrb[0].mxu0
        %v302 = vpop.f32.mrb[0].mxu0
        %v303 = vpop.f32.mrb[0].mxu0
        %304 = vdwg.mxu0
        %v305 = vpack.c.bf16 %v300, %v300
        %307 = vrot.lane.b32.xlu0 %v305, 96
        %v308 = vpop.permute.xlu0 %307
        %vm309 = vcmask 31744
        %v311 = vsel %vm309, %v305, 0
        %v314 = vsel %vm309, %v308, 0
        %316 = vmatprep.subr.bf16.mxu0 0
        %317 = vmatpush1.bf16.xpose.msra.mxu0 %v314
        %318 = vmatprep.subr.bf16.mxu0 0
        %319 = vmatpush1.bf16.xpose.msra.mxu0 0
        %320 = vmatprep.subr.bf16.mxu0 0
        %321 = vmatpush1.bf16.xpose.msra.mxu0 0
        %322 = vmatprep.subr.bf16.mxu0 0
        %323 = vmatpush1.bf16.xpose.msra.mxu0 0
        %324 = vmatprep.subr.bf16.mxu0 0
        %325 = vmatpush1.bf16.xpose.msra.mxu0 0
        %326 = vmatprep.subr.bf16.mxu0 0
        %327 = vmatpush1.bf16.xpose.msra.mxu0 0
        %328 = vmatprep.subr.bf16.mxu0 0
        %329 = vmatpush1.bf16.xpose.msra.mxu0 0
        %330 = vmatprep.subr.bf16.mxu0 0
        %331 = vmatpush1.bf16.xpose.msra.mxu0 0
        %332 = vmatprep.subr.bf16.mxu0 0
        %333 = vmatpush1.bf16.xpose.msra.mxu0 0
        %334 = vmatprep.subr.bf16.mxu0 0
        %335 = vmatpush1.bf16.xpose.msra.mxu0 0
        %336 = vmatprep.subr.bf16.mxu0 0
        %337 = vmatpush1.bf16.xpose.msra.mxu0 0
        %338 = vmatprep.subr.bf16.mxu0 0
        %339 = vmatpush1.bf16.xpose.msra.mxu0 0
        %340 = vmatprep.subr.bf16.mxu0 0
        %341 = vmatpush1.bf16.xpose.msra.mxu0 0
        %342 = vmatprep.subr.bf16.mxu0 0
        %343 = vmatpush1.bf16.xpose.msra.mxu0 0
        %344 = vmatprep.subr.bf16.mxu0 0
        %345 = vmatpush1.bf16.xpose.msra.mxu0 0
        %346 = vmatprep.subr.bf16.mxu0 0
        %347 = vmatpush1.bf16.xpose.msra.mxu0 0
        %348 = vmatprep.mubr.bf16.mxu0 0
        %349 = vmatmul.mubr.bf16.gmra.mrb[0].mxu0 %v311
        %v350 = vpop.f32.mrb[0].mxu0
        %v351 = vadd.f32 0.0, %v350
        %v352 = vpop.f32.mrb[0].mxu0
        %v353 = vpop.f32.mrb[0].mxu0
        %v354 = vpop.f32.mrb[0].mxu0
        %355 = vdwg.mxu0
        %vm356 = vcmask 64512
        %v357 = vsel %vm356, %v351, -inf
        %358 = vmax.xlane.f32.xlu0 %v357
        %v359 = vpop.xlane.xlu0 %358
        %v360 = vsub.f32 %v351, %v359
        %v361 = vmul.f32 %v360, 1.442695
        %v362 = vpow.pop %v361
        %v363 = vsel %vm356, %v362, 0.0
        %364 = vadd.xlane.f32.xlu0 %v363
        %v365 = vpop.xlane.xlu0 %364
        %v366 = vrcp.pop %v365
        %v367 = vmul.f32 %v362, %v366
        %v368 = vpack.c.bf16 %v367, %v367
        %369 = vrot.lane.b32.xlu0 %v305, 64
        %v370 = vpop.permute.xlu0 %369
        %v372 = vsel %vm356, %v368, 0
        %vm374 = vcmask 1043456
        %v376 = vsel %vm374, %v370, 0
        %378 = vmatprep.subr.bf16.mxu0 0
        %379 = vmatpush1.bf16.msra.mxu0 %v376
        %380 = vmatprep.subr.bf16.mxu0 0
        %381 = vmatpush1.bf16.msra.mxu0 0
        %382 = vmatprep.subr.bf16.mxu0 0
        %383 = vmatpush1.bf16.msra.mxu0 0
        %384 = vmatprep.subr.bf16.mxu0 0
        %385 = vmatpush1.bf16.msra.mxu0 0
        %386 = vmatprep.subr.bf16.mxu0 0
        %387 = vmatpush1.bf16.msra.mxu0 0
        %388 = vmatprep.subr.bf16.mxu0 0
        %389 = vmatpush1.bf16.msra.mxu0 0
        %390 = vmatprep.subr.bf16.mxu0 0
        %391 = vmatpush1.bf16.msra.mxu0 0
        %392 = vmatprep.subr.bf16.mxu0 0
        %393 = vmatpush1.bf16.msra.mxu0 0
        %394 = vmatprep.subr.bf16.mxu0 0
        %395 = vmatpush1.bf16.msra.mxu0 0
        %396 = vmatprep.subr.bf16.mxu0 0
        %397 = vmatpush1.bf16.msra.mxu0 0
        %398 = vmatprep.subr.bf16.mxu0 0
        %399 = vmatpush1.bf16.msra.mxu0 0
        %400 = vmatprep.subr.bf16.mxu0 0
        %401 = vmatpush1.bf16.msra.mxu0 0
        %402 = vmatprep.subr.bf16.mxu0 0
        %403 = vmatpush1.bf16.msra.mxu0 0
        %404 = vmatprep.subr.bf16.mxu0 0
        %405 = vmatpush1.bf16.msra.mxu0 0
        %406 = vmatprep.subr.bf16.mxu0 0
        %407 = vmatpush1.bf16.msra.mxu0 0
        %408 = vmatprep.subr.bf16.mxu0 0
        %409 = vmatpush1.bf16.msra.mxu0 0
        %410 = vmatprep.mubr.bf16.mxu0 0
        %411 = vmatmul.mubr.bf16.gmra.mrb[0].mxu0 %v372
        %v412 = vpop.f32.mrb[0].mxu0
        %v413 = vadd.f32 0.0, %v412
        %v414 = vpop.f32.mrb[0].mxu0
        %v415 = vpop.f32.mrb[0].mxu0
        %v416 = vpop.f32.mrb[0].mxu0
        %417 = vdwg.mxu0
        %418 = vst.msk [vmem:[#allocation2] sm:$0xff] %vm309, %v413
        %419 = vrot.lane.b32.xlu0 %v305, 124
        %v420 = vpop.permute.xlu0 %419
        %421 = vrot.lane.b32.xlu0 %v305, 92
        %v422 = vpop.permute.xlu0 %421
        %v424 = vsel %vm309, %v420, 0
        %v427 = vsel %vm309, %v422, 0
        %429 = vmatprep.subr.bf16.mxu0 0
        %430 = vmatpush1.bf16.xpose.msra.mxu0 %v427
        %431 = vmatprep.subr.bf16.mxu0 0
        %432 = vmatpush1.bf16.xpose.msra.mxu0 0
        %433 = vmatprep.subr.bf16.mxu0 0
        %434 = vmatpush1.bf16.xpose.msra.mxu0 0
        %435 = vmatprep.subr.bf16.mxu0 0
        %436 = vmatpush1.bf16.xpose.msra.mxu0 0
        %437 = vmatprep.subr.bf16.mxu0 0
        %438 = vmatpush1.bf16.xpose.msra.mxu0 0
        %439 = vmatprep.subr.bf16.mxu0 0
        %440 = vmatpush1.bf16.xpose.msra.mxu0 0
        %441 = vmatprep.subr.bf16.mxu0 0
        %442 = vmatpush1.bf16.xpose.msra.mxu0 0
        %443 = vmatprep.subr.bf16.mxu0 0
        %444 = vmatpush1.bf16.xpose.msra.mxu0 0
        %445 = vmatprep.subr.bf16.mxu0 0
        %446 = vmatpush1.bf16.xpose.msra.mxu0 0
        %447 = vmatprep.subr.bf16.mxu0 0
        %448 = vmatpush1.bf16.xpose.msra.mxu0 0
        %449 = vmatprep.subr.bf16.mxu0 0
        %450 = vmatpush1.bf16.xpose.msra.mxu0 0
        %451 = vmatprep.subr.bf16.mxu0 0
        %452 = vmatpush1.bf16.xpose.msra.mxu0 0
        %453 = vmatprep.subr.bf16.mxu0 0
        %454 = vmatpush1.bf16.xpose.msra.mxu0 0
        %455 = vmatprep.subr.bf16.mxu0 0
        %456 = vmatpush1.bf16.xpose.msra.mxu0 0
        %457 = vmatprep.subr.bf16.mxu0 0
        %458 = vmatpush1.bf16.xpose.msra.mxu0 0
        %459 = vmatprep.subr.bf16.mxu0 0
        %460 = vmatpush1.bf16.xpose.msra.mxu0 0
        %461 = vmatprep.mubr.bf16.mxu0 0
        %462 = vmatmul.mubr.bf16.gmra.mrb[0].mxu0 %v424
        %v463 = vpop.f32.mrb[0].mxu0
        %v464 = vadd.f32 0.0, %v463
        %v465 = vpop.f32.mrb[0].mxu0
        %v466 = vpop.f32.mrb[0].mxu0
        %v467 = vpop.f32.mrb[0].mxu0
        %468 = vdwg.mxu0
        %v469 = vsel %vm356, %v464, -inf
        %470 = vmax.xlane.f32.xlu0 %v469
        %v471 = vpop.xlane.xlu0 %470
        %v472 = vsub.f32 %v464, %v471
        %v473 = vmul.f32 %v472, 1.442695
        %v474 = vpow.pop %v473
        %v475 = vsel %vm356, %v474, 0.0
        %476 = vadd.xlane.f32.xlu0 %v475
        %v477 = vpop.xlane.xlu0 %476
        %v478 = vrcp.pop %v477
        %v479 = vmul.f32 %v474, %v478
        %v480 = vpack.c.bf16 %v479, %v479
        %481 = vrot.lane.b32.xlu0 %v305, 60
        %v482 = vpop.permute.xlu0 %481
        %v484 = vsel %vm356, %v480, 0
        %v487 = vsel %vm374, %v482, 0
        %489 = vmatprep.subr.bf16.mxu0 0
        %490 = vmatpush1.bf16.msra.mxu0 %v487
        %491 = vmatprep.subr.bf16.mxu0 0
        %492 = vmatpush1.bf16.msra.mxu0 0
        %493 = vmatprep.subr.bf16.mxu0 0
        %494 = vmatpush1.bf16.msra.mxu0 0
        %495 = vmatprep.subr.bf16.mxu0 0
        %496 = vmatpush1.bf16.msra.mxu0 0
        %497 = vmatprep.subr.bf16.mxu0 0
        %498 = vmatpush1.bf16.msra.mxu0 0
        %499 = vmatprep.subr.bf16.mxu0 0
        %500 = vmatpush1.bf16.msra.mxu0 0
        %501 = vmatprep.subr.bf16.mxu0 0
        %502 = vmatpush1.bf16.msra.mxu0 0
        %503 = vmatprep.subr.bf16.mxu0 0
        %504 = vmatpush1.bf16.msra.mxu0 0
        %505 = vmatprep.subr.bf16.mxu0 0
        %506 = vmatpush1.bf16.msra.mxu0 0
        %507 = vmatprep.subr.bf16.mxu0 0
        %508 = vmatpush1.bf16.msra.mxu0 0
        %509 = vmatprep.subr.bf16.mxu0 0
        %510 = vmatpush1.bf16.msra.mxu0 0
        %511 = vmatprep.subr.bf16.mxu0 0
        %512 = vmatpush1.bf16.msra.mxu0 0
        %513 = vmatprep.subr.bf16.mxu0 0
        %514 = vmatpush1.bf16.msra.mxu0 0
        %515 = vmatprep.subr.bf16.mxu0 0
        %516 = vmatpush1.bf16.msra.mxu0 0
        %517 = vmatprep.subr.bf16.mxu0 0
        %518 = vmatpush1.bf16.msra.mxu0 0
        %519 = vmatprep.subr.bf16.mxu0 0
        %520 = vmatpush1.bf16.msra.mxu0 0
        %521 = vmatprep.mubr.bf16.mxu0 0
        %522 = vmatmul.mubr.bf16.gmra.mrb[0].mxu0 %v484
        %v523 = vpop.f32.mrb[0].mxu0
        %v524 = vadd.f32 0.0, %v523
        %v525 = vpop.f32.mrb[0].mxu0
        %v526 = vpop.f32.mrb[0].mxu0
        %v527 = vpop.f32.mrb[0].mxu0
        %528 = vdwg.mxu0
        %530 = vrot.lane.b32.xlu0 %v524, 4
        %v531 = vpop.permute.xlu0 %530
        %vm533 = vcmask 64544
        %534 = vst.msk [vmem:[#allocation2] sm:$0xff] %vm533, %v531
        %535 = vrot.lane.b32.xlu0 %v305, 120
        %v536 = vpop.permute.xlu0 %535
        %537 = vrot.lane.b32.xlu0 %v305, 88
        %v538 = vpop.permute.xlu0 %537
        %v540 = vsel %vm309, %v536, 0
        %v543 = vsel %vm309, %v538, 0
        %545 = vmatprep.subr.bf16.mxu0 0
        %546 = vmatpush1.bf16.xpose.msra.mxu0 %v543
        %547 = vmatprep.subr.bf16.mxu0 0
        %548 = vmatpush1.bf16.xpose.msra.mxu0 0
        %549 = vmatprep.subr.bf16.mxu0 0
        %550 = vmatpush1.bf16.xpose.msra.mxu0 0
        %551 = vmatprep.subr.bf16.mxu0 0
        %552 = vmatpush1.bf16.xpose.msra.mxu0 0
        %553 = vmatprep.subr.bf16.mxu0 0
        %554 = vmatpush1.bf16.xpose.msra.mxu0 0
        %555 = vmatprep.subr.bf16.mxu0 0
        %556 = vmatpush1.bf16.xpose.msra.mxu0 0
        %557 = vmatprep.subr.bf16.mxu0 0
        %558 = vmatpush1.bf16.xpose.msra.mxu0 0
        %559 = vmatprep.subr.bf16.mxu0 0
        %560 = vmatpush1.bf16.xpose.msra.mxu0 0
        %561 = vmatprep.subr.bf16.mxu0 0
        %562 = vmatpush1.bf16.xpose.msra.mxu0 0
        %563 = vmatprep.subr.bf16.mxu0 0
        %564 = vmatpush1.bf16.xpose.msra.mxu0 0
        %565 = vmatprep.subr.bf16.mxu0 0
        %566 = vmatpush1.bf16.xpose.msra.mxu0 0
        %567 = vmatprep.subr.bf16.mxu0 0
        %568 = vmatpush1.bf16.xpose.msra.mxu0 0
        %569 = vmatprep.subr.bf16.mxu0 0
        %570 = vmatpush1.bf16.xpose.msra.mxu0 0
        %571 = vmatprep.subr.bf16.mxu0 0
        %572 = vmatpush1.bf16.xpose.msra.mxu0 0
        %573 = vmatprep.subr.bf16.mxu0 0
        %574 = vmatpush1.bf16.xpose.msra.mxu0 0
        %575 = vmatprep.subr.bf16.mxu0 0
        %576 = vmatpush1.bf16.xpose.msra.mxu0 0
        %577 = vmatprep.mubr.bf16.mxu0 0
        %578 = vmatmul.mubr.bf16.gmra.mrb[0].mxu0 %v540
        %v579 = vpop.f32.mrb[0].mxu0
        %v580 = vadd.f32 0.0, %v579
        %v581 = vpop.f32.mrb[0].mxu0
        %v582 = vpop.f32.mrb[0].mxu0
        %v583 = vpop.f32.mrb[0].mxu0
        %584 = vdwg.mxu0
        %v585 = vsel %vm356, %v580, -inf
        %586 = vmax.xlane.f32.xlu0 %v585
        %v587 = vpop.xlane.xlu0 %586
        %v588 = vsub.f32 %v580, %v587
        %v589 = vmul.f32 %v588, 1.442695
        %v590 = vpow.pop %v589
        %v591 = vsel %vm356, %v590, 0.0
        %592 = vadd.xlane.f32.xlu0 %v591
        %v593 = vpop.xlane.xlu0 %592
        %v594 = vrcp.pop %v593
        %v595 = vmul.f32 %v590, %v594
        %v596 = vpack.c.bf16 %v595, %v595
        %597 = vrot.lane.b32.xlu0 %v305, 56
        %v598 = vpop.permute.xlu0 %597
        %v600 = vsel %vm356, %v596, 0
        %v603 = vsel %vm374, %v598, 0
        %605 = vmatprep.subr.bf16.mxu0 0
        %606 = vmatpush1.bf16.msra.mxu0 %v603
        %607 = vmatprep.subr.bf16.mxu0 0
        %608 = vmatpush1.bf16.msra.mxu0 0
        %609 = vmatprep.subr.bf16.mxu0 0
        %610 = vmatpush1.bf16.msra.mxu0 0
        %611 = vmatprep.subr.bf16.mxu0 0
        %612 = vmatpush1.bf16.msra.mxu0 0
        %613 = vmatprep.subr.bf16.mxu0 0
        %614 = vmatpush1.bf16.msra.mxu0 0
        %615 = vmatprep.subr.bf16.mxu0 0
        %616 = vmatpush1.bf16.msra.mxu0 0
        %617 = vmatprep.subr.bf16.mxu0 0
        %618 = vmatpush1.bf16.msra.mxu0 0
        %619 = vmatprep.subr.bf16.mxu0 0
        %620 = vmatpush1.bf16.msra.mxu0 0
        %621 = vmatprep.subr.bf16.mxu0 0
        %622 = vmatpush1.bf16.msra.mxu0 0
        %623 = vmatprep.subr.bf16.mxu0 0
        %624 = vmatpush1.bf16.msra.mxu0 0
        %625 = vmatprep.subr.bf16.mxu0 0
        %626 = vmatpush1.bf16.msra.mxu0 0
        %627 = vmatprep.subr.bf16.mxu0 0
        %628 = vmatpush1.bf16.msra.mxu0 0
        %629 = vmatprep.subr.bf16.mxu0 0
        %630 = vmatpush1.bf16.msra.mxu0 0
        %631 = vmatprep.subr.bf16.mxu0 0
        %632 = vmatpush1.bf16.msra.mxu0 0
        %633 = vmatprep.subr.bf16.mxu0 0
        %634 = vmatpush1.bf16.msra.mxu0 0
        %635 = vmatprep.subr.bf16.mxu0 0
        %636 = vmatpush1.bf16.msra.mxu0 0
        %637 = vmatprep.mubr.bf16.mxu0 0
        %638 = vmatmul.mubr.bf16.gmra.mrb[0].mxu0 %v600
        %v639 = vpop.f32.mrb[0].mxu0
        %v640 = vadd.f32 0.0, %v639
        %v641 = vpop.f32.mrb[0].mxu0
        %v642 = vpop.f32.mrb[0].mxu0
        %v643 = vpop.f32.mrb[0].mxu0
        %644 = vdwg.mxu0
        %646 = vrot.lane.b32.xlu0 %v640, 8
        %v647 = vpop.permute.xlu0 %646
        %vm649 = vcmask 97344
        %650 = vst.msk [vmem:[#allocation2] sm:$0xff] %vm649, %v647
        %651 = vrot.lane.b32.xlu0 %v305, 116
        %v652 = vpop.permute.xlu0 %651
        %653 = vrot.lane.b32.xlu0 %v305, 84
        %v654 = vpop.permute.xlu0 %653
        %v656 = vsel %vm309, %v652, 0
        %v659 = vsel %vm309, %v654, 0
        %661 = vmatprep.subr.bf16.mxu0 0
        %662 = vmatpush1.bf16.xpose.msra.mxu0 %v659
        %663 = vmatprep.subr.bf16.mxu0 0
        %664 = vmatpush1.bf16.xpose.msra.mxu0 0
        %665 = vmatprep.subr.bf16.mxu0 0
        %666 = vmatpush1.bf16.xpose.msra.mxu0 0
        %667 = vmatprep.subr.bf16.mxu0 0
        %668 = vmatpush1.bf16.xpose.msra.mxu0 0
        %669 = vmatprep.subr.bf16.mxu0 0
        %670 = vmatpush1.bf16.xpose.msra.mxu0 0
        %671 = vmatprep.subr.bf16.mxu0 0
        %672 = vmatpush1.bf16.xpose.msra.mxu0 0
        %673 = vmatprep.subr.bf16.mxu0 0
        %674 = vmatpush1.bf16.xpose.msra.mxu0 0
        %675 = vmatprep.subr.bf16.mxu0 0
        %676 = vmatpush1.bf16.xpose.msra.mxu0 0
        %677 = vmatprep.subr.bf16.mxu0 0
        %678 = vmatpush1.bf16.xpose.msra.mxu0 0
        %679 = vmatprep.subr.bf16.mxu0 0
        %680 = vmatpush1.bf16.xpose.msra.mxu0 0
        %681 = vmatprep.subr.bf16.mxu0 0
        %682 = vmatpush1.bf16.xpose.msra.mxu0 0
        %683 = vmatprep.subr.bf16.mxu0 0
        %684 = vmatpush1.bf16.xpose.msra.mxu0 0
        %685 = vmatprep.subr.bf16.mxu0 0
        %686 = vmatpush1.bf16.xpose.msra.mxu0 0
        %687 = vmatprep.subr.bf16.mxu0 0
        %688 = vmatpush1.bf16.xpose.msra.mxu0 0
        %689 = vmatprep.subr.bf16.mxu0 0
        %690 = vmatpush1.bf16.xpose.msra.mxu0 0
        %691 = vmatprep.subr.bf16.mxu0 0
        %692 = vmatpush1.bf16.xpose.msra.mxu0 0
        %693 = vmatprep.mubr.bf16.mxu0 0
        %694 = vmatmul.mubr.bf16.gmra.mrb[0].mxu0 %v656
        %v695 = vpop.f32.mrb[0].mxu0
        %v696 = vadd.f32 0.0, %v695
        %v697 = vpop.f32.mrb[0].mxu0
        %v698 = vpop.f32.mrb[0].mxu0
        %v699 = vpop.f32.mrb[0].mxu0
        %700 = vdwg.mxu0
        %v701 = vsel %vm356, %v696, -inf
        %702 = vmax.xlane.f32.xlu0 %v701
        %v703 = vpop.xlane.xlu0 %702
        %v704 = vsub.f32 %v696, %v703
        %v705 = vmul.f32 %v704, 1.442695
        %v706 = vpow.pop %v705
        %v707 = vsel %vm356, %v706, 0.0
        %708 = vadd.xlane.f32.xlu0 %v707
        %v709 = vpop.xlane.xlu0 %708
        %v710 = vrcp.pop %v709
        %v711 = vmul.f32 %v706, %v710
        %v712 = vpack.c.bf16 %v711, %v711
        %713 = vrot.lane.b32.xlu0 %v305, 52
        %v714 = vpop.permute.xlu0 %713
        %v716 = vsel %vm356, %v712, 0
        %v719 = vsel %vm374, %v714, 0
        %721 = vmatprep.subr.bf16.mxu0 0
        %722 = vmatpush1.bf16.msra.mxu0 %v719
        %723 = vmatprep.subr.bf16.mxu0 0
        %724 = vmatpush1.bf16.msra.mxu0 0
        %725 = vmatprep.subr.bf16.mxu0 0
        %726 = vmatpush1.bf16.msra.mxu0 0
        %727 = vmatprep.subr.bf16.mxu0 0
        %728 = vmatpush1.bf16.msra.mxu0 0
        %729 = vmatprep.subr.bf16.mxu0 0
        %730 = vmatpush1.bf16.msra.mxu0 0
        %731 = vmatprep.subr.bf16.mxu0 0
        %732 = vmatpush1.bf16.msra.mxu0 0
        %733 = vmatprep.subr.bf16.mxu0 0
        %734 = vmatpush1.bf16.msra.mxu0 0
        %735 = vmatprep.subr.bf16.mxu0 0
        %736 = vmatpush1.bf16.msra.mxu0 0
        %737 = vmatprep.subr.bf16.mxu0 0
        %738 = vmatpush1.bf16.msra.mxu0 0
        %739 = vmatprep.subr.bf16.mxu0 0
        %740 = vmatpush1.bf16.msra.mxu0 0
        %741 = vmatprep.subr.bf16.mxu0 0
        %742 = vmatpush1.bf16.msra.mxu0 0
        %743 = vmatprep.subr.bf16.mxu0 0
        %744 = vmatpush1.bf16.msra.mxu0 0
        %745 = vmatprep.subr.bf16.mxu0 0
        %746 = vmatpush1.bf16.msra.mxu0 0
        %747 = vmatprep.subr.bf16.mxu0 0
        %748 = vmatpush1.bf16.msra.mxu0 0
        %749 = vmatprep.subr.bf16.mxu0 0
        %750 = vmatpush1.bf16.msra.mxu0 0
        %751 = vmatprep.subr.bf16.mxu0 0
        %752 = vmatpush1.bf16.msra.mxu0 0
        %753 = vmatprep.mubr.bf16.mxu0 0
        %754 = vmatmul.mubr.bf16.gmra.mrb[0].mxu0 %v716
        %v755 = vpop.f32.mrb[0].mxu0
        %v756 = vadd.f32 0.0, %v755
        %v757 = vpop.f32.mrb[0].mxu0
        %v758 = vpop.f32.mrb[0].mxu0
        %v759 = vpop.f32.mrb[0].mxu0
        %760 = vdwg.mxu0
        %762 = vrot.lane.b32.xlu0 %v756, 12
        %v763 = vpop.permute.xlu0 %762
        %vm765 = vcmask 130144
        %766 = vst.msk [vmem:[#allocation2] sm:$0xff] %vm765, %v763
        %767 = vrot.lane.b32.xlu0 %v305, 112
        %v768 = vpop.permute.xlu0 %767
        %769 = vrot.lane.b32.xlu0 %v305, 80
        %v770 = vpop.permute.xlu0 %769
        %v772 = vsel %vm309, %v768, 0
        %v775 = vsel %vm309, %v770, 0
        %777 = vmatprep.subr.bf16.mxu0 0
        %778 = vmatpush1.bf16.xpose.msra.mxu0 %v775
        %779 = vmatprep.subr.bf16.mxu0 0
        %780 = vmatpush1.bf16.xpose.msra.mxu0 0
        %781 = vmatprep.subr.bf16.mxu0 0
        %782 = vmatpush1.bf16.xpose.msra.mxu0 0
        %783 = vmatprep.subr.bf16.mxu0 0
        %784 = vmatpush1.bf16.xpose.msra.mxu0 0
        %785 = vmatprep.subr.bf16.mxu0 0
        %786 = vmatpush1.bf16.xpose.msra.mxu0 0
        %787 = vmatprep.subr.bf16.mxu0 0
        %788 = vmatpush1.bf16.xpose.msra.mxu0 0
        %789 = vmatprep.subr.bf16.mxu0 0
        %790 = vmatpush1.bf16.xpose.msra.mxu0 0
        %791 = vmatprep.subr.bf16.mxu0 0
        %792 = vmatpush1.bf16.xpose.msra.mxu0 0
        %793 = vmatprep.subr.bf16.mxu0 0
        %794 = vmatpush1.bf16.xpose.msra.mxu0 0
        %795 = vmatprep.subr.bf16.mxu0 0
        %796 = vmatpush1.bf16.xpose.msra.mxu0 0
        %797 = vmatprep.subr.bf16.mxu0 0
        %798 = vmatpush1.bf16.xpose.msra.mxu0 0
        %799 = vmatprep.subr.bf16.mxu0 0
        %800 = vmatpush1.bf16.xpose.msra.mxu0 0
        %801 = vmatprep.subr.bf16.mxu0 0
        %802 = vmatpush1.bf16.xpose.msra.mxu0 0
        %803 = vmatprep.subr.bf16.mxu0 0
        %804 = vmatpush1.bf16.xpose.msra.mxu0 0
        %805 = vmatprep.subr.bf16.mxu0 0
        %806 = vmatpush1.bf16.xpose.msra.mxu0 0
        %807 = vmatprep.subr.bf16.mxu0 0
        %808 = vmatpush1.bf16.xpose.msra.mxu0 0
        %809 = vmatprep.mubr.bf16.mxu0 0
        %810 = vmatmul.mubr.bf16.gmra.mrb[0].mxu0 %v772
        %v811 = vpop.f32.mrb[0].mxu0
        %v812 = vadd.f32 0.0, %v811
        %v813 = vpop.f32.mrb[0].mxu0
        %v814 = vpop.f32.mrb[0].mxu0
        %v815 = vpop.f32.mrb[0].mxu0
        %816 = vdwg.mxu0
        %v817 = vsel %vm356, %v812, -inf
        %818 = vmax.xlane.f32.xlu0 %v817
        %v819 = vpop.xlane.xlu0 %818
        %v820 = vsub.f32 %v812, %v819
        %v821 = vmul.f32 %v820, 1.442695
        %v822 = vpow.pop %v821
        %v823 = vsel %vm356, %v822, 0.0
        %824 = vadd.xlane.f32.xlu0 %v823
        %v825 = vpop.xlane.xlu0 %824
        %v826 = vrcp.pop %v825
        %v827 = vmul.f32 %v822, %v826
        %v828 = vpack.c.bf16 %v827, %v827
        %829 = vrot.lane.b32.xlu0 %v305, 48
        %v830 = vpop.permute.xlu0 %829
        %v832 = vsel %vm356, %v828, 0
        %v835 = vsel %vm374, %v830, 0
        %837 = vmatprep.subr.bf16.mxu0 0
        %838 = vmatpush1.bf16.msra.mxu0 %v835
        %839 = vmatprep.subr.bf16.mxu0 0
        %840 = vmatpush1.bf16.msra.mxu0 0
        %841 = vmatprep.subr.bf16.mxu0 0
        %842 = vmatpush1.bf16.msra.mxu0 0
        %843 = vmatprep.subr.bf16.mxu0 0
        %844 = vmatpush1.bf16.msra.mxu0 0
        %845 = vmatprep.subr.bf16.mxu0 0
        %846 = vmatpush1.bf16.msra.mxu0 0
        %847 = vmatprep.subr.bf16.mxu0 0
        %848 = vmatpush1.bf16.msra.mxu0 0
        %849 = vmatprep.subr.bf16.mxu0 0
        %850 = vmatpush1.bf16.msra.mxu0 0
        %851 = vmatprep.subr.bf16.mxu0 0
        %852 = vmatpush1.bf16.msra.mxu0 0
        %853 = vmatprep.subr.bf16.mxu0 0
        %854 = vmatpush1.bf16.msra.mxu0 0
        %855 = vmatprep.subr.bf16.mxu0 0
        %856 = vmatpush1.bf16.msra.mxu0 0
        %857 = vmatprep.subr.bf16.mxu0 0
        %858 = vmatpush1.bf16.msra.mxu0 0
        %859 = vmatprep.subr.bf16.mxu0 0
        %860 = vmatpush1.bf16.msra.mxu0 0
        %861 = vmatprep.subr.bf16.mxu0 0
        %862 = vmatpush1.bf16.msra.mxu0 0
        %863 = vmatprep.subr.bf16.mxu0 0
        %864 = vmatpush1.bf16.msra.mxu0 0
        %865 = vmatprep.subr.bf16.mxu0 0
        %866 = vmatpush1.bf16.msra.mxu0 0
        %867 = vmatprep.subr.bf16.mxu0 0
        %868 = vmatpush1.bf16.msra.mxu0 0
        %869 = vmatprep.mubr.bf16.mxu0 0
        %870 = vmatmul.mubr.bf16.gmra.mrb[0].mxu0 %v832
        %v871 = vpop.f32.mrb[0].mxu0
        %v872 = vadd.f32 0.0, %v871
        %v873 = vpop.f32.mrb[0].mxu0
        %v874 = vpop.f32.mrb[0].mxu0
        %v875 = vpop.f32.mrb[0].mxu0
        %876 = vdwg.mxu0
        %878 = vrot.lane.b32.xlu0 %v872, 16
        %v879 = vpop.permute.xlu0 %878
        %vm881 = vcmask 162944
        %882 = vst.msk [vmem:[#allocation2] sm:$0xff] %vm881, %v879
        %883 = vrot.lane.b32.xlu0 %v305, 108
        %v884 = vpop.permute.xlu0 %883
        %885 = vrot.lane.b32.xlu0 %v305, 76
        %v886 = vpop.permute.xlu0 %885
        %v888 = vsel %vm309, %v884, 0
        %v891 = vsel %vm309, %v886, 0
        %893 = vmatprep.subr.bf16.mxu0 0
        %894 = vmatpush1.bf16.xpose.msra.mxu0 %v891
        %895 = vmatprep.subr.bf16.mxu0 0
        %896 = vmatpush1.bf16.xpose.msra.mxu0 0
        %897 = vmatprep.subr.bf16.mxu0 0
        %898 = vmatpush1.bf16.xpose.msra.mxu0 0
        %899 = vmatprep.subr.bf16.mxu0 0
        %900 = vmatpush1.bf16.xpose.msra.mxu0 0
        %901 = vmatprep.subr.bf16.mxu0 0
        %902 = vmatpush1.bf16.xpose.msra.mxu0 0
        %903 = vmatprep.subr.bf16.mxu0 0
        %904 = vmatpush1.bf16.xpose.msra.mxu0 0
        %905 = vmatprep.subr.bf16.mxu0 0
        %906 = vmatpush1.bf16.xpose.msra.mxu0 0
        %907 = vmatprep.subr.bf16.mxu0 0
        %908 = vmatpush1.bf16.xpose.msra.mxu0 0
        %909 = vmatprep.subr.bf16.mxu0 0
        %910 = vmatpush1.bf16.xpose.msra.mxu0 0
        %911 = vmatprep.subr.bf16.mxu0 0
        %912 = vmatpush1.bf16.xpose.msra.mxu0 0
        %913 = vmatprep.subr.bf16.mxu0 0
        %914 = vmatpush1.bf16.xpose.msra.mxu0 0
        %915 = vmatprep.subr.bf16.mxu0 0
        %916 = vmatpush1.bf16.xpose.msra.mxu0 0
        %917 = vmatprep.subr.bf16.mxu0 0
        %918 = vmatpush1.bf16.xpose.msra.mxu0 0
        %919 = vmatprep.subr.bf16.mxu0 0
        %920 = vmatpush1.bf16.xpose.msra.mxu0 0
        %921 = vmatprep.subr.bf16.mxu0 0
        %922 = vmatpush1.bf16.xpose.msra.mxu0 0
        %923 = vmatprep.subr.bf16.mxu0 0
        %924 = vmatpush1.bf16.xpose.msra.mxu0 0
        %925 = vmatprep.mubr.bf16.mxu0 0
        %926 = vmatmul.mubr.bf16.gmra.mrb[0].mxu0 %v888
        %v927 = vpop.f32.mrb[0].mxu0
        %v928 = vadd.f32 0.0, %v927
        %v929 = vpop.f32.mrb[0].mxu0
        %v930 = vpop.f32.mrb[0].mxu0
        %v931 = vpop.f32.mrb[0].mxu0
        %932 = vdwg.mxu0
        %v933 = vsel %vm356, %v928, -inf
        %934 = vmax.xlane.f32.xlu0 %v933
        %v935 = vpop.xlane.xlu0 %934
        %v936 = vsub.f32 %v928, %v935
        %v937 = vmul.f32 %v936, 1.442695
        %v938 = vpow.pop %v937
        %v939 = vsel %vm356, %v938, 0.0
        %940 = vadd.xlane.f32.xlu0 %v939
        %v941 = vpop.xlane.xlu0 %940
        %v942 = vrcp.pop %v941
        %v943 = vmul.f32 %v938, %v942
        %v944 = vpack.c.bf16 %v943, %v943
        %945 = vrot.lane.b32.xlu0 %v305, 44
        %v946 = vpop.permute.xlu0 %945
        %v948 = vsel %vm356, %v944, 0
        %v951 = vsel %vm374, %v946, 0
        %953 = vmatprep.subr.bf16.mxu0 0
        %954 = vmatpush1.bf16.msra.mxu0 %v951
        %955 = vmatprep.subr.bf16.mxu0 0
        %956 = vmatpush1.bf16.msra.mxu0 0
        %957 = vmatprep.subr.bf16.mxu0 0
        %958 = vmatpush1.bf16.msra.mxu0 0
        %959 = vmatprep.subr.bf16.mxu0 0
        %960 = vmatpush1.bf16.msra.mxu0 0
        %961 = vmatprep.subr.bf16.mxu0 0
        %962 = vmatpush1.bf16.msra.mxu0 0
        %963 = vmatprep.subr.bf16.mxu0 0
        %964 = vmatpush1.bf16.msra.mxu0 0
        %965 = vmatprep.subr.bf16.mxu0 0
        %966 = vmatpush1.bf16.msra.mxu0 0
        %967 = vmatprep.subr.bf16.mxu0 0
        %968 = vmatpush1.bf16.msra.mxu0 0
        %969 = vmatprep.subr.bf16.mxu0 0
        %970 = vmatpush1.bf16.msra.mxu0 0
        %971 = vmatprep.subr.bf16.mxu0 0
        %972 = vmatpush1.bf16.msra.mxu0 0
        %973 = vmatprep.subr.bf16.mxu0 0
        %974 = vmatpush1.bf16.msra.mxu0 0
        %975 = vmatprep.subr.bf16.mxu0 0
        %976 = vmatpush1.bf16.msra.mxu0 0
        %977 = vmatprep.subr.bf16.mxu0 0
        %978 = vmatpush1.bf16.msra.mxu0 0
        %979 = vmatprep.subr.bf16.mxu0 0
        %980 = vmatpush1.bf16.msra.mxu0 0
        %981 = vmatprep.subr.bf16.mxu0 0
        %982 = vmatpush1.bf16.msra.mxu0 0
        %983 = vmatprep.subr.bf16.mxu0 0
        %984 = vmatpush1.bf16.msra.mxu0 0
        %985 = vmatprep.mubr.bf16.mxu0 0
        %986 = vmatmul.mubr.bf16.gmra.mrb[0].mxu0 %v948
        %v987 = vpop.f32.mrb[0].mxu0
        %v988 = vadd.f32 0.0, %v987
        %v989 = vpop.f32.mrb[0].mxu0
        %v990 = vpop.f32.mrb[0].mxu0
        %v991 = vpop.f32.mrb[0].mxu0
        %992 = vdwg.mxu0
        %994 = vrot.lane.b32.xlu0 %v988, 20
        %v995 = vpop.permute.xlu0 %994
        %vm997 = vcmask 195744
        %998 = vst.msk [vmem:[#allocation2] sm:$0xff] %vm997, %v995
        %999 = vrot.lane.b32.xlu0 %v305, 104
        %v1000 = vpop.permute.xlu0 %999
        %1001 = vrot.lane.b32.xlu0 %v305, 72
        %v1002 = vpop.permute.xlu0 %1001
        %v1004 = vsel %vm309, %v1000, 0
        %v1007 = vsel %vm309, %v1002, 0
        %1009 = vmatprep.subr.bf16.mxu0 0
        %1010 = vmatpush1.bf16.xpose.msra.mxu0 %v1007
        %1011 = vmatprep.subr.bf16.mxu0 0
        %1012 = vmatpush1.bf16.xpose.msra.mxu0 0
        %1013 = vmatprep.subr.bf16.mxu0 0
        %1014 = vmatpush1.bf16.xpose.msra.mxu0 0
        %1015 = vmatprep.subr.bf16.mxu0 0
        %1016 = vmatpush1.bf16.xpose.msra.mxu0 0
        %1017 = vmatprep.subr.bf16.mxu0 0
        %1018 = vmatpush1.bf16.xpose.msra.mxu0 0
        %1019 = vmatprep.subr.bf16.mxu0 0
        %1020 = vmatpush1.bf16.xpose.msra.mxu0 0
        %1021 = vmatprep.subr.bf16.mxu0 0
        %1022 = vmatpush1.bf16.xpose.msra.mxu0 0
        %1023 = vmatprep.subr.bf16.mxu0 0
        %1024 = vmatpush1.bf16.xpose.msra.mxu0 0
        %1025 = vmatprep.subr.bf16.mxu0 0
        %1026 = vmatpush1.bf16.xpose.msra.mxu0 0
        %1027 = vmatprep.subr.bf16.mxu0 0
        %1028 = vmatpush1.bf16.xpose.msra.mxu0 0
        %1029 = vmatprep.subr.bf16.mxu0 0
        %1030 = vmatpush1.bf16.xpose.msra.mxu0 0
        %1031 = vmatprep.subr.bf16.mxu0 0
        %1032 = vmatpush1.bf16.xpose.msra.mxu0 0
        %1033 = vmatprep.subr.bf16.mxu0 0
        %1034 = vmatpush1.bf16.xpose.msra.mxu0 0
        %1035 = vmatprep.subr.bf16.mxu0 0
        %1036 = vmatpush1.bf16.xpose.msra.mxu0 0
        %1037 = vmatprep.subr.bf16.mxu0 0
        %1038 = vmatpush1.bf16.xpose.msra.mxu0 0
        %1039 = vmatprep.subr.bf16.mxu0 0
        %1040 = vmatpush1.bf16.xpose.msra.mxu0 0
        %1041 = vmatprep.mubr.bf16.mxu0 0
        %1042 = vmatmul.mubr.bf16.gmra.mrb[0].mxu0 %v1004
        %v1043 = vpop.f32.mrb[0].mxu0
        %v1044 = vadd.f32 0.0, %v1043
        %v1045 = vpop.f32.mrb[0].mxu0
        %v1046 = vpop.f32.mrb[0].mxu0
        %v1047 = vpop.f32.mrb[0].mxu0
        %1048 = vdwg.mxu0
        %v1049 = vsel %vm356, %v1044, -inf
        %1050 = vmax.xlane.f32.xlu0 %v1049
        %v1051 = vpop.xlane.xlu0 %1050
        %v1052 = vsub.f32 %v1044, %v1051
        %v1053 = vmul.f32 %v1052, 1.442695
        %v1054 = vpow.pop %v1053
        %v1055 = vsel %vm356, %v1054, 0.0
        %1056 = vadd.xlane.f32.xlu0 %v1055
        %v1057 = vpop.xlane.xlu0 %1056
        %v1058 = vrcp.pop %v1057
        %v1059 = vmul.f32 %v1054, %v1058
        %v1060 = vpack.c.bf16 %v1059, %v1059
        %1061 = vrot.lane.b32.xlu0 %v305, 40
        %v1062 = vpop.permute.xlu0 %1061
        %v1064 = vsel %vm356, %v1060, 0
        %v1067 = vsel %vm374, %v1062, 0
        %1069 = vmatprep.subr.bf16.mxu0 0
        %1070 = vmatpush1.bf16.msra.mxu0 %v1067
        %1071 = vmatprep.subr.bf16.mxu0 0
        %1072 = vmatpush1.bf16.msra.mxu0 0
        %1073 = vmatprep.subr.bf16.mxu0 0
        %1074 = vmatpush1.bf16.msra.mxu0 0
        %1075 = vmatprep.subr.bf16.mxu0 0
        %1076 = vmatpush1.bf16.msra.mxu0 0
        %1077 = vmatprep.subr.bf16.mxu0 0
        %1078 = vmatpush1.bf16.msra.mxu0 0
        %1079 = vmatprep.subr.bf16.mxu0 0
        %1080 = vmatpush1.bf16.msra.mxu0 0
        %1081 = vmatprep.subr.bf16.mxu0 0
        %1082 = vmatpush1.bf16.msra.mxu0 0
        %1083 = vmatprep.subr.bf16.mxu0 0
        %1084 = vmatpush1.bf16.msra.mxu0 0
        %1085 = vmatprep.subr.bf16.mxu0 0
        %1086 = vmatpush1.bf16.msra.mxu0 0
        %1087 = vmatprep.subr.bf16.mxu0 0
        %1088 = vmatpush1.bf16.msra.mxu0 0
        %1089 = vmatprep.subr.bf16.mxu0 0
        %1090 = vmatpush1.bf16.msra.mxu0 0
        %1091 = vmatprep.subr.bf16.mxu0 0
        %1092 = vmatpush1.bf16.msra.mxu0 0
        %1093 = vmatprep.subr.bf16.mxu0 0
        %1094 = vmatpush1.bf16.msra.mxu0 0
        %1095 = vmatprep.subr.bf16.mxu0 0
        %1096 = vmatpush1.bf16.msra.mxu0 0
        %1097 = vmatprep.subr.bf16.mxu0 0
        %1098 = vmatpush1.bf16.msra.mxu0 0
        %1099 = vmatprep.subr.bf16.mxu0 0
        %1100 = vmatpush1.bf16.msra.mxu0 0
        %1101 = vmatprep.mubr.bf16.mxu0 0
        %1102 = vmatmul.mubr.bf16.gmra.mrb[0].mxu0 %v1064
        %v1103 = vpop.f32.mrb[0].mxu0
        %v1104 = vadd.f32 0.0, %v1103
        %v1105 = vpop.f32.mrb[0].mxu0
        %v1106 = vpop.f32.mrb[0].mxu0
        %v1107 = vpop.f32.mrb[0].mxu0
        %1108 = vdwg.mxu0
        %1110 = vrot.lane.b32.xlu0 %v1104, 24
        %v1111 = vpop.permute.xlu0 %1110
        %vm1113 = vcmask 228544
        %1114 = vst.msk [vmem:[#allocation2] sm:$0xff] %vm1113, %v1111
        %1115 = vrot.lane.b32.xlu0 %v305, 100
        %v1116 = vpop.permute.xlu0 %1115
        %1117 = vrot.lane.b32.xlu0 %v305, 68
        %v1118 = vpop.permute.xlu0 %1117
        %v1120 = vsel %vm309, %v1116, 0
        %v1123 = vsel %vm309, %v1118, 0
        %1125 = vmatprep.subr.bf16.mxu0 0
        %1126 = vmatpush1.bf16.xpose.msra.mxu0 %v1123
        %1127 = vmatprep.subr.bf16.mxu0 0
        %1128 = vmatpush1.bf16.xpose.msra.mxu0 0
        %1129 = vmatprep.subr.bf16.mxu0 0
        %1130 = vmatpush1.bf16.xpose.msra.mxu0 0
        %1131 = vmatprep.subr.bf16.mxu0 0
        %1132 = vmatpush1.bf16.xpose.msra.mxu0 0
        %1133 = vmatprep.subr.bf16.mxu0 0
        %1134 = vmatpush1.bf16.xpose.msra.mxu0 0
        %1135 = vmatprep.subr.bf16.mxu0 0
        %1136 = vmatpush1.bf16.xpose.msra.mxu0 0
        %1137 = vmatprep.subr.bf16.mxu0 0
        %1138 = vmatpush1.bf16.xpose.msra.mxu0 0
        %1139 = vmatprep.subr.bf16.mxu0 0
        %1140 = vmatpush1.bf16.xpose.msra.mxu0 0
        %1141 = vmatprep.subr.bf16.mxu0 0
        %1142 = vmatpush1.bf16.xpose.msra.mxu0 0
        %1143 = vmatprep.subr.bf16.mxu0 0
        %1144 = vmatpush1.bf16.xpose.msra.mxu0 0
        %1145 = vmatprep.subr.bf16.mxu0 0
        %1146 = vmatpush1.bf16.xpose.msra.mxu0 0
        %1147 = vmatprep.subr.bf16.mxu0 0
        %1148 = vmatpush1.bf16.xpose.msra.mxu0 0
        %1149 = vmatprep.subr.bf16.mxu0 0
        %1150 = vmatpush1.bf16.xpose.msra.mxu0 0
        %1151 = vmatprep.subr.bf16.mxu0 0
        %1152 = vmatpush1.bf16.xpose.msra.mxu0 0
        %1153 = vmatprep.subr.bf16.mxu0 0
        %1154 = vmatpush1.bf16.xpose.msra.mxu0 0
        %1155 = vmatprep.subr.bf16.mxu0 0
        %1156 = vmatpush1.bf16.xpose.msra.mxu0 0
        %1157 = vmatprep.mubr.bf16.mxu0 0
        %1158 = vmatmul.mubr.bf16.gmra.mrb[0].mxu0 %v1120
        %v1159 = vpop.f32.mrb[0].mxu0
        %v1160 = vadd.f32 0.0, %v1159
        %v1161 = vpop.f32.mrb[0].mxu0
        %v1162 = vpop.f32.mrb[0].mxu0
        %v1163 = vpop.f32.mrb[0].mxu0
        %1164 = vdwg.mxu0
        %v1165 = vsel %vm356, %v1160, -inf
        %1166 = vmax.xlane.f32.xlu0 %v1165
        %v1167 = vpop.xlane.xlu0 %1166
        %v1168 = vsub.f32 %v1160, %v1167
        %v1169 = vmul.f32 %v1168, 1.442695
        %v1170 = vpow.pop %v1169
        %v1171 = vsel %vm356, %v1170, 0.0
        %1172 = vadd.xlane.f32.xlu0 %v1171
        %v1173 = vpop.xlane.xlu0 %1172
        %v1174 = vrcp.pop %v1173
        %v1175 = vmul.f32 %v1170, %v1174
        %v1176 = vpack.c.bf16 %v1175, %v1175
        %1177 = vrot.lane.b32.xlu0 %v305, 36
        %v1178 = vpop.permute.xlu0 %1177
        %v1180 = vsel %vm356, %v1176, 0
        %v1183 = vsel %vm374, %v1178, 0
        %1185 = vmatprep.subr.bf16.mxu0 0
        %1186 = vmatpush1.bf16.msra.mxu0 %v1183
        %1187 = vmatprep.subr.bf16.mxu0 0
        %1188 = vmatpush1.bf16.msra.mxu0 0
        %1189 = vmatprep.subr.bf16.mxu0 0
        %1190 = vmatpush1.bf16.msra.mxu0 0
        %1191 = vmatprep.subr.bf16.mxu0 0
        %1192 = vmatpush1.bf16.msra.mxu0 0
        %1193 = vmatprep.subr.bf16.mxu0 0
        %1194 = vmatpush1.bf16.msra.mxu0 0
        %1195 = vmatprep.subr.bf16.mxu0 0
        %1196 = vmatpush1.bf16.msra.mxu0 0
        %1197 = vmatprep.subr.bf16.mxu0 0
        %1198 = vmatpush1.bf16.msra.mxu0 0
        %1199 = vmatprep.subr.bf16.mxu0 0
        %1200 = vmatpush1.bf16.msra.mxu0 0
        %1201 = vmatprep.subr.bf16.mxu0 0
        %1202 = vmatpush1.bf16.msra.mxu0 0
        %1203 = vmatprep.subr.bf16.mxu0 0
        %1204 = vmatpush1.bf16.msra.mxu0 0
        %1205 = vmatprep.subr.bf16.mxu0 0
        %1206 = vmatpush1.bf16.msra.mxu0 0
        %1207 = vmatprep.subr.bf16.mxu0 0
        %1208 = vmatpush1.bf16.msra.mxu0 0
        %1209 = vmatprep.subr.bf16.mxu0 0
        %1210 = vmatpush1.bf16.msra.mxu0 0
        %1211 = vmatprep.subr.bf16.mxu0 0
        %1212 = vmatpush1.bf16.msra.mxu0 0
        %1213 = vmatprep.subr.bf16.mxu0 0
        %1214 = vmatpush1.bf16.msra.mxu0 0
        %1215 = vmatprep.subr.bf16.mxu0 0
        %1216 = vmatpush1.bf16.msra.mxu0 0
        %1217 = vmatprep.mubr.bf16.mxu0 0
        %1218 = vmatmul.mubr.bf16.gmra.mrb[0].mxu0 %v1180
        %v1219 = vpop.f32.mrb[0].mxu0
        %v1220 = vadd.f32 0.0, %v1219
        %v1221 = vpop.f32.mrb[0].mxu0
        %v1222 = vpop.f32.mrb[0].mxu0
        %v1223 = vpop.f32.mrb[0].mxu0
        %1224 = vdwg.mxu0
        %1226 = vrot.lane.b32.xlu0 %v1220, 28
        %v1227 = vpop.permute.xlu0 %1226
        %vm1229 = vcmask 261344
        %1230 = vst.msk [vmem:[#allocation2] sm:$0xff] %vm1229, %v1227
        %v1231 = vld [vmem:[#allocation2] sm:$0xff]
        %v1232 = vpack.c.bf16 %v1231, %v1231
        %v1233 = vld [vmem:[#allocation8] sm:$0xf]
        %v1234 = vld [vmem:[#allocation8 + $0x4] sm:$0xf]
        %v1235 = vld [vmem:[#allocation8 + $0x8] sm:$0xf]
        %v1236 = vld [vmem:[#allocation8 + $0xc] sm:$0xf]
        %v1237 = vld [vmem:[%s3] sm:$0x1]
        %v1239 = vlaneseq
        %v1240 = vshrl.u32 %v1239, 7
        %v1241 = vsub.s32 0, %v1240
        %v1242 = vrot.slane %v1237, %v1241
        %v1248 = vunpack.c.l.b16 %v1233
        %v1249 = vunpack.c.l.b16 %v1234
        %v1250 = vunpack.c.l.b16 %v1235
        %v1251 = vunpack.c.l.b16 %v1236
        %v1252 = vpack.c.b16 %v1249, %v1248
        %v1253 = vpack.c.b16 %v1251, %v1250
        %v1257 = vsel %vm261, %v1232, 0
        %1259 = vmatprep.subr.bf16.mxu0 0
        %1260 = vmatpush1.bf16.msra.mxu0 %v1252
        %1261 = vmatprep.subr.bf16.mxu0 0
        %1262 = vmatpush1.bf16.msra.mxu0 %v1253
        %1263 = vmatprep.subr.bf16.mxu0 0
        %1264 = vmatpush1.bf16.msra.mxu0 0
        %1265 = vmatprep.subr.bf16.mxu0 0
        %1266 = vmatpush1.bf16.msra.mxu0 0
        %1267 = vmatprep.subr.bf16.mxu0 0
        %1268 = vmatpush1.bf16.msra.mxu0 0
        %1269 = vmatprep.subr.bf16.mxu0 0
        %1270 = vmatpush1.bf16.msra.mxu0 0
        %1271 = vmatprep.subr.bf16.mxu0 0
        %1272 = vmatpush1.bf16.msra.mxu0 0
        %1273 = vmatprep.subr.bf16.mxu0 0
        %1274 = vmatpush1.bf16.msra.mxu0 0
        %1275 = vmatprep.subr.bf16.mxu0 0
        %1276 = vmatpush1.bf16.msra.mxu0 0
        %1277 = vmatprep.subr.bf16.mxu0 0
        %1278 = vmatpush1.bf16.msra.mxu0 0
        %1279 = vmatprep.subr.bf16.mxu0 0
        %1280 = vmatpush1.bf16.msra.mxu0 0
        %1281 = vmatprep.subr.bf16.mxu0 0
        %1282 = vmatpush1.bf16.msra.mxu0 0
        %1283 = vmatprep.subr.bf16.mxu0 0
        %1284 = vmatpush1.bf16.msra.mxu0 0
        %1285 = vmatprep.subr.bf16.mxu0 0
        %1286 = vmatpush1.bf16.msra.mxu0 0
        %1287 = vmatprep.subr.bf16.mxu0 0
        %1288 = vmatpush1.bf16.msra.mxu0 0
        %1289 = vmatprep.subr.bf16.mxu0 0
        %1290 = vmatpush1.bf16.msra.mxu0 0
        %1291 = vmatprep.mubr.bf16.mxu0 0
        %1292 = vmatmul.mubr.bf16.gmra.mrb[0].mxu0 %v1257
        %v1293 = vpop.f32.mrb[0].mxu0
        %v1294 = vadd.f32 %v1242, %v1293
        %v1295 = vpop.f32.mrb[0].mxu0
        %v1296 = vpop.f32.mrb[0].mxu0
        %v1297 = vpop.f32.mrb[0].mxu0
        %1298 = vdwg.mxu0
        %1299 = vst.msk [vmem:[%s241] sm:$0xff] %vm261, %v1294
        %s1300 = sand.u32 %s119, 1
        %s1301 = scalar_lea.sflag [#allocation5], %s1300
        %s1302 = sand.u32 %s119, 1
        %s1303 = smul.addr %s1302, 8
        %s1304 = scalar_lea.vmem [#allocation9], %s1303
        // Predicated region
        $region49: #{tpu_custom_call.1} parent=35 // pred_check
          %p1305 = pneg %p129
        $region50: #{tpu_custom_call.1} parent=35 // pred_check_branch
          %1307 = sbr.rel (%p1305) target = $region52
        $region51: #{tpu_custom_call.1} parent=35 // pred_region
          %s1309 = ssub.s32 128, 128
          %1310 = vsyncadd %s1301, %s1309
          %s1311 = smul.addr %s22, 128
          %s1312 = scalar_lea.hbm %s4, %s1311
          %s1314 = sshll.u32 %s1304, 4
          %s1315 = int_to_ptr.vmem [resolvable:$true] %s1314
          %1317 = dma.vmem_to_hbm [thread:$0]  %s1315, 128, %s1312, %s1301
        $region52: #{tpu_custom_call.1} parent=35 // pred_fallthru
          _
      $region36: #{tpu_custom_call.1} parent=5 // pred_fallthru
        _
      %p1318 = scmp.le.s32.totalorder 2, %s17
      // Predicated region
      $region53: #{tpu_custom_call.1} parent=5 // pred_check
        %p1319 = pneg %p1318
      $region54: #{tpu_custom_call.1} parent=5 // pred_check_branch
        %1321 = sbr.rel (%p1319) target = $region56
      $region55: #{tpu_custom_call.1} parent=5 // pred_region
        %s1322 = ssub.s32 %s17, 2
        // Predicated region
        $region57: #{tpu_custom_call.1} parent=55 // pred_check
          %p1323 = pneg %p135
        $region58: #{tpu_custom_call.1} parent=55 // pred_check_branch
          %1325 = sbr.rel (%p1323) target = $region60
        $region59: #{tpu_custom_call.1} parent=55 // pred_region
          %s1326 = sand.u32 %s120, 1
          %s1327 = scalar_lea.sflag [#allocation5], %s1326
          %s1328 = sand.u32 %s120, 1
          %s1329 = smul.addr %s1328, 8
          %s1330 = scalar_lea.vmem [#allocation9], %s1329
          %1331 = dma.done %s1327, 128
        $region60: #{tpu_custom_call.1} parent=55 // pred_fallthru
          _
      $region56: #{tpu_custom_call.1} parent=5 // pred_fallthru
        _
    $region6: #{tpu_custom_call.1} parent=1 // loop_footer
      %s21 = sadd.s32 1, %s17
    $region7: #{tpu_custom_call.1} parent=1 // loop_footer_branch
      %16 = sbr.rel target = $region3
    $region8: #{tpu_custom_call.1} parent=1 // loop_exit
      _
    %1332 = vsyncpa [#allocation4], 1
    %s1333 = scalar_lea.sflag [#allocation4], 1
    %1334 = vsyncpa %s1333, 1
    %1335 = vsyncpa [#allocation7], 1
    %1336 = vsyncpa [#allocation5], 1
    %s1337 = scalar_lea.sflag [#allocation5], 1
    %1338 = vsyncpa %s1337, 1

</llo_original>
